<compile_context>
chip_gen: v7x
topology: tpu7x:2x2x1
jax: 0.10.0
libtpu: 0.0.40
codegen_flags: <defaults>
</compile_context>

<pallas_src>
import functools

import jax
import jax.numpy as jnp
import numpy as np
from jax.experimental import pallas as pl
from jax.experimental.pallas import tpu as pltpu


# Rows of the packed (N_VEC, d_model) f32 bias / LayerNorm-parameter table.
(SQ_B, SK_B, SV_B, SO_B,
 CQ_B, CK_B, CV_B, CO_B,
 F2_B,
 LN1_G, LN1_B, LN2_G, LN2_B, LN3_G, LN3_B) = range(15)
N_VEC = 15

# Kernel-side parameter arrays (order of the trailing kernel inputs).
KP_NAMES = ("sqkv_w", "so_w", "cq_w", "ckv_w", "co_w",
            "f1_w", "f2_w", "f1_b", "vecs")

Q_CHUNK = 512        # query rows per attention chunk (bounds score VMEM)
DFF_CHUNK = 2048     # FFN hidden columns per chunk (bounds FFN intermediate)


# ----------------------------------------------------------------------------
# Shared math (used by both the Pallas kernel body and the plain-JAX reference)
# ----------------------------------------------------------------------------
def _recip(x, approx):
    if approx:
        return pl.reciprocal(x, approx=True)     # EUP slot inside the kernel
    return 1.0 / x


def _layer_norm(x, gamma, beta, eps=1e-5):
    mean = jnp.mean(x, axis=-1, keepdims=True)
    var = jnp.mean((x - mean) ** 2, axis=-1, keepdims=True)
    return (x - mean) * jax.lax.rsqrt(var + eps) * gamma + beta


def _split_heads(x16, bb, seq, num_heads, dk):
    # (bb*seq, D) bf16 -> (num_heads*bb, seq, dk) bf16, head-major batch dim.
    x3 = x16.reshape(bb, seq, num_heads * dk)
    parts = [x3[:, :, h * dk:(h + 1) * dk] for h in range(num_heads)]
    return parts[0] if num_heads == 1 else jnp.concatenate(parts, axis=0)


def _merge_heads(ctx, bb, rows, num_heads, dk):
    # (num_heads*bb, rows, dk) -> (bb*rows, num_heads*dk) contiguous buffer.
    parts = [ctx[h * bb:(h + 1) * bb].reshape(bb * rows, dk)
             for h in range(num_heads)]
    return parts[0] if num_heads == 1 else jnp.concatenate(parts, axis=-1)


def _attention(q2, k2, v2, wo, bo, *, bias3, causal, num_heads, bb, tq, skv,
               q_chunk, approx_recip):
    """Scaled-dot-product MHA on already-projected q/k/v.

    q2: (bb*tq, D) f32, k2/v2: (bb*skv, D) f32, bias3: (bb, tq, skv) or None.
    Returns (bb*tq, D) f32.
    """
    d = q2.shape[-1]
    dk = d // num_heads
    scale = 1.0 / float(np.sqrt(dk))

    # One head split per tensor; all score / softmax / PV ops are head-batched.
    qh = _split_heads((q2 * scale).astype(jnp.bfloat16), bb, tq, num_heads, dk)
    kh = _split_heads(k2.astype(jnp.bfloat16), bb, skv, num_heads, dk)
    vh = _split_heads(v2.astype(jnp.bfloat16), bb, skv, num_heads, dk)

    chunks = []
    for qs in range(0, tq, q_chunk):             # query-row chunking (VMEM)
        qe = min(qs + q_chunk, tq)
        rows = qe - qs
        qc = qh if rows == tq else qh[:, qs:qe, :]

        s = jnp.einsum("btd,bsd->bts", qc, kh,
                       preferred_element_type=jnp.float32)  # (H*bb, rows, skv)
        if causal:
            # Causal bias generated in-kernel: no O(B*T^2) mask DMA.
            ri = jax.lax.broadcasted_iota(jnp.int32, (rows, skv), 0) + qs
            ci = jax.lax.broadcasted_iota(jnp.int32, (rows, skv), 1)
            s = s + jnp.where(ci <= ri, 0.0, -1e9)[None, :, :]
        elif bias3 is not None:
            bc = bias3[:, qs:qe, :].astype(jnp.float32)      # (bb, rows, skv)
            s = s + jnp.concatenate([bc] * num_heads, axis=0)

        s = s - jnp.max(s, axis=-1, keepdims=True)
        p = jnp.exp(s)
        p = p * _recip(jnp.sum(p, axis=-1, keepdims=True), approx_recip)

        ctx = jnp.einsum("bts,bsd->btd", p.astype(jnp.bfloat16), vh,
                         preferred_element_type=jnp.float32)  # (H*bb, rows, dk)
        ctx = _merge_heads(ctx.astype(jnp.bfloat16), bb, rows, num_heads, dk)
        # Single output projection with full K=D contraction.
        chunks.append(jnp.dot(ctx, wo, preferred_element_type=jnp.float32)
                      .reshape(bb, rows, d))

    out = chunks[0] if len(chunks) == 1 else jnp.concatenate(chunks, axis=1)
    return out.reshape(bb * tq, d) + bo


def _decoder_math(dec, enc, self_bias, enc_bias, kp, num_heads, *,
                  causal_self, q_chunk, dff_chunk, approx_recip):
    """Full decoder layer on one batch tile (residual stream in f32)."""
    bb, t, d = dec.shape
    s_len = enc.shape[1]
    vecs = kp["vecs"]

    def vrow(i):
        return vecs[i:i + 1, :]

    x = dec.reshape(bb * t, d)
    enc2 = enc.reshape(bb * s_len, d)

    # ---- sublayer 1: pre-norm masked self-attention + residual ----
    h = _layer_norm(x, vrow(LN1_G), vrow(LN1_B)).astype(jnp.bfloat16)
    qkv = jnp.dot(h, kp["sqkv_w"], preferred_element_type=jnp.float32)
    q = qkv[:, :d] + vrow(SQ_B)
    k = qkv[:, d:2 * d] + vrow(SK_B)
    v = qkv[:, 2 * d:] + vrow(SV_B)
    x = x + _attention(q, k, v, kp["so_w"], vrow(SO_B),
                       bias3=self_bias, causal=causal_self,
                       num_heads=num_heads, bb=bb, tq=t, skv=t,
                       q_chunk=q_chunk, approx_recip=approx_recip)

    # ---- sublayer 2: pre-norm cross-attention + residual ----
    h = _layer_norm(x, vrow(LN2_G), vrow(LN2_B)).astype(jnp.bfloat16)
    enc16 = enc2.astype(jnp.bfloat16)
    q = jnp.dot(h, kp["cq_w"], preferred_element_type=jnp.float32) + vrow(CQ_B)
    kv = jnp.dot(enc16, kp["ckv_w"], preferred_element_type=jnp.float32)
    k = kv[:, :d] + vrow(CK_B)
    v = kv[:, d:] + vrow(CV_B)
    x = x + _attention(q, k, v, kp["co_w"], vrow(CO_B),
                       bias3=enc_bias, causal=False,
                       num_heads=num_heads, bb=bb, tq=t, skv=s_len,
                       q_chunk=q_chunk, approx_recip=approx_recip)

    # ---- sublayer 3: pre-norm FFN (Linear -> ReLU -> Linear) + residual ----
    h = _layer_norm(x, vrow(LN3_G), vrow(LN3_B)).astype(jnp.bfloat16)
    dff = kp["f1_w"].shape[1]
    acc = None
    for cs in range(0, dff, dff_chunk):          # dff chunking (VMEM)
        ce = min(cs + dff_chunk, dff)
        hh = (jnp.dot(h, kp["f1_w"][:, cs:ce],
                      preferred_element_type=jnp.float32)
              + kp["f1_b"][:, cs:ce])
        hh = jnp.maximum(hh, 0.0).astype(jnp.bfloat16)
        part = jnp.dot(hh, kp["f2_w"][cs:ce, :],
                       preferred_element_type=jnp.float32)
        acc = part if acc is None else acc + part
    x = x + acc + vrow(F2_B)

    return x.reshape(bb, t, d)


# ----------------------------------------------------------------------------
# Pallas kernel body
# ----------------------------------------------------------------------------
def decoder_layer_kernel(*refs, num_heads, causal_self, q_chunk, dff_chunk):
    pos = 0
    dec_ref = refs[pos]; pos += 1
    enc_ref = refs[pos]; pos += 1
    if causal_self:
        self_bias = None
    else:
        self_bias = refs[pos][...]; pos += 1
    enc_bias = refs[pos][...]; pos += 1
    kp = {}
    for name in KP_NAMES:
        kp[name] = refs[pos][...]; pos += 1
    out_ref = refs[pos]

    y = _decoder_math(dec_ref[...].astype(jnp.float32),
                      enc_ref[...].astype(jnp.float32),
                      self_bias, enc_bias, kp, num_heads,
                      causal_self=causal_self, q_chunk=q_chunk,
                      dff_chunk=dff_chunk, approx_recip=True)
    out_ref[...] = y.astype(out_ref.dtype)


# ----------------------------------------------------------------------------
# Parameter packing / mask conversion
# ----------------------------------------------------------------------------
def _prep_params(params):
    bf16, f32 = jnp.bfloat16, jnp.float32
    vec_rows = [params[n] for n in
                ("sq_b", "sk_b", "sv_b", "so_b",
                 "cq_b", "ck_b", "cv_b", "co_b",
                 "f2_b",
                 "ln1_g", "ln1_b", "ln2_g", "ln2_b", "ln3_g", "ln3_b")]
    return {
        "sqkv_w": jnp.concatenate([params["sq_w"], params["sk_w"],
                                   params["sv_w"]], axis=1).astype(bf16),
        "so_w": params["so_w"].astype(bf16),
        "cq_w": params["cq_w"].astype(bf16),
        "ckv_w": jnp.concatenate([params["ck_w"], params["cv_w"]],
                                 axis=1).astype(bf16),
        "co_w": params["co_w"].astype(bf16),
        "f1_w": params["f1_w"].astype(bf16),
        "f2_w": params["f2_w"].astype(bf16),
        "f1_b": params["f1_b"].astype(f32).reshape(1, -1),
        "vecs": jnp.concatenate([r.reshape(1, -1) for r in vec_rows],
                                axis=0).astype(f32),
    }


def _mask_to_bias(mask, dtype):
    # nonzero == masked-out -> additive -1e9 bias
    return jnp.where(mask > 0, jnp.float32(-1e9), jnp.float32(0.0)).astype(dtype)


# ----------------------------------------------------------------------------
# VMEM budgeting / block_b selection
# ----------------------------------------------------------------------------
def _vmem_cap_bytes():
    try:
        cap = int(pltpu.get_tpu_info().vmem_capacity_bytes)
        if cap > 0:
            return cap
    except Exception:
        pass
    return 64 << 20   # conservative: fits every TPU generation (v7x: 64 MiB/TC)


def _vmem_estimate_bytes(bb, T, S, D, dff, H, q_chunk, dff_chunk,
                         act_itemsize, with_self_bias, w_bytes, weight_bufs):
    f32, bf16 = 4, 2
    rows = bb * T
    qc = min(q_chunk, T)
    dc = min(dff_chunk, dff)
    skv_max = max(T, S)
    # pipeline blocks (double-buffered): dec, enc, out + bf16 mask biases
    blk = (bb * T * D + bb * S * D + bb * T * D) * act_itemsize
    blk += bb * T * S * bf16
    if with_self_bias:
        blk += bb * T * T * bf16
    est = 2 * blk
    # grid-invariant weights
    est += weight_bufs * w_bytes
    # in-kernel temporaries (rough upper bound of simultaneously-live buffers)
    est += rows * D * (2 * f32 + bf16)                       # residual + LN out
    est += rows * 3 * D * f32 + 2 * rows * D * bf16          # fused QKV + heads
    est += 2 * bb * S * D * (f32 + bf16)                     # cross K/V
    est += H * bb * qc * skv_max * (f32 + bf16)              # scores + probs
    est += H * bb * qc * (D // H) * f32 + bb * T * D * f32   # ctx + attn out
    est += rows * dc * (f32 + bf16) + rows * D * f32         # FFN chunk + acc
    return int(est)


def _pick_block_b(B, T, S, D, dff, H, q_chunk, dff_chunk, act_itemsize,
                  with_self_bias, w_bytes, weight_bufs, budget):
    fitting = []
    for bb in range(1, B + 1):
        if B % bb:
            continue
        est = _vmem_estimate_bytes(bb, T, S, D, dff, H, q_chunk, dff_chunk,
                                   act_itemsize, with_self_bias,
                                   w_bytes, weight_bufs)
        if est <= budget:
            fitting.append(bb)
    if not fitting:
        return 1
    # Once MXU rows are well filled (>=256), prefer keeping >=2 grid steps so
    # multi-TensorCore parts get parallel work; otherwise maximize rows.
    multi = [bb for bb in fitting if B // bb >= 2 and bb * T >= 256]
    if multi:
        return max(multi)
    return max(fitting)


def _make_weight_spec_factory(single_buffer):
    def _idx(nd):
        return lambda b, _nd=nd: (0,) * _nd
    if single_buffer:
        try:
            # Probe: single-buffer grid-invariant weights (halves weight VMEM).
            pl.BlockSpec((8, 128), _idx(2), pipeline_mode=pl.Buffered(1))

            def make(shape):
                return pl.BlockSpec(tuple(shape), _idx(len(shape)),
                                    pipeline_mode=pl.Buffered(1))
            return make, 1
        except Exception:
            pass

    def make(shape):
        return pl.BlockSpec(tuple(shape), _idx(len(shape)))
    return make, 2


def _batch_spec(shape, block_b):
    nd = len(shape)
    return pl.BlockSpec((block_b,) + tuple(shape[1:]),
                        lambda b, _nd=nd: (b,) + (0,) * (_nd - 1))


# ----------------------------------------------------------------------------
# Public wrapper
# ----------------------------------------------------------------------------
def decoder_layer(dec_inputs, enc_outputs, dec_self_attn_mask,
                  dec_enc_attn_mask, params, num_heads, *,
                  causal_self_mask=False, block_b=None,
                  activation_dtype=jnp.bfloat16, out_dtype=None):
    """Fused transformer decoder layer (eval-mode, cache=None path).

    If causal_self_mask=True the provided dec_self_attn_mask is assumed to be
    the standard causal mask and is regenerated in-kernel (no mask DMA).
    """
    B, T, D = dec_inputs.shape
    S = enc_outputs.shape[1]
    assert D % num_heads == 0, "d_model must be divisible by num_heads"
    if out_dtype is None:
        out_dtype = activation_dtype

    dff = params["f1_w"].shape[1]
    q_chunk = min(T, Q_CHUNK)
    dff_chunk = min(dff, DFF_CHUNK)

    kp = _prep_params(params)
    kparrays = [kp[n] for n in KP_NAMES]
    w_bytes = sum(int(a.size) * jnp.dtype(a.dtype).itemsize for a in kparrays)

    # bf16 activations on the wire; residual stream stays f32 in-kernel.
    data_arrays = [dec_inputs.astype(activation_dtype),
                   enc_outputs.astype(activation_dtype)]
    if not causal_self_mask:
        data_arrays.append(_mask_to_bias(dec_self_attn_mask, jnp.bfloat16))
    data_arrays.append(_mask_to_bias(dec_enc_attn_mask, jnp.bfloat16))

    # Single-buffer the weights only when they are a meaningful VMEM fraction.
    weight_spec, weight_bufs = _make_weight_spec_factory(w_bytes >= (4 << 20))

    act_itemsize = jnp.dtype(activation_dtype).itemsize
    cap = _vmem_cap_bytes()
    budget = max(32 << 20, cap - (16 << 20))

    if block_b is None:
        block_b = _pick_block_b(B, T, S, D, dff, num_heads, q_chunk, dff_chunk,
                                act_itemsize, not causal_self_mask,
                                w_bytes, weight_bufs, budget)
    assert B % block_b == 0
    grid_b = B // block_b

    est = _vmem_estimate_bytes(block_b, T, S, D, dff, num_heads, q_chunk,
                               dff_chunk, act_itemsize, not causal_self_mask,
                               w_bytes, weight_bufs)
    vmem_limit = int(min(max(est + (8 << 20), 32 << 20), budget))

    in_specs = ([_batch_spec(a.shape, block_b) for a in data_arrays]
                + [weight_spec(a.shape) for a in kparrays])

    kernel = functools.partial(decoder_layer_kernel, num_heads=num_heads,
                               causal_self=causal_self_mask,
                               q_chunk=q_chunk, dff_chunk=dff_chunk)

    return pl.pallas_call(
        kernel,
        out_shape=jax.ShapeDtypeStruct((B, T, D), out_dtype),
        grid_spec=pltpu.PrefetchScalarGridSpec(
            num_scalar_prefetch=0,
            grid=(grid_b,),
            in_specs=in_specs,
            out_specs=pl.BlockSpec((block_b, T, D), lambda b: (b, 0, 0)),
        ),
        compiler_params=pltpu.CompilerParams(
            dimension_semantics=("parallel",),
            vmem_limit_bytes=vmem_limit,
        ),
    )(*data_arrays, *kparrays)


# ----------------------------------------------------------------------------
# Plain-JAX reference (identical fused-weight math, exact reciprocal)
# ----------------------------------------------------------------------------
def decoder_layer_ref(dec_inputs, enc_outputs, dec_self_attn_mask,
                      dec_enc_attn_mask, params, num_heads,
                      activation_dtype=jnp.bfloat16, out_dtype=jnp.bfloat16):
    kp = _prep_params(params)
    dec = dec_inputs.astype(activation_dtype).astype(jnp.float32)
    enc = enc_outputs.astype(activation_dtype).astype(jnp.float32)
    sb = _mask_to_bias(dec_self_attn_mask, jnp.bfloat16)
    eb = _mask_to_bias(dec_enc_attn_mask, jnp.bfloat16)
    out = _decoder_math(dec, enc, sb, eb, kp, num_heads,
                        causal_self=False, q_chunk=dec.shape[1],
                        dff_chunk=kp["f1_w"].shape[1], approx_recip=False)
    return out.astype(out_dtype)


# ----------------------------------------------------------------------------
# Deterministic parameter init + demo run
# ----------------------------------------------------------------------------
def init_params(key, d_model, dff):
    shapes = {
        "sq_w": (d_model, d_model), "sq_b": (1, d_model),
        "sk_w": (d_model, d_model), "sk_b": (1, d_model),
        "sv_w": (d_model, d_model), "sv_b": (1, d_model),
        "so_w": (d_model, d_model), "so_b": (1, d_model),
        "cq_w": (d_model, d_model), "cq_b": (1, d_model),
        "ck_w": (d_model, d_model), "ck_b": (1, d_model),
        "cv_w": (d_model, d_model), "cv_b": (1, d_model),
        "co_w": (d_model, d_model), "co_b": (1, d_model),
        "f1_w": (d_model, dff), "f1_b": (1, dff),
        "f2_w": (dff, d_model), "f2_b": (1, d_model),
        "ln1_g": (1, d_model), "ln1_b": (1, d_model),
        "ln2_g": (1, d_model), "ln2_b": (1, d_model),
        "ln3_g": (1, d_model), "ln3_b": (1, d_model),
    }
    params = {}
    keys = jax.random.split(key, len(shapes))
    for k, (name, shape) in zip(keys, sorted(shapes.items())):
        if name.startswith("ln") and name.endswith("_g"):
            params[name] = (jnp.ones(shape, jnp.float32)
                            + 0.05 * jax.random.normal(k, shape, jnp.float32))
        else:
            params[name] = 0.02 * jax.random.normal(k, shape, jnp.float32)
    return params


if __name__ == "__main__":
    # Small shapes consistent with the module's forward signature.
    B, T, S = 2, 8, 8
    d_model, num_heads, dff = 32, 4, 64

    key = jax.random.PRNGKey(0)
    k_dec, k_enc, k_par = jax.random.split(key, 3)

    dec_inputs = jax.random.normal(k_dec, (B, T, d_model), jnp.float32)
    enc_outputs = jax.random.normal(k_enc, (B, S, d_model), jnp.float32)

    # Causal self-attention mask (1 == masked-out future position).
    causal = jnp.triu(jnp.ones((T, T), jnp.float32), k=1)
    dec_self_attn_mask = jnp.broadcast_to(causal, (B, T, T))
    # Cross-attention key-padding mask: last 2 source positions of batch 1.
    dec_enc_attn_mask = jnp.zeros((B, T, S), jnp.float32)
    dec_enc_attn_mask = dec_enc_attn_mask.at[1, :, S - 2:].set(1.0)

    params = init_params(k_par, d_model, dff)

    out = decoder_layer(dec_inputs, enc_outputs, dec_self_attn_mask,
                        dec_enc_attn_mask, params, num_heads,
                        causal_self_mask=True)
    out = jax.block_until_ready(out)

    ref = decoder_layer_ref(dec_inputs, enc_outputs, dec_self_attn_mask,
                            dec_enc_attn_mask, params, num_heads)
    # Same bf16-weight math on both sides; slack covers the in-kernel approx
    # reciprocal (EUP), bf16 output quantization and accumulation order.
    np.testing.assert_allclose(np.asarray(out.astype(jnp.float32)),
                               np.asarray(ref.astype(jnp.float32)),
                               rtol=2e-2, atol=2e-2)

    print("KERNEL_OK")
</pallas_src>

<mosaic_0001>
module attributes {stable_mosaic.version = 11 : i64} {
  func.func @decoder_layer_kernel(%arg0: i32, %arg1: memref<2x8x32xbf16, #tpu.memory_space<vmem>>, %arg2: memref<2x8x32xbf16, #tpu.memory_space<vmem>>, %arg3: memref<2x8x8xbf16, #tpu.memory_space<vmem>>, %arg4: memref<32x96xbf16, #tpu.memory_space<vmem>>, %arg5: memref<32x32xbf16, #tpu.memory_space<vmem>>, %arg6: memref<32x32xbf16, #tpu.memory_space<vmem>>, %arg7: memref<32x64xbf16, #tpu.memory_space<vmem>>, %arg8: memref<32x32xbf16, #tpu.memory_space<vmem>>, %arg9: memref<32x64xbf16, #tpu.memory_space<vmem>>, %arg10: memref<64x32xbf16, #tpu.memory_space<vmem>>, %arg11: memref<1x64xf32, #tpu.memory_space<vmem>>, %arg12: memref<15x32xf32, #tpu.memory_space<vmem>>, %arg13: memref<2x8x32xbf16, #tpu.memory_space<vmem>>) attributes {dimension_semantics = [#tpu.dimension_semantics<parallel>], iteration_bounds = array<i64: 1>, scalar_prefetch = 0 : i64, scratch_operands = 0 : i64, tpu.core_type = #tpu.core_type<tc>, window_params = [{transform_indices = @transform_0, window_bounds = array<i64: 2, 8, 32>}, {transform_indices = @transform_1, window_bounds = array<i64: 2, 8, 32>}, {transform_indices = @transform_2, window_bounds = array<i64: 2, 8, 8>}, {pipeline_mode = #tpu.pipeline_mode<synchronous>, transform_indices = @transform_3, window_bounds = array<i64: 32, 96>}, {pipeline_mode = #tpu.pipeline_mode<synchronous>, transform_indices = @transform_4, window_bounds = array<i64: 32, 32>}, {pipeline_mode = #tpu.pipeline_mode<synchronous>, transform_indices = @transform_5, window_bounds = array<i64: 32, 32>}, {pipeline_mode = #tpu.pipeline_mode<synchronous>, transform_indices = @transform_6, window_bounds = array<i64: 32, 64>}, {pipeline_mode = #tpu.pipeline_mode<synchronous>, transform_indices = @transform_7, window_bounds = array<i64: 32, 32>}, {pipeline_mode = #tpu.pipeline_mode<synchronous>, transform_indices = @transform_8, window_bounds = array<i64: 32, 64>}, {pipeline_mode = #tpu.pipeline_mode<synchronous>, transform_indices = @transform_9, window_bounds = array<i64: 64, 32>}, {pipeline_mode = #tpu.pipeline_mode<synchronous>, transform_indices = @transform_10, window_bounds = array<i64: 1, 64>}, {pipeline_mode = #tpu.pipeline_mode<synchronous>, transform_indices = @transform_11, window_bounds = array<i64: 15, 32>}, {transform_indices = @transform_12, window_bounds = array<i64: 2, 8, 32>}]} {
    %c0 = arith.constant 0 : index
    %c0_0 = arith.constant 0 : index
    %c0_1 = arith.constant 0 : index
    %0 = vector.load %arg3[%c0, %c0_0, %c0_1] : memref<2x8x8xbf16, #tpu.memory_space<vmem>>, vector<2x8x8xbf16>
    %c0_2 = arith.constant 0 : index
    %c0_3 = arith.constant 0 : index
    %1 = vector.load %arg4[%c0_2, %c0_3] : memref<32x96xbf16, #tpu.memory_space<vmem>>, vector<32x96xbf16>
    %c0_4 = arith.constant 0 : index
    %c0_5 = arith.constant 0 : index
    %2 = vector.load %arg5[%c0_4, %c0_5] : memref<32x32xbf16, #tpu.memory_space<vmem>>, vector<32x32xbf16>
    %c0_6 = arith.constant 0 : index
    %c0_7 = arith.constant 0 : index
    %3 = vector.load %arg6[%c0_6, %c0_7] : memref<32x32xbf16, #tpu.memory_space<vmem>>, vector<32x32xbf16>
    %c0_8 = arith.constant 0 : index
    %c0_9 = arith.constant 0 : index
    %4 = vector.load %arg7[%c0_8, %c0_9] : memref<32x64xbf16, #tpu.memory_space<vmem>>, vector<32x64xbf16>
    %c0_10 = arith.constant 0 : index
    %c0_11 = arith.constant 0 : index
    %5 = vector.load %arg8[%c0_10, %c0_11] : memref<32x32xbf16, #tpu.memory_space<vmem>>, vector<32x32xbf16>
    %c0_12 = arith.constant 0 : index
    %c0_13 = arith.constant 0 : index
    %6 = vector.load %arg9[%c0_12, %c0_13] : memref<32x64xbf16, #tpu.memory_space<vmem>>, vector<32x64xbf16>
    %c0_14 = arith.constant 0 : index
    %c0_15 = arith.constant 0 : index
    %7 = vector.load %arg10[%c0_14, %c0_15] : memref<64x32xbf16, #tpu.memory_space<vmem>>, vector<64x32xbf16>
    %c0_16 = arith.constant 0 : index
    %c0_17 = arith.constant 0 : index
    %8 = vector.load %arg11[%c0_16, %c0_17] : memref<1x64xf32, #tpu.memory_space<vmem>>, vector<1x64xf32>
    %c0_18 = arith.constant 0 : index
    %c0_19 = arith.constant 0 : index
    %9 = vector.load %arg12[%c0_18, %c0_19] : memref<15x32xf32, #tpu.memory_space<vmem>>, vector<15x32xf32>
    %c0_20 = arith.constant 0 : index
    %c0_21 = arith.constant 0 : index
    %c0_22 = arith.constant 0 : index
    %10 = vector.load %arg1[%c0_20, %c0_21, %c0_22] : memref<2x8x32xbf16, #tpu.memory_space<vmem>>, vector<2x8x32xbf16>
    %11 = arith.extf %10 : vector<2x8x32xbf16> to vector<2x8x32xf32>
    %c0_23 = arith.constant 0 : index
    %c0_24 = arith.constant 0 : index
    %c0_25 = arith.constant 0 : index
    %12 = vector.load %arg2[%c0_23, %c0_24, %c0_25] : memref<2x8x32xbf16, #tpu.memory_space<vmem>>, vector<2x8x32xbf16>
    %13 = arith.extf %12 : vector<2x8x32xbf16> to vector<2x8x32xf32>
    %14 = vector.shape_cast %11 : vector<2x8x32xf32> to vector<16x32xf32>
    %15 = vector.shape_cast %13 : vector<2x8x32xf32> to vector<16x32xf32>
    %16 = vector.extract_strided_slice %9 {offsets = [9, 0], sizes = [1, 32], strides = [1, 1]} : vector<15x32xf32> to vector<1x32xf32>
    %17 = vector.extract_strided_slice %9 {offsets = [10, 0], sizes = [1, 32], strides = [1, 1]} : vector<15x32xf32> to vector<1x32xf32>
    %cst = arith.constant dense<0.000000e+00> : vector<16xf32>
    %18 = vector.multi_reduction <add>, %14, %cst [1] : vector<16x32xf32> to vector<16xf32>
    %19 = vector.shape_cast %18 : vector<16xf32> to vector<16x1xf32>
    %cst_26 = arith.constant 3.200000e+01 : f32
    %20 = vector.broadcast %cst_26 : f32 to vector<16x1xf32>
    %21 = arith.divf %19, %20 : vector<16x1xf32>
    %22 = vector.broadcast %21 : vector<16x1xf32> to vector<16x32xf32>
    %23 = arith.subf %14, %22 : vector<16x32xf32>
    %24 = arith.mulf %23, %23 : vector<16x32xf32>
    %cst_27 = arith.constant dense<0.000000e+00> : vector<16xf32>
    %25 = vector.multi_reduction <add>, %24, %cst_27 [1] : vector<16x32xf32> to vector<16xf32>
    %26 = vector.shape_cast %25 : vector<16xf32> to vector<16x1xf32>
    %cst_28 = arith.constant 3.200000e+01 : f32
    %27 = vector.broadcast %cst_28 : f32 to vector<16x1xf32>
    %28 = arith.divf %26, %27 : vector<16x1xf32>
    %29 = vector.broadcast %21 : vector<16x1xf32> to vector<16x32xf32>
    %30 = arith.subf %14, %29 : vector<16x32xf32>
    %cst_29 = arith.constant 9.99999974E-6 : f32
    %31 = vector.broadcast %cst_29 : f32 to vector<16x1xf32>
    %32 = arith.addf %28, %31 : vector<16x1xf32>
    %33 = math.rsqrt %32 : vector<16x1xf32>
    %34 = vector.broadcast %33 : vector<16x1xf32> to vector<16x32xf32>
    %35 = arith.mulf %30, %34 : vector<16x32xf32>
    %36 = vector.broadcast %16 : vector<1x32xf32> to vector<16x32xf32>
    %37 = arith.mulf %35, %36 : vector<16x32xf32>
    %38 = vector.broadcast %17 : vector<1x32xf32> to vector<16x32xf32>
    %39 = arith.addf %37, %38 : vector<16x32xf32>
    %40 = arith.truncf %39 : vector<16x32xf32> to vector<16x32xbf16>
    %cst_30 = arith.constant dense<0.000000e+00> : vector<16x96xf32>
    %41 = tpu.matmul %40, %1, %cst_30 {dimension_numbers = #tpu.dot_dimension_numbers<[1], [0], [0], [1], [0, 0, 1, 1], [], []>} : vector<16x32xbf16>, vector<32x96xbf16>, vector<16x96xf32> -> vector<16x96xf32>
    %42 = vector.extract_strided_slice %41 {offsets = [0, 0], sizes = [16, 32], strides = [1, 1]} : vector<16x96xf32> to vector<16x32xf32>
    %43 = vector.extract_strided_slice %9 {offsets = [0, 0], sizes = [1, 32], strides = [1, 1]} : vector<15x32xf32> to vector<1x32xf32>
    %44 = vector.broadcast %43 : vector<1x32xf32> to vector<16x32xf32>
    %45 = arith.addf %42, %44 : vector<16x32xf32>
    %46 = vector.extract_strided_slice %41 {offsets = [0, 32], sizes = [16, 32], strides = [1, 1]} : vector<16x96xf32> to vector<16x32xf32>
    %47 = vector.extract_strided_slice %9 {offsets = [1, 0], sizes = [1, 32], strides = [1, 1]} : vector<15x32xf32> to vector<1x32xf32>
    %48 = vector.broadcast %47 : vector<1x32xf32> to vector<16x32xf32>
    %49 = arith.addf %46, %48 : vector<16x32xf32>
    %50 = vector.extract_strided_slice %41 {offsets = [0, 64], sizes = [16, 32], strides = [1, 1]} : vector<16x96xf32> to vector<16x32xf32>
    %51 = vector.extract_strided_slice %9 {offsets = [2, 0], sizes = [1, 32], strides = [1, 1]} : vector<15x32xf32> to vector<1x32xf32>
    %52 = vector.broadcast %51 : vector<1x32xf32> to vector<16x32xf32>
    %53 = arith.addf %50, %52 : vector<16x32xf32>
    %54 = vector.extract_strided_slice %9 {offsets = [3, 0], sizes = [1, 32], strides = [1, 1]} : vector<15x32xf32> to vector<1x32xf32>
    %cst_31 = arith.constant 0.353553385 : f32
    %55 = vector.broadcast %cst_31 : f32 to vector<16x32xf32>
    %56 = arith.mulf %45, %55 : vector<16x32xf32>
    %57 = arith.truncf %56 : vector<16x32xf32> to vector<16x32xbf16>
    %58 = vector.shape_cast %57 : vector<16x32xbf16> to vector<2x8x32xbf16>
    %59 = vector.extract_strided_slice %58 {offsets = [0, 0, 0], sizes = [2, 8, 8], strides = [1, 1, 1]} : vector<2x8x32xbf16> to vector<2x8x8xbf16>
    %60 = vector.extract_strided_slice %58 {offsets = [0, 0, 8], sizes = [2, 8, 8], strides = [1, 1, 1]} : vector<2x8x32xbf16> to vector<2x8x8xbf16>
    %61 = vector.extract_strided_slice %58 {offsets = [0, 0, 16], sizes = [2, 8, 8], strides = [1, 1, 1]} : vector<2x8x32xbf16> to vector<2x8x8xbf16>
    %62 = vector.extract_strided_slice %58 {offsets = [0, 0, 24], sizes = [2, 8, 8], strides = [1, 1, 1]} : vector<2x8x32xbf16> to vector<2x8x8xbf16>
    %63 = tpu.concatenate %59, %60, %61, %62 in 0 : vector<2x8x8xbf16>, vector<2x8x8xbf16>, vector<2x8x8xbf16>, vector<2x8x8xbf16> -> vector<8x8x8xbf16>
    %64 = arith.truncf %49 : vector<16x32xf32> to vector<16x32xbf16>
    %65 = vector.shape_cast %64 : vector<16x32xbf16> to vector<2x8x32xbf16>
    %66 = vector.extract_strided_slice %65 {offsets = [0, 0, 0], sizes = [2, 8, 8], strides = [1, 1, 1]} : vector<2x8x32xbf16> to vector<2x8x8xbf16>
    %67 = vector.extract_strided_slice %65 {offsets = [0, 0, 8], sizes = [2, 8, 8], strides = [1, 1, 1]} : vector<2x8x32xbf16> to vector<2x8x8xbf16>
    %68 = vector.extract_strided_slice %65 {offsets = [0, 0, 16], sizes = [2, 8, 8], strides = [1, 1, 1]} : vector<2x8x32xbf16> to vector<2x8x8xbf16>
    %69 = vector.extract_strided_slice %65 {offsets = [0, 0, 24], sizes = [2, 8, 8], strides = [1, 1, 1]} : vector<2x8x32xbf16> to vector<2x8x8xbf16>
    %70 = tpu.concatenate %66, %67, %68, %69 in 0 : vector<2x8x8xbf16>, vector<2x8x8xbf16>, vector<2x8x8xbf16>, vector<2x8x8xbf16> -> vector<8x8x8xbf16>
    %71 = arith.truncf %53 : vector<16x32xf32> to vector<16x32xbf16>
    %72 = vector.shape_cast %71 : vector<16x32xbf16> to vector<2x8x32xbf16>
    %73 = vector.extract_strided_slice %72 {offsets = [0, 0, 0], sizes = [2, 8, 8], strides = [1, 1, 1]} : vector<2x8x32xbf16> to vector<2x8x8xbf16>
    %74 = vector.extract_strided_slice %72 {offsets = [0, 0, 8], sizes = [2, 8, 8], strides = [1, 1, 1]} : vector<2x8x32xbf16> to vector<2x8x8xbf16>
    %75 = vector.extract_strided_slice %72 {offsets = [0, 0, 16], sizes = [2, 8, 8], strides = [1, 1, 1]} : vector<2x8x32xbf16> to vector<2x8x8xbf16>
    %76 = vector.extract_strided_slice %72 {offsets = [0, 0, 24], sizes = [2, 8, 8], strides = [1, 1, 1]} : vector<2x8x32xbf16> to vector<2x8x8xbf16>
    %77 = tpu.concatenate %73, %74, %75, %76 in 0 : vector<2x8x8xbf16>, vector<2x8x8xbf16>, vector<2x8x8xbf16>, vector<2x8x8xbf16> -> vector<8x8x8xbf16>
    "tpu.trace_start"() <{level = 10 : i32, message = "btd,bsd->bts"}> : () -> ()
    %cst_32 = arith.constant dense<0.000000e+00> : vector<8x8x8xf32>
    %78 = tpu.matmul %63, %70, %cst_32 {dimension_numbers = #tpu.dot_dimension_numbers<[2], [2], [1], [1], [0, 0, 0, 1, 1, 1], [0], [0]>} : vector<8x8x8xbf16>, vector<8x8x8xbf16>, vector<8x8x8xf32> -> vector<8x8x8xf32>
    "tpu.trace_stop"() : () -> ()
    %79 = tpu.iota {dimensions = array<i32: 0>} : vector<8x8xi32>
    %c0_i32 = arith.constant 0 : i32
    %80 = vector.broadcast %c0_i32 : i32 to vector<8x8xi32>
    %81 = arith.addi %79, %80 : vector<8x8xi32>
    %82 = tpu.iota {dimensions = array<i32: 1>} : vector<8x8xi32>
    %83 = arith.cmpi sle, %82, %81 : vector<8x8xi32>
    %cst_33 = arith.constant 0.000000e+00 : f32
    %cst_34 = arith.constant -1.000000e+09 : f32
    %84 = vector.broadcast %cst_33 : f32 to vector<8x8xf32>
    %85 = vector.broadcast %cst_34 : f32 to vector<8x8xf32>
    %86 = arith.select %83, %84, %85 : vector<8x8xi1>, vector<8x8xf32>
    %87 = vector.shape_cast %86 : vector<8x8xf32> to vector<1x8x8xf32>
    %88 = vector.broadcast %87 : vector<1x8x8xf32> to vector<8x8x8xf32>
    %89 = arith.addf %78, %88 : vector<8x8x8xf32>
    %cst_35 = arith.constant dense<0xFF800000> : vector<8x8xf32>
    %90 = vector.multi_reduction <maximumf>, %89, %cst_35 [2] : vector<8x8x8xf32> to vector<8x8xf32>
    %91 = vector.shape_cast %90 : vector<8x8xf32> to vector<8x8x1xf32>
    %92 = vector.broadcast %91 : vector<8x8x1xf32> to vector<8x8x8xf32>
    %93 = arith.subf %89, %92 : vector<8x8x8xf32>
    %94 = math.exp %93 : vector<8x8x8xf32>
    %cst_36 = arith.constant dense<0.000000e+00> : vector<8x8xf32>
    %95 = vector.multi_reduction <add>, %94, %cst_36 [2] : vector<8x8x8xf32> to vector<8x8xf32>
    %96 = vector.shape_cast %95 : vector<8x8xf32> to vector<8x8x1xf32>
    %97 = tpu.reciprocal %96 {approx = true} : vector<8x8x1xf32> -> vector<8x8x1xf32>
    %98 = vector.broadcast %97 : vector<8x8x1xf32> to vector<8x8x8xf32>
    %99 = arith.mulf %94, %98 : vector<8x8x8xf32>
    %100 = arith.truncf %99 : vector<8x8x8xf32> to vector<8x8x8xbf16>
    "tpu.trace_start"() <{level = 10 : i32, message = "bts,bsd->btd"}> : () -> ()
    %cst_37 = arith.constant dense<0.000000e+00> : vector<8x8x8xf32>
    %101 = tpu.matmul %100, %77, %cst_37 {dimension_numbers = #tpu.dot_dimension_numbers<[2], [1], [1], [2], [0, 0, 0, 1, 1, 2], [0], [0]>} : vector<8x8x8xbf16>, vector<8x8x8xbf16>, vector<8x8x8xf32> -> vector<8x8x8xf32>
    "tpu.trace_stop"() : () -> ()
    %102 = arith.truncf %101 : vector<8x8x8xf32> to vector<8x8x8xbf16>
    %103 = vector.extract_strided_slice %102 {offsets = [0, 0, 0], sizes = [2, 8, 8], strides = [1, 1, 1]} : vector<8x8x8xbf16> to vector<2x8x8xbf16>
    %104 = vector.shape_cast %103 : vector<2x8x8xbf16> to vector<16x8xbf16>
    %105 = vector.extract_strided_slice %102 {offsets = [2, 0, 0], sizes = [2, 8, 8], strides = [1, 1, 1]} : vector<8x8x8xbf16> to vector<2x8x8xbf16>
    %106 = vector.shape_cast %105 : vector<2x8x8xbf16> to vector<16x8xbf16>
    %107 = vector.extract_strided_slice %102 {offsets = [4, 0, 0], sizes = [2, 8, 8], strides = [1, 1, 1]} : vector<8x8x8xbf16> to vector<2x8x8xbf16>
    %108 = vector.shape_cast %107 : vector<2x8x8xbf16> to vector<16x8xbf16>
    %109 = vector.extract_strided_slice %102 {offsets = [6, 0, 0], sizes = [2, 8, 8], strides = [1, 1, 1]} : vector<8x8x8xbf16> to vector<2x8x8xbf16>
    %110 = vector.shape_cast %109 : vector<2x8x8xbf16> to vector<16x8xbf16>
    %111 = tpu.concatenate %104, %106, %108, %110 in 1 : vector<16x8xbf16>, vector<16x8xbf16>, vector<16x8xbf16>, vector<16x8xbf16> -> vector<16x32xbf16>
    %cst_38 = arith.constant dense<0.000000e+00> : vector<16x32xf32>
    %112 = tpu.matmul %111, %2, %cst_38 {dimension_numbers = #tpu.dot_dimension_numbers<[1], [0], [0], [1], [0, 0, 1, 1], [], []>} : vector<16x32xbf16>, vector<32x32xbf16>, vector<16x32xf32> -> vector<16x32xf32>
    %113 = vector.shape_cast %112 : vector<16x32xf32> to vector<2x8x32xf32>
    %114 = vector.shape_cast %113 : vector<2x8x32xf32> to vector<16x32xf32>
    %115 = vector.broadcast %54 : vector<1x32xf32> to vector<16x32xf32>
    %116 = arith.addf %114, %115 : vector<16x32xf32>
    %117 = arith.addf %14, %116 : vector<16x32xf32>
    %118 = vector.extract_strided_slice %9 {offsets = [11, 0], sizes = [1, 32], strides = [1, 1]} : vector<15x32xf32> to vector<1x32xf32>
    %119 = vector.extract_strided_slice %9 {offsets = [12, 0], sizes = [1, 32], strides = [1, 1]} : vector<15x32xf32> to vector<1x32xf32>
    %cst_39 = arith.constant dense<0.000000e+00> : vector<16xf32>
    %120 = vector.multi_reduction <add>, %117, %cst_39 [1] : vector<16x32xf32> to vector<16xf32>
    %121 = vector.shape_cast %120 : vector<16xf32> to vector<16x1xf32>
    %cst_40 = arith.constant 3.200000e+01 : f32
    %122 = vector.broadcast %cst_40 : f32 to vector<16x1xf32>
    %123 = arith.divf %121, %122 : vector<16x1xf32>
    %124 = vector.broadcast %123 : vector<16x1xf32> to vector<16x32xf32>
    %125 = arith.subf %117, %124 : vector<16x32xf32>
    %126 = arith.mulf %125, %125 : vector<16x32xf32>
    %cst_41 = arith.constant dense<0.000000e+00> : vector<16xf32>
    %127 = vector.multi_reduction <add>, %126, %cst_41 [1] : vector<16x32xf32> to vector<16xf32>
    %128 = vector.shape_cast %127 : vector<16xf32> to vector<16x1xf32>
    %cst_42 = arith.constant 3.200000e+01 : f32
    %129 = vector.broadcast %cst_42 : f32 to vector<16x1xf32>
    %130 = arith.divf %128, %129 : vector<16x1xf32>
    %131 = vector.broadcast %123 : vector<16x1xf32> to vector<16x32xf32>
    %132 = arith.subf %117, %131 : vector<16x32xf32>
    %cst_43 = arith.constant 9.99999974E-6 : f32
    %133 = vector.broadcast %cst_43 : f32 to vector<16x1xf32>
    %134 = arith.addf %130, %133 : vector<16x1xf32>
    %135 = math.rsqrt %134 : vector<16x1xf32>
    %136 = vector.broadcast %135 : vector<16x1xf32> to vector<16x32xf32>
    %137 = arith.mulf %132, %136 : vector<16x32xf32>
    %138 = vector.broadcast %118 : vector<1x32xf32> to vector<16x32xf32>
    %139 = arith.mulf %137, %138 : vector<16x32xf32>
    %140 = vector.broadcast %119 : vector<1x32xf32> to vector<16x32xf32>
    %141 = arith.addf %139, %140 : vector<16x32xf32>
    %142 = arith.truncf %141 : vector<16x32xf32> to vector<16x32xbf16>
    %143 = arith.truncf %15 : vector<16x32xf32> to vector<16x32xbf16>
    %cst_44 = arith.constant dense<0.000000e+00> : vector<16x32xf32>
    %144 = tpu.matmul %142, %3, %cst_44 {dimension_numbers = #tpu.dot_dimension_numbers<[1], [0], [0], [1], [0, 0, 1, 1], [], []>} : vector<16x32xbf16>, vector<32x32xbf16>, vector<16x32xf32> -> vector<16x32xf32>
    %145 = vector.extract_strided_slice %9 {offsets = [4, 0], sizes = [1, 32], strides = [1, 1]} : vector<15x32xf32> to vector<1x32xf32>
    %146 = vector.broadcast %145 : vector<1x32xf32> to vector<16x32xf32>
    %147 = arith.addf %144, %146 : vector<16x32xf32>
    %cst_45 = arith.constant dense<0.000000e+00> : vector<16x64xf32>
    %148 = tpu.matmul %143, %4, %cst_45 {dimension_numbers = #tpu.dot_dimension_numbers<[1], [0], [0], [1], [0, 0, 1, 1], [], []>} : vector<16x32xbf16>, vector<32x64xbf16>, vector<16x64xf32> -> vector<16x64xf32>
    %149 = vector.extract_strided_slice %148 {offsets = [0, 0], sizes = [16, 32], strides = [1, 1]} : vector<16x64xf32> to vector<16x32xf32>
    %150 = vector.extract_strided_slice %9 {offsets = [5, 0], sizes = [1, 32], strides = [1, 1]} : vector<15x32xf32> to vector<1x32xf32>
    %151 = vector.broadcast %150 : vector<1x32xf32> to vector<16x32xf32>
    %152 = arith.addf %149, %151 : vector<16x32xf32>
    %153 = vector.extract_strided_slice %148 {offsets = [0, 32], sizes = [16, 32], strides = [1, 1]} : vector<16x64xf32> to vector<16x32xf32>
    %154 = vector.extract_strided_slice %9 {offsets = [6, 0], sizes = [1, 32], strides = [1, 1]} : vector<15x32xf32> to vector<1x32xf32>
    %155 = vector.broadcast %154 : vector<1x32xf32> to vector<16x32xf32>
    %156 = arith.addf %153, %155 : vector<16x32xf32>
    %157 = vector.extract_strided_slice %9 {offsets = [7, 0], sizes = [1, 32], strides = [1, 1]} : vector<15x32xf32> to vector<1x32xf32>
    %cst_46 = arith.constant 0.353553385 : f32
    %158 = vector.broadcast %cst_46 : f32 to vector<16x32xf32>
    %159 = arith.mulf %147, %158 : vector<16x32xf32>
    %160 = arith.truncf %159 : vector<16x32xf32> to vector<16x32xbf16>
    %161 = vector.shape_cast %160 : vector<16x32xbf16> to vector<2x8x32xbf16>
    %162 = vector.extract_strided_slice %161 {offsets = [0, 0, 0], sizes = [2, 8, 8], strides = [1, 1, 1]} : vector<2x8x32xbf16> to vector<2x8x8xbf16>
    %163 = vector.extract_strided_slice %161 {offsets = [0, 0, 8], sizes = [2, 8, 8], strides = [1, 1, 1]} : vector<2x8x32xbf16> to vector<2x8x8xbf16>
    %164 = vector.extract_strided_slice %161 {offsets = [0, 0, 16], sizes = [2, 8, 8], strides = [1, 1, 1]} : vector<2x8x32xbf16> to vector<2x8x8xbf16>
    %165 = vector.extract_strided_slice %161 {offsets = [0, 0, 24], sizes = [2, 8, 8], strides = [1, 1, 1]} : vector<2x8x32xbf16> to vector<2x8x8xbf16>
    %166 = tpu.concatenate %162, %163, %164, %165 in 0 : vector<2x8x8xbf16>, vector<2x8x8xbf16>, vector<2x8x8xbf16>, vector<2x8x8xbf16> -> vector<8x8x8xbf16>
    %167 = arith.truncf %152 : vector<16x32xf32> to vector<16x32xbf16>
    %168 = vector.shape_cast %167 : vector<16x32xbf16> to vector<2x8x32xbf16>
    %169 = vector.extract_strided_slice %168 {offsets = [0, 0, 0], sizes = [2, 8, 8], strides = [1, 1, 1]} : vector<2x8x32xbf16> to vector<2x8x8xbf16>
    %170 = vector.extract_strided_slice %168 {offsets = [0, 0, 8], sizes = [2, 8, 8], strides = [1, 1, 1]} : vector<2x8x32xbf16> to vector<2x8x8xbf16>
    %171 = vector.extract_strided_slice %168 {offsets = [0, 0, 16], sizes = [2, 8, 8], strides = [1, 1, 1]} : vector<2x8x32xbf16> to vector<2x8x8xbf16>
    %172 = vector.extract_strided_slice %168 {offsets = [0, 0, 24], sizes = [2, 8, 8], strides = [1, 1, 1]} : vector<2x8x32xbf16> to vector<2x8x8xbf16>
    %173 = tpu.concatenate %169, %170, %171, %172 in 0 : vector<2x8x8xbf16>, vector<2x8x8xbf16>, vector<2x8x8xbf16>, vector<2x8x8xbf16> -> vector<8x8x8xbf16>
    %174 = arith.truncf %156 : vector<16x32xf32> to vector<16x32xbf16>
    %175 = vector.shape_cast %174 : vector<16x32xbf16> to vector<2x8x32xbf16>
    %176 = vector.extract_strided_slice %175 {offsets = [0, 0, 0], sizes = [2, 8, 8], strides = [1, 1, 1]} : vector<2x8x32xbf16> to vector<2x8x8xbf16>
    %177 = vector.extract_strided_slice %175 {offsets = [0, 0, 8], sizes = [2, 8, 8], strides = [1, 1, 1]} : vector<2x8x32xbf16> to vector<2x8x8xbf16>
    %178 = vector.extract_strided_slice %175 {offsets = [0, 0, 16], sizes = [2, 8, 8], strides = [1, 1, 1]} : vector<2x8x32xbf16> to vector<2x8x8xbf16>
    %179 = vector.extract_strided_slice %175 {offsets = [0, 0, 24], sizes = [2, 8, 8], strides = [1, 1, 1]} : vector<2x8x32xbf16> to vector<2x8x8xbf16>
    %180 = tpu.concatenate %176, %177, %178, %179 in 0 : vector<2x8x8xbf16>, vector<2x8x8xbf16>, vector<2x8x8xbf16>, vector<2x8x8xbf16> -> vector<8x8x8xbf16>
    "tpu.trace_start"() <{level = 10 : i32, message = "btd,bsd->bts"}> : () -> ()
    %cst_47 = arith.constant dense<0.000000e+00> : vector<8x8x8xf32>
    %181 = tpu.matmul %166, %173, %cst_47 {dimension_numbers = #tpu.dot_dimension_numbers<[2], [2], [1], [1], [0, 0, 0, 1, 1, 1], [0], [0]>} : vector<8x8x8xbf16>, vector<8x8x8xbf16>, vector<8x8x8xf32> -> vector<8x8x8xf32>
    "tpu.trace_stop"() : () -> ()
    %182 = arith.extf %0 : vector<2x8x8xbf16> to vector<2x8x8xf32>
    %183 = tpu.concatenate %182, %182, %182, %182 in 0 : vector<2x8x8xf32>, vector<2x8x8xf32>, vector<2x8x8xf32>, vector<2x8x8xf32> -> vector<8x8x8xf32>
    %184 = arith.addf %181, %183 : vector<8x8x8xf32>
    %cst_48 = arith.constant dense<0xFF800000> : vector<8x8xf32>
    %185 = vector.multi_reduction <maximumf>, %184, %cst_48 [2] : vector<8x8x8xf32> to vector<8x8xf32>
    %186 = vector.shape_cast %185 : vector<8x8xf32> to vector<8x8x1xf32>
    %187 = vector.broadcast %186 : vector<8x8x1xf32> to vector<8x8x8xf32>
    %188 = arith.subf %184, %187 : vector<8x8x8xf32>
    %189 = math.exp %188 : vector<8x8x8xf32>
    %cst_49 = arith.constant dense<0.000000e+00> : vector<8x8xf32>
    %190 = vector.multi_reduction <add>, %189, %cst_49 [2] : vector<8x8x8xf32> to vector<8x8xf32>
    %191 = vector.shape_cast %190 : vector<8x8xf32> to vector<8x8x1xf32>
    %192 = tpu.reciprocal %191 {approx = true} : vector<8x8x1xf32> -> vector<8x8x1xf32>
    %193 = vector.broadcast %192 : vector<8x8x1xf32> to vector<8x8x8xf32>
    %194 = arith.mulf %189, %193 : vector<8x8x8xf32>
    %195 = arith.truncf %194 : vector<8x8x8xf32> to vector<8x8x8xbf16>
    "tpu.trace_start"() <{level = 10 : i32, message = "bts,bsd->btd"}> : () -> ()
    %cst_50 = arith.constant dense<0.000000e+00> : vector<8x8x8xf32>
    %196 = tpu.matmul %195, %180, %cst_50 {dimension_numbers = #tpu.dot_dimension_numbers<[2], [1], [1], [2], [0, 0, 0, 1, 1, 2], [0], [0]>} : vector<8x8x8xbf16>, vector<8x8x8xbf16>, vector<8x8x8xf32> -> vector<8x8x8xf32>
    "tpu.trace_stop"() : () -> ()
    %197 = arith.truncf %196 : vector<8x8x8xf32> to vector<8x8x8xbf16>
    %198 = vector.extract_strided_slice %197 {offsets = [0, 0, 0], sizes = [2, 8, 8], strides = [1, 1, 1]} : vector<8x8x8xbf16> to vector<2x8x8xbf16>
    %199 = vector.shape_cast %198 : vector<2x8x8xbf16> to vector<16x8xbf16>
    %200 = vector.extract_strided_slice %197 {offsets = [2, 0, 0], sizes = [2, 8, 8], strides = [1, 1, 1]} : vector<8x8x8xbf16> to vector<2x8x8xbf16>
    %201 = vector.shape_cast %200 : vector<2x8x8xbf16> to vector<16x8xbf16>
    %202 = vector.extract_strided_slice %197 {offsets = [4, 0, 0], sizes = [2, 8, 8], strides = [1, 1, 1]} : vector<8x8x8xbf16> to vector<2x8x8xbf16>
    %203 = vector.shape_cast %202 : vector<2x8x8xbf16> to vector<16x8xbf16>
    %204 = vector.extract_strided_slice %197 {offsets = [6, 0, 0], sizes = [2, 8, 8], strides = [1, 1, 1]} : vector<8x8x8xbf16> to vector<2x8x8xbf16>
    %205 = vector.shape_cast %204 : vector<2x8x8xbf16> to vector<16x8xbf16>
    %206 = tpu.concatenate %199, %201, %203, %205 in 1 : vector<16x8xbf16>, vector<16x8xbf16>, vector<16x8xbf16>, vector<16x8xbf16> -> vector<16x32xbf16>
    %cst_51 = arith.constant dense<0.000000e+00> : vector<16x32xf32>
    %207 = tpu.matmul %206, %5, %cst_51 {dimension_numbers = #tpu.dot_dimension_numbers<[1], [0], [0], [1], [0, 0, 1, 1], [], []>} : vector<16x32xbf16>, vector<32x32xbf16>, vector<16x32xf32> -> vector<16x32xf32>
    %208 = vector.shape_cast %207 : vector<16x32xf32> to vector<2x8x32xf32>
    %209 = vector.shape_cast %208 : vector<2x8x32xf32> to vector<16x32xf32>
    %210 = vector.broadcast %157 : vector<1x32xf32> to vector<16x32xf32>
    %211 = arith.addf %209, %210 : vector<16x32xf32>
    %212 = arith.addf %117, %211 : vector<16x32xf32>
    %213 = vector.extract_strided_slice %9 {offsets = [13, 0], sizes = [1, 32], strides = [1, 1]} : vector<15x32xf32> to vector<1x32xf32>
    %214 = vector.extract_strided_slice %9 {offsets = [14, 0], sizes = [1, 32], strides = [1, 1]} : vector<15x32xf32> to vector<1x32xf32>
    %cst_52 = arith.constant dense<0.000000e+00> : vector<16xf32>
    %215 = vector.multi_reduction <add>, %212, %cst_52 [1] : vector<16x32xf32> to vector<16xf32>
    %216 = vector.shape_cast %215 : vector<16xf32> to vector<16x1xf32>
    %cst_53 = arith.constant 3.200000e+01 : f32
    %217 = vector.broadcast %cst_53 : f32 to vector<16x1xf32>
    %218 = arith.divf %216, %217 : vector<16x1xf32>
    %219 = vector.broadcast %218 : vector<16x1xf32> to vector<16x32xf32>
    %220 = arith.subf %212, %219 : vector<16x32xf32>
    %221 = arith.mulf %220, %220 : vector<16x32xf32>
    %cst_54 = arith.constant dense<0.000000e+00> : vector<16xf32>
    %222 = vector.multi_reduction <add>, %221, %cst_54 [1] : vector<16x32xf32> to vector<16xf32>
    %223 = vector.shape_cast %222 : vector<16xf32> to vector<16x1xf32>
    %cst_55 = arith.constant 3.200000e+01 : f32
    %224 = vector.broadcast %cst_55 : f32 to vector<16x1xf32>
    %225 = arith.divf %223, %224 : vector<16x1xf32>
    %226 = vector.broadcast %218 : vector<16x1xf32> to vector<16x32xf32>
    %227 = arith.subf %212, %226 : vector<16x32xf32>
    %cst_56 = arith.constant 9.99999974E-6 : f32
    %228 = vector.broadcast %cst_56 : f32 to vector<16x1xf32>
    %229 = arith.addf %225, %228 : vector<16x1xf32>
    %230 = math.rsqrt %229 : vector<16x1xf32>
    %231 = vector.broadcast %230 : vector<16x1xf32> to vector<16x32xf32>
    %232 = arith.mulf %227, %231 : vector<16x32xf32>
    %233 = vector.broadcast %213 : vector<1x32xf32> to vector<16x32xf32>
    %234 = arith.mulf %232, %233 : vector<16x32xf32>
    %235 = vector.broadcast %214 : vector<1x32xf32> to vector<16x32xf32>
    %236 = arith.addf %234, %235 : vector<16x32xf32>
    %237 = arith.truncf %236 : vector<16x32xf32> to vector<16x32xbf16>
    %cst_57 = arith.constant dense<0.000000e+00> : vector<16x64xf32>
    %238 = tpu.matmul %237, %6, %cst_57 {dimension_numbers = #tpu.dot_dimension_numbers<[1], [0], [0], [1], [0, 0, 1, 1], [], []>} : vector<16x32xbf16>, vector<32x64xbf16>, vector<16x64xf32> -> vector<16x64xf32>
    %239 = vector.broadcast %8 : vector<1x64xf32> to vector<16x64xf32>
    %240 = arith.addf %238, %239 : vector<16x64xf32>
    %cst_58 = arith.constant 0.000000e+00 : f32
    %241 = vector.broadcast %cst_58 : f32 to vector<16x64xf32>
    %242 = arith.maximumf %240, %241 : vector<16x64xf32>
    %243 = arith.truncf %242 : vector<16x64xf32> to vector<16x64xbf16>
    %cst_59 = arith.constant dense<0.000000e+00> : vector<16x32xf32>
    %244 = tpu.matmul %243, %7, %cst_59 {dimension_numbers = #tpu.dot_dimension_numbers<[1], [0], [0], [1], [0, 0, 1, 1], [], []>} : vector<16x64xbf16>, vector<64x32xbf16>, vector<16x32xf32> -> vector<16x32xf32>
    %245 = arith.addf %212, %244 : vector<16x32xf32>
    %246 = vector.extract_strided_slice %9 {offsets = [8, 0], sizes = [1, 32], strides = [1, 1]} : vector<15x32xf32> to vector<1x32xf32>
    %247 = vector.broadcast %246 : vector<1x32xf32> to vector<16x32xf32>
    %248 = arith.addf %245, %247 : vector<16x32xf32>
    %249 = vector.shape_cast %248 : vector<16x32xf32> to vector<2x8x32xf32>
    %250 = arith.truncf %249 : vector<2x8x32xf32> to vector<2x8x32xbf16>
    %c0_60 = arith.constant 0 : index
    %c0_61 = arith.constant 0 : index
    %c0_62 = arith.constant 0 : index
    %251 = vector.load %arg13[%c0_60, %c0_61, %c0_62] : memref<2x8x32xbf16, #tpu.memory_space<vmem>>, vector<2x8x32xbf16>
    tpu.vector_store %arg13[%c0_60, %c0_61, %c0_62], %250 {strides = array<i32>} : memref<2x8x32xbf16, #tpu.memory_space<vmem>>, vector<2x8x32xbf16>,
    return
  }
  func.func @transform_0(%arg0: i32) -> (i32, i32, i32) {
    %c0_i32 = arith.constant 0 : i32
    %c0_i32_0 = arith.constant 0 : i32
    %c0_i32_1 = arith.constant 0 : i32
    return %arg0, %c0_i32, %c0_i32_0 : i32, i32, i32
  }
  func.func @transform_1(%arg0: i32) -> (i32, i32, i32) {
    %c0_i32 = arith.constant 0 : i32
    %c0_i32_0 = arith.constant 0 : i32
    %c0_i32_1 = arith.constant 0 : i32
    return %arg0, %c0_i32, %c0_i32_0 : i32, i32, i32
  }
  func.func @transform_2(%arg0: i32) -> (i32, i32, i32) {
    %c0_i32 = arith.constant 0 : i32
    %c0_i32_0 = arith.constant 0 : i32
    %c0_i32_1 = arith.constant 0 : i32
    return %arg0, %c0_i32, %c0_i32_0 : i32, i32, i32
  }
  func.func @transform_3(%arg0: i32) -> (i32, i32) {
    %c0_i32 = arith.constant 0 : i32
    %c0_i32_0 = arith.constant 0 : i32
    %c0_i32_1 = arith.constant 0 : i32
    return %c0_i32, %c0_i32_0 : i32, i32
  }
  func.func @transform_4(%arg0: i32) -> (i32, i32) {
    %c0_i32 = arith.constant 0 : i32
    %c0_i32_0 = arith.constant 0 : i32
    %c0_i32_1 = arith.constant 0 : i32
    return %c0_i32, %c0_i32_0 : i32, i32
  }
  func.func @transform_5(%arg0: i32) -> (i32, i32) {
    %c0_i32 = arith.constant 0 : i32
    %c0_i32_0 = arith.constant 0 : i32
    %c0_i32_1 = arith.constant 0 : i32
    return %c0_i32, %c0_i32_0 : i32, i32
  }
  func.func @transform_6(%arg0: i32) -> (i32, i32) {
    %c0_i32 = arith.constant 0 : i32
    %c0_i32_0 = arith.constant 0 : i32
    %c0_i32_1 = arith.constant 0 : i32
    return %c0_i32, %c0_i32_0 : i32, i32
  }
  func.func @transform_7(%arg0: i32) -> (i32, i32) {
    %c0_i32 = arith.constant 0 : i32
    %c0_i32_0 = arith.constant 0 : i32
    %c0_i32_1 = arith.constant 0 : i32
    return %c0_i32, %c0_i32_0 : i32, i32
  }
  func.func @transform_8(%arg0: i32) -> (i32, i32) {
    %c0_i32 = arith.constant 0 : i32
    %c0_i32_0 = arith.constant 0 : i32
    %c0_i32_1 = arith.constant 0 : i32
    return %c0_i32, %c0_i32_0 : i32, i32
  }
  func.func @transform_9(%arg0: i32) -> (i32, i32) {
    %c0_i32 = arith.constant 0 : i32
    %c0_i32_0 = arith.constant 0 : i32
    %c0_i32_1 = arith.constant 0 : i32
    return %c0_i32, %c0_i32_0 : i32, i32
  }
  func.func @transform_10(%arg0: i32) -> (i32, i32) {
    %c0_i32 = arith.constant 0 : i32
    %c0_i32_0 = arith.constant 0 : i32
    %c0_i32_1 = arith.constant 0 : i32
    return %c0_i32, %c0_i32_0 : i32, i32
  }
  func.func @transform_11(%arg0: i32) -> (i32, i32) {
    %c0_i32 = arith.constant 0 : i32
    %c0_i32_0 = arith.constant 0 : i32
    %c0_i32_1 = arith.constant 0 : i32
    return %c0_i32, %c0_i32_0 : i32, i32
  }
  func.func @transform_12(%arg0: i32) -> (i32, i32, i32) {
    %c0_i32 = arith.constant 0 : i32
    %c0_i32_0 = arith.constant 0 : i32
    %c0_i32_1 = arith.constant 0 : i32
    return %arg0, %c0_i32, %c0_i32_0 : i32, i32, i32
  }
}

</mosaic_0001>

<llo_original>
// kernel: tpu_custom_call.1
$region0: #{tpu_custom_call.1}
  #allocation0 [shape = 'u32[]', space=smem, size = 0x4, offset = 0x4, fixed_abs, tag = 'smem constant byte address 0x4 - core index']
  #allocation1 [shape = 'u32[144,128]{1,0:T(1,128)}', space=vmem, size = 0x12000, scoped, tag = 'internal scratch']
  %s0 = inlined_call_operand.hbm [shape: bf16[2,8,32], index: 0, kind: input, shape index: {}]
  %s1 = inlined_call_operand.hbm [shape: bf16[2,8,32], index: 1, kind: input, shape index: {}]
  %s2 = inlined_call_operand.hbm [shape: bf16[2,8,8], index: 2, kind: input, shape index: {}]
  %s3 = inlined_call_operand.vmem [shape: bf16[32,96], index: 3, kind: input, shape index: {}]
  %s4 = inlined_call_operand.vmem [shape: bf16[32,32], index: 4, kind: input, shape index: {}]
  %s5 = inlined_call_operand.vmem [shape: bf16[32,32], index: 5, kind: input, shape index: {}]
  %s6 = inlined_call_operand.hbm [shape: bf16[32,64], index: 6, kind: input, shape index: {}]
  %s7 = inlined_call_operand.hbm [shape: bf16[32,32], index: 7, kind: input, shape index: {}]
  %s8 = inlined_call_operand.hbm [shape: bf16[32,64], index: 8, kind: input, shape index: {}]
  %s9 = inlined_call_operand.vmem [shape: bf16[64,32], index: 9, kind: input, shape index: {}]
  %s10 = inlined_call_operand.vmem [shape: f32[1,64], index: 10, kind: input, shape index: {}]
  %s11 = inlined_call_operand.vmem [shape: f32[15,32], index: 11, kind: input, shape index: {}]
  %s12 = inlined_call_operand.hbm [shape: bf16[2,8,32], index: 12, kind: output, shape index: {}]
  %s13 = sld [smem:[#allocation0]]
  $region82: #{tpu_custom_call.1} parent=0
    _
  %s15 = ssub.s32 1, %s13
  %s16 = scalar_select 0, %s15, %s13
  $region1: #{tpu_custom_call.1} parent=0
    #allocation2 [shape = 'u8[4096]{0}', space=vmem, size = 0x1000, scoped, tag = 'input window, operand 0, single buffered']
    #allocation3 [shape = 's32[1]{0}', space=sflag, size = 0x4, scoped, tag = 'scoped memory for tpu_custom_call.1']
    #allocation4 [shape = 's32[1]{0}', space=sflag, size = 0x4, scoped, tag = 'scoped memory for tpu_custom_call.1']
    #allocation5 [shape = 'u8[4096]{0}', space=vmem, size = 0x1000, scoped, tag = 'input window, operand 1, single buffered']
    #allocation6 [shape = 's32[1]{0}', space=sflag, size = 0x4, scoped, tag = 'scoped memory for tpu_custom_call.1']
    #allocation7 [shape = 'u8[4096]{0}', space=vmem, size = 0x1000, scoped, tag = 'input window, operand 2, single buffered']
    #allocation8 [shape = 'u8[8192]{0}', space=vmem, size = 0x2000, scoped, tag = 'input window, operand 6, single buffered']
    #allocation9 [shape = 's32[1]{0}', space=sflag, size = 0x4, scoped, tag = 'scoped memory for tpu_custom_call.1']
    #allocation10 [shape = 'u8[8192]{0}', space=vmem, size = 0x2000, scoped, tag = 'input window, operand 7, single buffered']
    #allocation11 [shape = 'u8[8192]{0}', space=vmem, size = 0x2000, scoped, tag = 'input window, operand 8, single buffered']
    #allocation12 [shape = 's32[1]{0}', space=sflag, size = 0x4, scoped, tag = 'scoped memory for tpu_custom_call.1']
    #allocation13 [shape = 'u8[4096]{0}', space=vmem, size = 0x1000, scoped, tag = 'output window, operand 0, single buffered']
    %17 = vsyncpa [#allocation3], 0
    %18 = vsyncpa [#allocation6], 0
    %19 = vsyncpa [#allocation9], 0
    %20 = vsyncpa [#allocation12], 0
    %21 = vsyncpa [#allocation4], 0
    // Predicated region
    $region2: #{tpu_custom_call.1} parent=1 // pred_check
      _
    $region3: #{tpu_custom_call.1} parent=1 // pred_check_branch
      %23 = sbr.rel (0) target = $region5
    $region4: #{tpu_custom_call.1} parent=1 // pred_region
      %s25 = ssub.s32 128, 128
      %26 = vsyncadd [#allocation3], %s25
      %s27 = sshll.u32 [#allocation2], 4
      %s28 = int_to_ptr.vmem [resolvable:$true] %s27
      %33 = dma.hbm_to_vmem [thread:$0]  %s0, 128, %s28, [#allocation3], 64, 64, 4
    $region5: #{tpu_custom_call.1} parent=1 // pred_fallthru
      _
    // Predicated region
    $region6: #{tpu_custom_call.1} parent=1 // pred_check
      _
    $region7: #{tpu_custom_call.1} parent=1 // pred_check_branch
      %35 = sbr.rel (0) target = $region9
    $region8: #{tpu_custom_call.1} parent=1 // pred_region
      %s37 = ssub.s32 128, 128
      %38 = vsyncadd [#allocation6], %s37
      %s39 = sshll.u32 [#allocation5], 4
      %s40 = int_to_ptr.vmem [resolvable:$true] %s39
      %45 = dma.hbm_to_vmem [thread:$0]  %s1, 128, %s40, [#allocation6], 64, 64, 4
    $region9: #{tpu_custom_call.1} parent=1 // pred_fallthru
      _
    // Predicated region
    $region10: #{tpu_custom_call.1} parent=1 // pred_check
      _
    $region11: #{tpu_custom_call.1} parent=1 // pred_check_branch
      %47 = sbr.rel (0) target = $region13
    $region12: #{tpu_custom_call.1} parent=1 // pred_region
      %s49 = ssub.s32 128, 128
      %50 = vsyncadd [#allocation6], %s49
      %s51 = sshll.u32 [#allocation7], 4
      %s52 = int_to_ptr.vmem [resolvable:$true] %s51
      %57 = dma.hbm_to_vmem [thread:$0]  %s2, 128, %s52, [#allocation6], 64, 64, 4
    $region13: #{tpu_custom_call.1} parent=1 // pred_fallthru
      _
    // Predicated region
    $region14: #{tpu_custom_call.1} parent=1 // pred_check
      _
    $region15: #{tpu_custom_call.1} parent=1 // pred_check_branch
      %59 = sbr.rel (0) target = $region17
    $region16: #{tpu_custom_call.1} parent=1 // pred_region
      _
    $region17: #{tpu_custom_call.1} parent=1 // pred_fallthru
      _
    // Predicated region
    $region18: #{tpu_custom_call.1} parent=1 // pred_check
      _
    $region19: #{tpu_custom_call.1} parent=1 // pred_check_branch
      %61 = sbr.rel (0) target = $region21
    $region20: #{tpu_custom_call.1} parent=1 // pred_region
      _
    $region21: #{tpu_custom_call.1} parent=1 // pred_fallthru
      _
    // Predicated region
    $region22: #{tpu_custom_call.1} parent=1 // pred_check
      _
    $region23: #{tpu_custom_call.1} parent=1 // pred_check_branch
      %63 = sbr.rel (0) target = $region25
    $region24: #{tpu_custom_call.1} parent=1 // pred_region
      _
    $region25: #{tpu_custom_call.1} parent=1 // pred_fallthru
      _
    // Predicated region
    $region26: #{tpu_custom_call.1} parent=1 // pred_check
      _
    $region27: #{tpu_custom_call.1} parent=1 // pred_check_branch
      %65 = sbr.rel (0) target = $region29
    $region28: #{tpu_custom_call.1} parent=1 // pred_region
      %s67 = ssub.s32 256, 256
      %68 = vsyncadd [#allocation9], %s67
      %s69 = sshll.u32 [#allocation8], 4
      %s70 = int_to_ptr.vmem [resolvable:$true] %s69
      %75 = dma.hbm_to_vmem [thread:$0]  %s6, 256, %s70, [#allocation9], 64, 64, 4
    $region29: #{tpu_custom_call.1} parent=1 // pred_fallthru
      _
    // Predicated region
    $region30: #{tpu_custom_call.1} parent=1 // pred_check
      _
    $region31: #{tpu_custom_call.1} parent=1 // pred_check_branch
      %77 = sbr.rel (0) target = $region33
    $region32: #{tpu_custom_call.1} parent=1 // pred_region
      %s79 = ssub.s32 256, 256
      %80 = vsyncadd [#allocation9], %s79
      %s81 = sshll.u32 [#allocation10], 4
      %s82 = int_to_ptr.vmem [resolvable:$true] %s81
      %87 = dma.hbm_to_vmem [thread:$0]  %s7, 256, %s82, [#allocation9], 64, 64, 4
    $region33: #{tpu_custom_call.1} parent=1 // pred_fallthru
      _
    // Predicated region
    $region34: #{tpu_custom_call.1} parent=1 // pred_check
      _
    $region35: #{tpu_custom_call.1} parent=1 // pred_check_branch
      %89 = sbr.rel (0) target = $region37
    $region36: #{tpu_custom_call.1} parent=1 // pred_region
      %s91 = ssub.s32 256, 256
      %92 = vsyncadd [#allocation12], %s91
      %s93 = sshll.u32 [#allocation11], 4
      %s94 = int_to_ptr.vmem [resolvable:$true] %s93
      %99 = dma.hbm_to_vmem [thread:$0]  %s8, 256, %s94, [#allocation12], 64, 64, 4
    $region37: #{tpu_custom_call.1} parent=1 // pred_fallthru
      _
    // Predicated region
    $region38: #{tpu_custom_call.1} parent=1 // pred_check
      _
    $region39: #{tpu_custom_call.1} parent=1 // pred_check_branch
      %101 = sbr.rel (0) target = $region41
    $region40: #{tpu_custom_call.1} parent=1 // pred_region
      _
    $region41: #{tpu_custom_call.1} parent=1 // pred_fallthru
      _
    // Predicated region
    $region42: #{tpu_custom_call.1} parent=1 // pred_check
      _
    $region43: #{tpu_custom_call.1} parent=1 // pred_check_branch
      %103 = sbr.rel (0) target = $region45
    $region44: #{tpu_custom_call.1} parent=1 // pred_region
      _
    $region45: #{tpu_custom_call.1} parent=1 // pred_fallthru
      _
    // Predicated region
    $region46: #{tpu_custom_call.1} parent=1 // pred_check
      _
    $region47: #{tpu_custom_call.1} parent=1 // pred_check_branch
      %105 = sbr.rel (0) target = $region49
    $region48: #{tpu_custom_call.1} parent=1 // pred_region
      _
    $region49: #{tpu_custom_call.1} parent=1 // pred_fallthru
      _
    // Predicated region
    $region50: #{tpu_custom_call.1} parent=1 // pred_check
      _
    $region51: #{tpu_custom_call.1} parent=1 // pred_check_branch
      %107 = sbr.rel (0) target = $region53
    $region52: #{tpu_custom_call.1} parent=1 // pred_region
      %108 = dma.done [#allocation3], 128
    $region53: #{tpu_custom_call.1} parent=1 // pred_fallthru
      _
    // Predicated region
    $region54: #{tpu_custom_call.1} parent=1 // pred_check
      _
    $region55: #{tpu_custom_call.1} parent=1 // pred_check_branch
      %110 = sbr.rel (0) target = $region57
    $region56: #{tpu_custom_call.1} parent=1 // pred_region
      %111 = dma.done [#allocation6], 128
    $region57: #{tpu_custom_call.1} parent=1 // pred_fallthru
      _
    // Predicated region
    $region58: #{tpu_custom_call.1} parent=1 // pred_check
      _
    $region59: #{tpu_custom_call.1} parent=1 // pred_check_branch
      %113 = sbr.rel (0) target = $region61
    $region60: #{tpu_custom_call.1} parent=1 // pred_region
      %114 = dma.done [#allocation6], 128
    $region61: #{tpu_custom_call.1} parent=1 // pred_fallthru
      _
    // Predicated region
    $region62: #{tpu_custom_call.1} parent=1 // pred_check
      _
    $region63: #{tpu_custom_call.1} parent=1 // pred_check_branch
      %116 = sbr.rel (0) target = $region65
    $region64: #{tpu_custom_call.1} parent=1 // pred_region
      %117 = dma.done [#allocation9], 256
    $region65: #{tpu_custom_call.1} parent=1 // pred_fallthru
      _
    // Predicated region
    $region66: #{tpu_custom_call.1} parent=1 // pred_check
      _
    $region67: #{tpu_custom_call.1} parent=1 // pred_check_branch
      %119 = sbr.rel (0) target = $region69
    $region68: #{tpu_custom_call.1} parent=1 // pred_region
      %120 = dma.done [#allocation9], 256
    $region69: #{tpu_custom_call.1} parent=1 // pred_fallthru
      _
    // Predicated region
    $region70: #{tpu_custom_call.1} parent=1 // pred_check
      _
    $region71: #{tpu_custom_call.1} parent=1 // pred_check_branch
      %122 = sbr.rel (0) target = $region73
    $region72: #{tpu_custom_call.1} parent=1 // pred_region
      %123 = dma.done [#allocation12], 256
    $region73: #{tpu_custom_call.1} parent=1 // pred_fallthru
      _
    %v125 = vld [vmem:[#allocation7] sm:$0xf]
    %v126 = vld [vmem:[#allocation7 + $0x4] sm:$0xf]
    %v127 = vld [vmem:[%s3] sm:$0xf]
    %v128 = vld [vmem:[%s3 + $0x4] sm:$0xf]
    %v129 = vld [vmem:[%s3 + $0x8] sm:$0xf]
    %v130 = vld [vmem:[%s3 + $0xc] sm:$0xf]
    %v131 = vld [vmem:[%s4] sm:$0xf]
    %v132 = vld [vmem:[%s4 + $0x4] sm:$0xf]
    %v133 = vld [vmem:[%s4 + $0x8] sm:$0xf]
    %v134 = vld [vmem:[%s4 + $0xc] sm:$0xf]
    %v135 = vld [vmem:[%s5] sm:$0xf]
    %v136 = vld [vmem:[%s5 + $0x4] sm:$0xf]
    %v137 = vld [vmem:[%s5 + $0x8] sm:$0xf]
    %v138 = vld [vmem:[%s5 + $0xc] sm:$0xf]
    %v139 = vld [vmem:[#allocation8] sm:$0xf]
    %v140 = vld [vmem:[#allocation8 + $0x4] sm:$0xf]
    %v141 = vld [vmem:[#allocation8 + $0x8] sm:$0xf]
    %v142 = vld [vmem:[#allocation8 + $0xc] sm:$0xf]
    %v143 = vld [vmem:[#allocation10] sm:$0xf]
    %v144 = vld [vmem:[#allocation10 + $0x4] sm:$0xf]
    %v145 = vld [vmem:[#allocation10 + $0x8] sm:$0xf]
    %v146 = vld [vmem:[#allocation10 + $0xc] sm:$0xf]
    %v147 = vld [vmem:[#allocation11] sm:$0xf]
    %v148 = vld [vmem:[#allocation11 + $0x4] sm:$0xf]
    %v149 = vld [vmem:[#allocation11 + $0x8] sm:$0xf]
    %v150 = vld [vmem:[#allocation11 + $0xc] sm:$0xf]
    %v151 = vld [vmem:[%s9] sm:$0xf]
    %v152 = vld [vmem:[%s9 + $0x4] sm:$0xf]
    %v153 = vld [vmem:[%s9 + $0x8] sm:$0xf]
    %v154 = vld [vmem:[%s9 + $0xc] sm:$0xf]
    %v155 = vld [vmem:[%s9 + $0x10] sm:$0xf]
    %v156 = vld [vmem:[%s9 + $0x14] sm:$0xf]
    %v157 = vld [vmem:[%s9 + $0x18] sm:$0xf]
    %v158 = vld [vmem:[%s9 + $0x1c] sm:$0xf]
    %v159 = vld [vmem:[%s10] sm:$0x1]
    %v160 = vld [vmem:[%s11] sm:$0xff]
    %v161 = vld [vmem:[%s11 + $0x8] sm:$0x7f]
    %v162 = vld [vmem:[#allocation2] sm:$0xf]
    %v163 = vld [vmem:[#allocation2 + $0x4] sm:$0xf]
    %v164 = vunpack.c.l.bf16 %v162
    %v165 = vunpack.c.l.bf16 %v163
    %v166 = vld [vmem:[#allocation5] sm:$0xf]
    %v167 = vld [vmem:[#allocation5 + $0x4] sm:$0xf]
    %v168 = vunpack.c.l.bf16 %v166
    %v169 = vunpack.c.l.bf16 %v167
    %vm170 = vcmask 261120
    %v171 = vsel %vm170, %v164, 0.0
    %172 = vadd.xlane.f32.xlu0 %v171
    %v173 = vpop.xlane.xlu0 %172
    %v174 = vsel %vm170, %v165, 0.0
    %175 = vadd.xlane.f32.xlu0 %v174
    %v176 = vpop.xlane.xlu0 %175
    %v177 = vrcp.pop 32.0
    %v178 = vmul.f32 %v173, %v177
    %v179 = vmul.f32 %v176, %v177
    %v180 = vsub.f32 %v164, %v178
    %v181 = vsub.f32 %v165, %v179
    %v182 = vmul.f32 %v180, %v180
    %v183 = vmul.f32 %v181, %v181
    %v184 = vsel %vm170, %v182, 0.0
    %185 = vadd.xlane.f32.xlu0 %v184
    %v186 = vpop.xlane.xlu0 %185
    %v187 = vsel %vm170, %v183, 0.0
    %188 = vadd.xlane.f32.xlu0 %v187
    %v189 = vpop.xlane.xlu0 %188
    %v190 = vmul.f32 %v186, %v177
    %v191 = vmul.f32 %v189, %v177
    %v192 = vadd.f32 %v190, 1e-05
    %v193 = vadd.f32 %v191, 1e-05
    %v194 = vrsqrt.pop %v192
    %v195 = vrsqrt.pop %v193
    %v196 = vmul.f32 %v180, %v194
    %v197 = vmul.f32 %v181, %v195
    %v198 = vlaneseq
    %v199 = vshrl.u32 %v198, 7
    %v200 = vsub.s32 1, %v199
    %v201 = vrot.slane %v161, %v200
    %v202 = vmul.f32 %v196, %v201
    %v203 = vmul.f32 %v197, %v201
    %v204 = vlaneseq
    %v205 = vshrl.u32 %v204, 7
    %v206 = vsub.s32 2, %v205
    %v207 = vrot.slane %v161, %v206
    %v208 = vadd.f32 %v202, %v207
    %v209 = vadd.f32 %v203, %v207
    %v210 = vpack.c.bf16 %v209, %v208
    %v215 = vunpack.c.l.b16 %v127
    %v216 = vunpack.c.l.b16 %v128
    %v217 = vunpack.c.l.b16 %v129
    %v218 = vunpack.c.l.b16 %v130
    %v219 = vpack.c.b16 %v216, %v215
    %v220 = vpack.c.b16 %v218, %v217
    %v224 = vsel %vm170, %v210, 0
    %226 = vmatprep.subr.bf16.mxu0 0
    %227 = vmatpush1.bf16.msra.mxu0 %v219
    %228 = vmatprep.subr.bf16.mxu0 0
    %229 = vmatpush1.bf16.msra.mxu0 %v220
    %230 = vmatprep.subr.bf16.mxu0 0
    %231 = vmatpush1.bf16.msra.mxu0 0
    %232 = vmatprep.subr.bf16.mxu0 0
    %233 = vmatpush1.bf16.msra.mxu0 0
    %234 = vmatprep.subr.bf16.mxu0 0
    %235 = vmatpush1.bf16.msra.mxu0 0
    %236 = vmatprep.subr.bf16.mxu0 0
    %237 = vmatpush1.bf16.msra.mxu0 0
    %238 = vmatprep.subr.bf16.mxu0 0
    %239 = vmatpush1.bf16.msra.mxu0 0
    %240 = vmatprep.subr.bf16.mxu0 0
    %241 = vmatpush1.bf16.msra.mxu0 0
    %242 = vmatprep.subr.bf16.mxu0 0
    %243 = vmatpush1.bf16.msra.mxu0 0
    %244 = vmatprep.subr.bf16.mxu0 0
    %245 = vmatpush1.bf16.msra.mxu0 0
    %246 = vmatprep.subr.bf16.mxu0 0
    %247 = vmatpush1.bf16.msra.mxu0 0
    %248 = vmatprep.subr.bf16.mxu0 0
    %249 = vmatpush1.bf16.msra.mxu0 0
    %250 = vmatprep.subr.bf16.mxu0 0
    %251 = vmatpush1.bf16.msra.mxu0 0
    %252 = vmatprep.subr.bf16.mxu0 0
    %253 = vmatpush1.bf16.msra.mxu0 0
    %254 = vmatprep.subr.bf16.mxu0 0
    %255 = vmatpush1.bf16.msra.mxu0 0
    %256 = vmatprep.subr.bf16.mxu0 0
    %257 = vmatpush1.bf16.msra.mxu0 0
    %258 = vmatprep.mubr.bf16.mxu0 0
    %259 = vmatmul.mubr.bf16.gmra.mrb[0].mxu0 %v224
    %v260 = vpop.f32.mrb[0].mxu0
    %v261 = vadd.f32 0.0, %v260
    %v262 = vpop.f32.mrb[0].mxu0
    %v263 = vpop.f32.mrb[0].mxu0
    %v264 = vadd.f32 0.0, %v263
    %v265 = vpop.f32.mrb[0].mxu0
    %266 = vdwg.mxu0
    %v267 = vlaneseq
    %v268 = vshrl.u32 %v267, 7
    %v269 = vsub.s32 0, %v268
    %v270 = vrot.slane %v160, %v269
    %v271 = vadd.f32 %v261, %v270
    %v272 = vadd.f32 %v264, %v270
    %v273 = vlaneseq
    %v274 = vshrl.u32 %v273, 7
    %v275 = vsub.s32 1, %v274
    %v276 = vrot.slane %v160, %v275
    %278 = vrot.lane.b32.xlu0 %v276, 32
    %v279 = vpop.permute.xlu0 %278
    %v281 = vadd.f32 %v261, %v279
    %v282 = vadd.f32 %v264, %v279
    %v283 = vlaneseq
    %v284 = vshrl.u32 %v283, 7
    %v285 = vsub.s32 2, %v284
    %v286 = vrot.slane %v160, %v285
    %288 = vrot.lane.b32.xlu0 %v286, 64
    %v289 = vpop.permute.xlu0 %288
    %v291 = vadd.f32 %v261, %v289
    %v292 = vadd.f32 %v264, %v289
    %v293 = vmul.f32 %v271, 0.35355338
    %v294 = vmul.f32 %v272, 0.35355338
    %v295 = vpack.c.bf16 %v294, %v293
    %v297 = vunpack.c.l.b16 %v295
    %v298 = vunpack.c.h.b16 %v295
    %v299 = vpack.c.b16 %v297, %v297
    %v300 = vpack.c.b16 %v298, %v298
    %301 = vrot.lane.b32.xlu0 %v299, 120
    %v302 = vpop.permute.xlu0 %301
    %303 = vrot.lane.b32.xlu0 %v300, 120
    %v304 = vpop.permute.xlu0 %303
    %305 = vrot.lane.b32.xlu0 %v299, 112
    %v306 = vpop.permute.xlu0 %305
    %307 = vrot.lane.b32.xlu0 %v300, 112
    %v308 = vpop.permute.xlu0 %307
    %309 = vrot.lane.b32.xlu0 %v299, 104
    %v310 = vpop.permute.xlu0 %309
    %311 = vrot.lane.b32.xlu0 %v300, 104
    %v312 = vpop.permute.xlu0 %311
    %v313 = vpack.c.bf16 %v282, %v281
    %v315 = vunpack.c.l.b16 %v313
    %v316 = vunpack.c.h.b16 %v313
    %v317 = vpack.c.b16 %v315, %v315
    %v318 = vpack.c.b16 %v316, %v316
    %319 = vrot.lane.b32.xlu0 %v317, 120
    %v320 = vpop.permute.xlu0 %319
    %321 = vrot.lane.b32.xlu0 %v318, 120
    %v322 = vpop.permute.xlu0 %321
    %323 = vrot.lane.b32.xlu0 %v317, 112
    %v324 = vpop.permute.xlu0 %323
    %325 = vrot.lane.b32.xlu0 %v318, 112
    %v326 = vpop.permute.xlu0 %325
    %327 = vrot.lane.b32.xlu0 %v317, 104
    %v328 = vpop.permute.xlu0 %327
    %329 = vrot.lane.b32.xlu0 %v318, 104
    %v330 = vpop.permute.xlu0 %329
    %v331 = vpack.c.bf16 %v292, %v291
    %v333 = vunpack.c.l.b16 %v331
    %v334 = vunpack.c.h.b16 %v331
    %v335 = vpack.c.b16 %v333, %v333
    %v336 = vpack.c.b16 %v334, %v334
    %337 = vrot.lane.b32.xlu0 %v335, 120
    %v338 = vpop.permute.xlu0 %337
    %339 = vrot.lane.b32.xlu0 %v336, 120
    %v340 = vpop.permute.xlu0 %339
    %341 = vrot.lane.b32.xlu0 %v335, 112
    %v342 = vpop.permute.xlu0 %341
    %343 = vrot.lane.b32.xlu0 %v336, 112
    %v344 = vpop.permute.xlu0 %343
    %345 = vrot.lane.b32.xlu0 %v335, 104
    %v346 = vpop.permute.xlu0 %345
    %347 = vrot.lane.b32.xlu0 %v336, 104
    %v348 = vpop.permute.xlu0 %347
    %v349 = vlaneseq
    %v350 = vshrl.u32 %v349, 7
    %v351 = vlaneseq
    %v352 = vand.u32 %v351, 127
    %vm353 = vcmp.le.s32.totalorder %v352, %v350
    %v354 = vsel %vm353, 0.0, -1e+09
    %355 = vrot.lane.b32.xlu0 %v317, 96
    %v356 = vpop.permute.xlu0 %355
    %vm357 = vcmask 64512
    %v359 = vsel %vm357, %v299, 0
    %v362 = vsel %vm357, %v356, 0
    %364 = vmatprep.subr.bf16.mxu0 0
    %365 = vmatpush1.bf16.xpose.msra.mxu0 %v362
    %366 = vmatprep.subr.bf16.mxu0 0
    %367 = vmatpush1.bf16.xpose.msra.mxu0 0
    %368 = vmatprep.subr.bf16.mxu0 0
    %369 = vmatpush1.bf16.xpose.msra.mxu0 0
    %370 = vmatprep.subr.bf16.mxu0 0
    %371 = vmatpush1.bf16.xpose.msra.mxu0 0
    %372 = vmatprep.subr.bf16.mxu0 0
    %373 = vmatpush1.bf16.xpose.msra.mxu0 0
    %374 = vmatprep.subr.bf16.mxu0 0
    %375 = vmatpush1.bf16.xpose.msra.mxu0 0
    %376 = vmatprep.subr.bf16.mxu0 0
    %377 = vmatpush1.bf16.xpose.msra.mxu0 0
    %378 = vmatprep.subr.bf16.mxu0 0
    %379 = vmatpush1.bf16.xpose.msra.mxu0 0
    %380 = vmatprep.subr.bf16.mxu0 0
    %381 = vmatpush1.bf16.xpose.msra.mxu0 0
    %382 = vmatprep.subr.bf16.mxu0 0
    %383 = vmatpush1.bf16.xpose.msra.mxu0 0
    %384 = vmatprep.subr.bf16.mxu0 0
    %385 = vmatpush1.bf16.xpose.msra.mxu0 0
    %386 = vmatprep.subr.bf16.mxu0 0
    %387 = vmatpush1.bf16.xpose.msra.mxu0 0
    %388 = vmatprep.subr.bf16.mxu0 0
    %389 = vmatpush1.bf16.xpose.msra.mxu0 0
    %390 = vmatprep.subr.bf16.mxu0 0
    %391 = vmatpush1.bf16.xpose.msra.mxu0 0
    %392 = vmatprep.subr.bf16.mxu0 0
    %393 = vmatpush1.bf16.xpose.msra.mxu0 0
    %394 = vmatprep.subr.bf16.mxu0 0
    %395 = vmatpush1.bf16.xpose.msra.mxu0 0
    %396 = vmatprep.mubr.bf16.mxu0 0
    %397 = vmatmul.mubr.bf16.gmra.mrb[0].mxu0 %v359
    %v398 = vpop.f32.mrb[0].mxu0
    %v399 = vadd.f32 %v354, %v398
    %v400 = vpop.f32.mrb[0].mxu0
    %v401 = vpop.f32.mrb[0].mxu0
    %v402 = vpop.f32.mrb[0].mxu0
    %403 = vdwg.mxu0
    %404 = vrot.lane.b32.xlu0 %v318, 96
    %v405 = vpop.permute.xlu0 %404
    %v407 = vsel %vm357, %v300, 0
    %v410 = vsel %vm357, %v405, 0
    %412 = vmatprep.subr.bf16.mxu0 0
    %413 = vmatpush1.bf16.xpose.msra.mxu0 %v410
    %414 = vmatprep.subr.bf16.mxu0 0
    %415 = vmatpush1.bf16.xpose.msra.mxu0 0
    %416 = vmatprep.subr.bf16.mxu0 0
    %417 = vmatpush1.bf16.xpose.msra.mxu0 0
    %418 = vmatprep.subr.bf16.mxu0 0
    %419 = vmatpush1.bf16.xpose.msra.mxu0 0
    %420 = vmatprep.subr.bf16.mxu0 0
    %421 = vmatpush1.bf16.xpose.msra.mxu0 0
    %422 = vmatprep.subr.bf16.mxu0 0
    %423 = vmatpush1.bf16.xpose.msra.mxu0 0
    %424 = vmatprep.subr.bf16.mxu0 0
    %425 = vmatpush1.bf16.xpose.msra.mxu0 0
    %426 = vmatprep.subr.bf16.mxu0 0
    %427 = vmatpush1.bf16.xpose.msra.mxu0 0
    %428 = vmatprep.subr.bf16.mxu0 0
    %429 = vmatpush1.bf16.xpose.msra.mxu0 0
    %430 = vmatprep.subr.bf16.mxu0 0
    %431 = vmatpush1.bf16.xpose.msra.mxu0 0
    %432 = vmatprep.subr.bf16.mxu0 0
    %433 = vmatpush1.bf16.xpose.msra.mxu0 0
    %434 = vmatprep.subr.bf16.mxu0 0
    %435 = vmatpush1.bf16.xpose.msra.mxu0 0
    %436 = vmatprep.subr.bf16.mxu0 0
    %437 = vmatpush1.bf16.xpose.msra.mxu0 0
    %438 = vmatprep.subr.bf16.mxu0 0
    %439 = vmatpush1.bf16.xpose.msra.mxu0 0
    %440 = vmatprep.subr.bf16.mxu0 0
    %441 = vmatpush1.bf16.xpose.msra.mxu0 0
    %442 = vmatprep.subr.bf16.mxu0 0
    %443 = vmatpush1.bf16.xpose.msra.mxu0 0
    %444 = vmatprep.mubr.bf16.mxu0 0
    %445 = vmatmul.mubr.bf16.gmra.mrb[0].mxu0 %v407
    %v446 = vpop.f32.mrb[0].mxu0
    %v447 = vadd.f32 %v354, %v446
    %v448 = vpop.f32.mrb[0].mxu0
    %v449 = vpop.f32.mrb[0].mxu0
    %v450 = vpop.f32.mrb[0].mxu0
    %451 = vdwg.mxu0
    %v452 = vunpack.c.l.b16 %v320
    %v453 = vpack.c.b16 %v452, %v452
    %454 = vrot.lane.b32.xlu0 %v453, 96
    %v455 = vpop.permute.xlu0 %454
    %v457 = vsel %vm357, %v302, 0
    %v460 = vsel %vm357, %v455, 0
    %462 = vmatprep.subr.bf16.mxu0 0
    %463 = vmatpush1.bf16.xpose.msra.mxu0 %v460
    %464 = vmatprep.subr.bf16.mxu0 0
    %465 = vmatpush1.bf16.xpose.msra.mxu0 0
    %466 = vmatprep.subr.bf16.mxu0 0
    %467 = vmatpush1.bf16.xpose.msra.mxu0 0
    %468 = vmatprep.subr.bf16.mxu0 0
    %469 = vmatpush1.bf16.xpose.msra.mxu0 0
    %470 = vmatprep.subr.bf16.mxu0 0
    %471 = vmatpush1.bf16.xpose.msra.mxu0 0
    %472 = vmatprep.subr.bf16.mxu0 0
    %473 = vmatpush1.bf16.xpose.msra.mxu0 0
    %474 = vmatprep.subr.bf16.mxu0 0
    %475 = vmatpush1.bf16.xpose.msra.mxu0 0
    %476 = vmatprep.subr.bf16.mxu0 0
    %477 = vmatpush1.bf16.xpose.msra.mxu0 0
    %478 = vmatprep.subr.bf16.mxu0 0
    %479 = vmatpush1.bf16.xpose.msra.mxu0 0
    %480 = vmatprep.subr.bf16.mxu0 0
    %481 = vmatpush1.bf16.xpose.msra.mxu0 0
    %482 = vmatprep.subr.bf16.mxu0 0
    %483 = vmatpush1.bf16.xpose.msra.mxu0 0
    %484 = vmatprep.subr.bf16.mxu0 0
    %485 = vmatpush1.bf16.xpose.msra.mxu0 0
    %486 = vmatprep.subr.bf16.mxu0 0
    %487 = vmatpush1.bf16.xpose.msra.mxu0 0
    %488 = vmatprep.subr.bf16.mxu0 0
    %489 = vmatpush1.bf16.xpose.msra.mxu0 0
    %490 = vmatprep.subr.bf16.mxu0 0
    %491 = vmatpush1.bf16.xpose.msra.mxu0 0
    %492 = vmatprep.subr.bf16.mxu0 0
    %493 = vmatpush1.bf16.xpose.msra.mxu0 0
    %494 = vmatprep.mubr.bf16.mxu0 0
    %495 = vmatmul.mubr.bf16.gmra.mrb[0].mxu0 %v457
    %v496 = vpop.f32.mrb[0].mxu0
    %v497 = vadd.f32 %v354, %v496
    %v498 = vpop.f32.mrb[0].mxu0
    %v499 = vpop.f32.mrb[0].mxu0
    %v500 = vpop.f32.mrb[0].mxu0
    %501 = vdwg.mxu0
    %v502 = vunpack.c.l.b16 %v322
    %v503 = vpack.c.b16 %v502, %v502
    %504 = vrot.lane.b32.xlu0 %v503, 96
    %v505 = vpop.permute.xlu0 %504
    %v507 = vsel %vm357, %v304, 0
    %v510 = vsel %vm357, %v505, 0
    %512 = vmatprep.subr.bf16.mxu0 0
    %513 = vmatpush1.bf16.xpose.msra.mxu0 %v510
    %514 = vmatprep.subr.bf16.mxu0 0
    %515 = vmatpush1.bf16.xpose.msra.mxu0 0
    %516 = vmatprep.subr.bf16.mxu0 0
    %517 = vmatpush1.bf16.xpose.msra.mxu0 0
    %518 = vmatprep.subr.bf16.mxu0 0
    %519 = vmatpush1.bf16.xpose.msra.mxu0 0
    %520 = vmatprep.subr.bf16.mxu0 0
    %521 = vmatpush1.bf16.xpose.msra.mxu0 0
    %522 = vmatprep.subr.bf16.mxu0 0
    %523 = vmatpush1.bf16.xpose.msra.mxu0 0
    %524 = vmatprep.subr.bf16.mxu0 0
    %525 = vmatpush1.bf16.xpose.msra.mxu0 0
    %526 = vmatprep.subr.bf16.mxu0 0
    %527 = vmatpush1.bf16.xpose.msra.mxu0 0
    %528 = vmatprep.subr.bf16.mxu0 0
    %529 = vmatpush1.bf16.xpose.msra.mxu0 0
    %530 = vmatprep.subr.bf16.mxu0 0
    %531 = vmatpush1.bf16.xpose.msra.mxu0 0
    %532 = vmatprep.subr.bf16.mxu0 0
    %533 = vmatpush1.bf16.xpose.msra.mxu0 0
    %534 = vmatprep.subr.bf16.mxu0 0
    %535 = vmatpush1.bf16.xpose.msra.mxu0 0
    %536 = vmatprep.subr.bf16.mxu0 0
    %537 = vmatpush1.bf16.xpose.msra.mxu0 0
    %538 = vmatprep.subr.bf16.mxu0 0
    %539 = vmatpush1.bf16.xpose.msra.mxu0 0
    %540 = vmatprep.subr.bf16.mxu0 0
    %541 = vmatpush1.bf16.xpose.msra.mxu0 0
    %542 = vmatprep.subr.bf16.mxu0 0
    %543 = vmatpush1.bf16.xpose.msra.mxu0 0
    %544 = vmatprep.mubr.bf16.mxu0 0
    %545 = vmatmul.mubr.bf16.gmra.mrb[0].mxu0 %v507
    %v546 = vpop.f32.mrb[0].mxu0
    %v547 = vadd.f32 %v354, %v546
    %v548 = vpop.f32.mrb[0].mxu0
    %v549 = vpop.f32.mrb[0].mxu0
    %v550 = vpop.f32.mrb[0].mxu0
    %551 = vdwg.mxu0
    %v552 = vunpack.c.l.b16 %v324
    %v553 = vpack.c.b16 %v552, %v552
    %554 = vrot.lane.b32.xlu0 %v553, 96
    %v555 = vpop.permute.xlu0 %554
    %v557 = vsel %vm357, %v306, 0
    %v560 = vsel %vm357, %v555, 0
    %562 = vmatprep.subr.bf16.mxu0 0
    %563 = vmatpush1.bf16.xpose.msra.mxu0 %v560
    %564 = vmatprep.subr.bf16.mxu0 0
    %565 = vmatpush1.bf16.xpose.msra.mxu0 0
    %566 = vmatprep.subr.bf16.mxu0 0
    %567 = vmatpush1.bf16.xpose.msra.mxu0 0
    %568 = vmatprep.subr.bf16.mxu0 0
    %569 = vmatpush1.bf16.xpose.msra.mxu0 0
    %570 = vmatprep.subr.bf16.mxu0 0
    %571 = vmatpush1.bf16.xpose.msra.mxu0 0
    %572 = vmatprep.subr.bf16.mxu0 0
    %573 = vmatpush1.bf16.xpose.msra.mxu0 0
    %574 = vmatprep.subr.bf16.mxu0 0
    %575 = vmatpush1.bf16.xpose.msra.mxu0 0
    %576 = vmatprep.subr.bf16.mxu0 0
    %577 = vmatpush1.bf16.xpose.msra.mxu0 0
    %578 = vmatprep.subr.bf16.mxu0 0
    %579 = vmatpush1.bf16.xpose.msra.mxu0 0
    %580 = vmatprep.subr.bf16.mxu0 0
    %581 = vmatpush1.bf16.xpose.msra.mxu0 0
    %582 = vmatprep.subr.bf16.mxu0 0
    %583 = vmatpush1.bf16.xpose.msra.mxu0 0
    %584 = vmatprep.subr.bf16.mxu0 0
    %585 = vmatpush1.bf16.xpose.msra.mxu0 0
    %586 = vmatprep.subr.bf16.mxu0 0
    %587 = vmatpush1.bf16.xpose.msra.mxu0 0
    %588 = vmatprep.subr.bf16.mxu0 0
    %589 = vmatpush1.bf16.xpose.msra.mxu0 0
    %590 = vmatprep.subr.bf16.mxu0 0
    %591 = vmatpush1.bf16.xpose.msra.mxu0 0
    %592 = vmatprep.subr.bf16.mxu0 0
    %593 = vmatpush1.bf16.xpose.msra.mxu0 0
    %594 = vmatprep.mubr.bf16.mxu0 0
    %595 = vmatmul.mubr.bf16.gmra.mrb[0].mxu0 %v557
    %v596 = vpop.f32.mrb[0].mxu0
    %v597 = vadd.f32 %v354, %v596
    %v598 = vpop.f32.mrb[0].mxu0
    %v599 = vpop.f32.mrb[0].mxu0
    %v600 = vpop.f32.mrb[0].mxu0
    %601 = vdwg.mxu0
    %v602 = vunpack.c.l.b16 %v326
    %v603 = vpack.c.b16 %v602, %v602
    %604 = vrot.lane.b32.xlu0 %v603, 96
    %v605 = vpop.permute.xlu0 %604
    %v607 = vsel %vm357, %v308, 0
    %v610 = vsel %vm357, %v605, 0
    %612 = vmatprep.subr.bf16.mxu0 0
    %613 = vmatpush1.bf16.xpose.msra.mxu0 %v610
    %614 = vmatprep.subr.bf16.mxu0 0
    %615 = vmatpush1.bf16.xpose.msra.mxu0 0
    %616 = vmatprep.subr.bf16.mxu0 0
    %617 = vmatpush1.bf16.xpose.msra.mxu0 0
    %618 = vmatprep.subr.bf16.mxu0 0
    %619 = vmatpush1.bf16.xpose.msra.mxu0 0
    %620 = vmatprep.subr.bf16.mxu0 0
    %621 = vmatpush1.bf16.xpose.msra.mxu0 0
    %622 = vmatprep.subr.bf16.mxu0 0
    %623 = vmatpush1.bf16.xpose.msra.mxu0 0
    %624 = vmatprep.subr.bf16.mxu0 0
    %625 = vmatpush1.bf16.xpose.msra.mxu0 0
    %626 = vmatprep.subr.bf16.mxu0 0
    %627 = vmatpush1.bf16.xpose.msra.mxu0 0
    %628 = vmatprep.subr.bf16.mxu0 0
    %629 = vmatpush1.bf16.xpose.msra.mxu0 0
    %630 = vmatprep.subr.bf16.mxu0 0
    %631 = vmatpush1.bf16.xpose.msra.mxu0 0
    %632 = vmatprep.subr.bf16.mxu0 0
    %633 = vmatpush1.bf16.xpose.msra.mxu0 0
    %634 = vmatprep.subr.bf16.mxu0 0
    %635 = vmatpush1.bf16.xpose.msra.mxu0 0
    %636 = vmatprep.subr.bf16.mxu0 0
    %637 = vmatpush1.bf16.xpose.msra.mxu0 0
    %638 = vmatprep.subr.bf16.mxu0 0
    %639 = vmatpush1.bf16.xpose.msra.mxu0 0
    %640 = vmatprep.subr.bf16.mxu0 0
    %641 = vmatpush1.bf16.xpose.msra.mxu0 0
    %642 = vmatprep.subr.bf16.mxu0 0
    %643 = vmatpush1.bf16.xpose.msra.mxu0 0
    %644 = vmatprep.mubr.bf16.mxu0 0
    %645 = vmatmul.mubr.bf16.gmra.mrb[0].mxu0 %v607
    %v646 = vpop.f32.mrb[0].mxu0
    %v647 = vadd.f32 %v354, %v646
    %v648 = vpop.f32.mrb[0].mxu0
    %v649 = vpop.f32.mrb[0].mxu0
    %v650 = vpop.f32.mrb[0].mxu0
    %651 = vdwg.mxu0
    %v652 = vunpack.c.l.b16 %v328
    %v653 = vpack.c.b16 %v652, %v652
    %654 = vrot.lane.b32.xlu0 %v653, 96
    %v655 = vpop.permute.xlu0 %654
    %v657 = vsel %vm357, %v310, 0
    %v660 = vsel %vm357, %v655, 0
    %662 = vmatprep.subr.bf16.mxu0 0
    %663 = vmatpush1.bf16.xpose.msra.mxu0 %v660
    %664 = vmatprep.subr.bf16.mxu0 0
    %665 = vmatpush1.bf16.xpose.msra.mxu0 0
    %666 = vmatprep.subr.bf16.mxu0 0
    %667 = vmatpush1.bf16.xpose.msra.mxu0 0
    %668 = vmatprep.subr.bf16.mxu0 0
    %669 = vmatpush1.bf16.xpose.msra.mxu0 0
    %670 = vmatprep.subr.bf16.mxu0 0
    %671 = vmatpush1.bf16.xpose.msra.mxu0 0
    %672 = vmatprep.subr.bf16.mxu0 0
    %673 = vmatpush1.bf16.xpose.msra.mxu0 0
    %674 = vmatprep.subr.bf16.mxu0 0
    %675 = vmatpush1.bf16.xpose.msra.mxu0 0
    %676 = vmatprep.subr.bf16.mxu0 0
    %677 = vmatpush1.bf16.xpose.msra.mxu0 0
    %678 = vmatprep.subr.bf16.mxu0 0
    %679 = vmatpush1.bf16.xpose.msra.mxu0 0
    %680 = vmatprep.subr.bf16.mxu0 0
    %681 = vmatpush1.bf16.xpose.msra.mxu0 0
    %682 = vmatprep.subr.bf16.mxu0 0
    %683 = vmatpush1.bf16.xpose.msra.mxu0 0
    %684 = vmatprep.subr.bf16.mxu0 0
    %685 = vmatpush1.bf16.xpose.msra.mxu0 0
    %686 = vmatprep.subr.bf16.mxu0 0
    %687 = vmatpush1.bf16.xpose.msra.mxu0 0
    %688 = vmatprep.subr.bf16.mxu0 0
    %689 = vmatpush1.bf16.xpose.msra.mxu0 0
    %690 = vmatprep.subr.bf16.mxu0 0
    %691 = vmatpush1.bf16.xpose.msra.mxu0 0
    %692 = vmatprep.subr.bf16.mxu0 0
    %693 = vmatpush1.bf16.xpose.msra.mxu0 0
    %694 = vmatprep.mubr.bf16.mxu0 0
    %695 = vmatmul.mubr.bf16.gmra.mrb[0].mxu0 %v657
    %v696 = vpop.f32.mrb[0].mxu0
    %v697 = vadd.f32 %v354, %v696
    %v698 = vpop.f32.mrb[0].mxu0
    %v699 = vpop.f32.mrb[0].mxu0
    %v700 = vpop.f32.mrb[0].mxu0
    %701 = vdwg.mxu0
    %v702 = vunpack.c.l.b16 %v330
    %v703 = vpack.c.b16 %v702, %v702
    %704 = vrot.lane.b32.xlu0 %v703, 96
    %v705 = vpop.permute.xlu0 %704
    %v707 = vsel %vm357, %v312, 0
    %v710 = vsel %vm357, %v705, 0
    %712 = vmatprep.subr.bf16.mxu0 0
    %713 = vmatpush1.bf16.xpose.msra.mxu0 %v710
    %714 = vmatprep.subr.bf16.mxu0 0
    %715 = vmatpush1.bf16.xpose.msra.mxu0 0
    %716 = vmatprep.subr.bf16.mxu0 0
    %717 = vmatpush1.bf16.xpose.msra.mxu0 0
    %718 = vmatprep.subr.bf16.mxu0 0
    %719 = vmatpush1.bf16.xpose.msra.mxu0 0
    %720 = vmatprep.subr.bf16.mxu0 0
    %721 = vmatpush1.bf16.xpose.msra.mxu0 0
    %722 = vmatprep.subr.bf16.mxu0 0
    %723 = vmatpush1.bf16.xpose.msra.mxu0 0
    %724 = vmatprep.subr.bf16.mxu0 0
    %725 = vmatpush1.bf16.xpose.msra.mxu0 0
    %726 = vmatprep.subr.bf16.mxu0 0
    %727 = vmatpush1.bf16.xpose.msra.mxu0 0
    %728 = vmatprep.subr.bf16.mxu0 0
    %729 = vmatpush1.bf16.xpose.msra.mxu0 0
    %730 = vmatprep.subr.bf16.mxu0 0
    %731 = vmatpush1.bf16.xpose.msra.mxu0 0
    %732 = vmatprep.subr.bf16.mxu0 0
    %733 = vmatpush1.bf16.xpose.msra.mxu0 0
    %734 = vmatprep.subr.bf16.mxu0 0
    %735 = vmatpush1.bf16.xpose.msra.mxu0 0
    %736 = vmatprep.subr.bf16.mxu0 0
    %737 = vmatpush1.bf16.xpose.msra.mxu0 0
    %738 = vmatprep.subr.bf16.mxu0 0
    %739 = vmatpush1.bf16.xpose.msra.mxu0 0
    %740 = vmatprep.subr.bf16.mxu0 0
    %741 = vmatpush1.bf16.xpose.msra.mxu0 0
    %742 = vmatprep.subr.bf16.mxu0 0
    %743 = vmatpush1.bf16.xpose.msra.mxu0 0
    %744 = vmatprep.mubr.bf16.mxu0 0
    %745 = vmatmul.mubr.bf16.gmra.mrb[0].mxu0 %v707
    %v746 = vpop.f32.mrb[0].mxu0
    %v747 = vadd.f32 %v354, %v746
    %v748 = vpop.f32.mrb[0].mxu0
    %v749 = vpop.f32.mrb[0].mxu0
    %v750 = vpop.f32.mrb[0].mxu0
    %751 = vdwg.mxu0
    %v752 = vsel %vm357, %v399, -inf
    %753 = vmax.xlane.f32.xlu0 %v752
    %v754 = vpop.xlane.xlu0 %753
    %v755 = vsel %vm357, %v447, -inf
    %756 = vmax.xlane.f32.xlu0 %v755
    %v757 = vpop.xlane.xlu0 %756
    %v758 = vsel %vm357, %v497, -inf
    %759 = vmax.xlane.f32.xlu0 %v758
    %v760 = vpop.xlane.xlu0 %759
    %v761 = vsel %vm357, %v547, -inf
    %762 = vmax.xlane.f32.xlu0 %v761
    %v763 = vpop.xlane.xlu0 %762
    %v764 = vsel %vm357, %v597, -inf
    %765 = vmax.xlane.f32.xlu0 %v764
    %v766 = vpop.xlane.xlu0 %765
    %v767 = vsel %vm357, %v647, -inf
    %768 = vmax.xlane.f32.xlu0 %v767
    %v769 = vpop.xlane.xlu0 %768
    %v770 = vsel %vm357, %v697, -inf
    %771 = vmax.xlane.f32.xlu0 %v770
    %v772 = vpop.xlane.xlu0 %771
    %v773 = vsel %vm357, %v747, -inf
    %774 = vmax.xlane.f32.xlu0 %v773
    %v775 = vpop.xlane.xlu0 %774
    %v776 = vsub.f32 %v399, %v754
    %v777 = vsub.f32 %v447, %v757
    %v778 = vsub.f32 %v497, %v760
    %v779 = vsub.f32 %v547, %v763
    %v780 = vsub.f32 %v597, %v766
    %v781 = vsub.f32 %v647, %v769
    %v782 = vsub.f32 %v697, %v772
    %v783 = vsub.f32 %v747, %v775
    %v784 = vmul.f32 %v776, 1.442695
    %v785 = vpow.pop %v784
    %v786 = vmul.f32 %v777, 1.442695
    %v787 = vpow.pop %v786
    %v788 = vmul.f32 %v778, 1.442695
    %v789 = vpow.pop %v788
    %v790 = vmul.f32 %v779, 1.442695
    %v791 = vpow.pop %v790
    %v792 = vmul.f32 %v780, 1.442695
    %v793 = vpow.pop %v792
    %v794 = vmul.f32 %v781, 1.442695
    %v795 = vpow.pop %v794
    %v796 = vmul.f32 %v782, 1.442695
    %v797 = vpow.pop %v796
    %v798 = vmul.f32 %v783, 1.442695
    %v799 = vpow.pop %v798
    %v800 = vsel %vm357, %v785, 0.0
    %801 = vadd.xlane.f32.xlu0 %v800
    %v802 = vpop.xlane.xlu0 %801
    %v803 = vsel %vm357, %v787, 0.0
    %804 = vadd.xlane.f32.xlu0 %v803
    %v805 = vpop.xlane.xlu0 %804
    %v806 = vsel %vm357, %v789, 0.0
    %807 = vadd.xlane.f32.xlu0 %v806
    %v808 = vpop.xlane.xlu0 %807
    %v809 = vsel %vm357, %v791, 0.0
    %810 = vadd.xlane.f32.xlu0 %v809
    %v811 = vpop.xlane.xlu0 %810
    %v812 = vsel %vm357, %v793, 0.0
    %813 = vadd.xlane.f32.xlu0 %v812
    %v814 = vpop.xlane.xlu0 %813
    %v815 = vsel %vm357, %v795, 0.0
    %816 = vadd.xlane.f32.xlu0 %v815
    %v817 = vpop.xlane.xlu0 %816
    %v818 = vsel %vm357, %v797, 0.0
    %819 = vadd.xlane.f32.xlu0 %v818
    %v820 = vpop.xlane.xlu0 %819
    %v821 = vsel %vm357, %v799, 0.0
    %822 = vadd.xlane.f32.xlu0 %v821
    %v823 = vpop.xlane.xlu0 %822
    %v824 = vrcp.pop %v802
    %v825 = vrcp.pop %v805
    %v826 = vrcp.pop %v808
    %v827 = vrcp.pop %v811
    %v828 = vrcp.pop %v814
    %v829 = vrcp.pop %v817
    %v830 = vrcp.pop %v820
    %v831 = vrcp.pop %v823
    %v832 = vmul.f32 %v785, %v824
    %v833 = vmul.f32 %v787, %v825
    %v834 = vmul.f32 %v789, %v826
    %v835 = vmul.f32 %v791, %v827
    %v836 = vmul.f32 %v793, %v828
    %v837 = vmul.f32 %v795, %v829
    %v838 = vmul.f32 %v797, %v830
    %v839 = vmul.f32 %v799, %v831
    %v840 = vpack.c.bf16 %v832, %v832
    %v841 = vpack.c.bf16 %v833, %v833
    %v842 = vpack.c.bf16 %v834, %v834
    %v843 = vpack.c.bf16 %v835, %v835
    %v844 = vpack.c.bf16 %v836, %v836
    %v845 = vpack.c.bf16 %v837, %v837
    %v846 = vpack.c.bf16 %v838, %v838
    %v847 = vpack.c.bf16 %v839, %v839
    %848 = vrot.lane.b32.xlu0 %v335, 64
    %v849 = vpop.permute.xlu0 %848
    %v851 = vsel %vm357, %v840, 0
    %vm853 = vcmask 1043456
    %v855 = vsel %vm853, %v849, 0
    %857 = vmatprep.subr.bf16.mxu0 0
    %858 = vmatpush1.bf16.msra.mxu0 %v855
    %859 = vmatprep.subr.bf16.mxu0 0
    %860 = vmatpush1.bf16.msra.mxu0 0
    %861 = vmatprep.subr.bf16.mxu0 0
    %862 = vmatpush1.bf16.msra.mxu0 0
    %863 = vmatprep.subr.bf16.mxu0 0
    %864 = vmatpush1.bf16.msra.mxu0 0
    %865 = vmatprep.subr.bf16.mxu0 0
    %866 = vmatpush1.bf16.msra.mxu0 0
    %867 = vmatprep.subr.bf16.mxu0 0
    %868 = vmatpush1.bf16.msra.mxu0 0
    %869 = vmatprep.subr.bf16.mxu0 0
    %870 = vmatpush1.bf16.msra.mxu0 0
    %871 = vmatprep.subr.bf16.mxu0 0
    %872 = vmatpush1.bf16.msra.mxu0 0
    %873 = vmatprep.subr.bf16.mxu0 0
    %874 = vmatpush1.bf16.msra.mxu0 0
    %875 = vmatprep.subr.bf16.mxu0 0
    %876 = vmatpush1.bf16.msra.mxu0 0
    %877 = vmatprep.subr.bf16.mxu0 0
    %878 = vmatpush1.bf16.msra.mxu0 0
    %879 = vmatprep.subr.bf16.mxu0 0
    %880 = vmatpush1.bf16.msra.mxu0 0
    %881 = vmatprep.subr.bf16.mxu0 0
    %882 = vmatpush1.bf16.msra.mxu0 0
    %883 = vmatprep.subr.bf16.mxu0 0
    %884 = vmatpush1.bf16.msra.mxu0 0
    %885 = vmatprep.subr.bf16.mxu0 0
    %886 = vmatpush1.bf16.msra.mxu0 0
    %887 = vmatprep.subr.bf16.mxu0 0
    %888 = vmatpush1.bf16.msra.mxu0 0
    %889 = vmatprep.mubr.bf16.mxu0 0
    %890 = vmatmul.mubr.bf16.gmra.mrb[0].mxu0 %v851
    %v891 = vpop.f32.mrb[0].mxu0
    %v892 = vadd.f32 0.0, %v891
    %v893 = vpop.f32.mrb[0].mxu0
    %v894 = vpop.f32.mrb[0].mxu0
    %v895 = vpop.f32.mrb[0].mxu0
    %896 = vdwg.mxu0
    %897 = vrot.lane.b32.xlu0 %v336, 64
    %v898 = vpop.permute.xlu0 %897
    %v900 = vsel %vm357, %v841, 0
    %v903 = vsel %vm853, %v898, 0
    %905 = vmatprep.subr.bf16.mxu0 0
    %906 = vmatpush1.bf16.msra.mxu0 %v903
    %907 = vmatprep.subr.bf16.mxu0 0
    %908 = vmatpush1.bf16.msra.mxu0 0
    %909 = vmatprep.subr.bf16.mxu0 0
    %910 = vmatpush1.bf16.msra.mxu0 0
    %911 = vmatprep.subr.bf16.mxu0 0
    %912 = vmatpush1.bf16.msra.mxu0 0
    %913 = vmatprep.subr.bf16.mxu0 0
    %914 = vmatpush1.bf16.msra.mxu0 0
    %915 = vmatprep.subr.bf16.mxu0 0
    %916 = vmatpush1.bf16.msra.mxu0 0
    %917 = vmatprep.subr.bf16.mxu0 0
    %918 = vmatpush1.bf16.msra.mxu0 0
    %919 = vmatprep.subr.bf16.mxu0 0
    %920 = vmatpush1.bf16.msra.mxu0 0
    %921 = vmatprep.subr.bf16.mxu0 0
    %922 = vmatpush1.bf16.msra.mxu0 0
    %923 = vmatprep.subr.bf16.mxu0 0
    %924 = vmatpush1.bf16.msra.mxu0 0
    %925 = vmatprep.subr.bf16.mxu0 0
    %926 = vmatpush1.bf16.msra.mxu0 0
    %927 = vmatprep.subr.bf16.mxu0 0
    %928 = vmatpush1.bf16.msra.mxu0 0
    %929 = vmatprep.subr.bf16.mxu0 0
    %930 = vmatpush1.bf16.msra.mxu0 0
    %931 = vmatprep.subr.bf16.mxu0 0
    %932 = vmatpush1.bf16.msra.mxu0 0
    %933 = vmatprep.subr.bf16.mxu0 0
    %934 = vmatpush1.bf16.msra.mxu0 0
    %935 = vmatprep.subr.bf16.mxu0 0
    %936 = vmatpush1.bf16.msra.mxu0 0
    %937 = vmatprep.mubr.bf16.mxu0 0
    %938 = vmatmul.mubr.bf16.gmra.mrb[0].mxu0 %v900
    %v939 = vpop.f32.mrb[0].mxu0
    %v940 = vadd.f32 0.0, %v939
    %v941 = vpop.f32.mrb[0].mxu0
    %v942 = vpop.f32.mrb[0].mxu0
    %v943 = vpop.f32.mrb[0].mxu0
    %944 = vdwg.mxu0
    %v945 = vunpack.c.l.b16 %v338
    %v946 = vpack.c.b16 %v945, %v945
    %947 = vrot.lane.b32.xlu0 %v946, 64
    %v948 = vpop.permute.xlu0 %947
    %v950 = vsel %vm357, %v842, 0
    %v953 = vsel %vm853, %v948, 0
    %955 = vmatprep.subr.bf16.mxu0 0
    %956 = vmatpush1.bf16.msra.mxu0 %v953
    %957 = vmatprep.subr.bf16.mxu0 0
    %958 = vmatpush1.bf16.msra.mxu0 0
    %959 = vmatprep.subr.bf16.mxu0 0
    %960 = vmatpush1.bf16.msra.mxu0 0
    %961 = vmatprep.subr.bf16.mxu0 0
    %962 = vmatpush1.bf16.msra.mxu0 0
    %963 = vmatprep.subr.bf16.mxu0 0
    %964 = vmatpush1.bf16.msra.mxu0 0
    %965 = vmatprep.subr.bf16.mxu0 0
    %966 = vmatpush1.bf16.msra.mxu0 0
    %967 = vmatprep.subr.bf16.mxu0 0
    %968 = vmatpush1.bf16.msra.mxu0 0
    %969 = vmatprep.subr.bf16.mxu0 0
    %970 = vmatpush1.bf16.msra.mxu0 0
    %971 = vmatprep.subr.bf16.mxu0 0
    %972 = vmatpush1.bf16.msra.mxu0 0
    %973 = vmatprep.subr.bf16.mxu0 0
    %974 = vmatpush1.bf16.msra.mxu0 0
    %975 = vmatprep.subr.bf16.mxu0 0
    %976 = vmatpush1.bf16.msra.mxu0 0
    %977 = vmatprep.subr.bf16.mxu0 0
    %978 = vmatpush1.bf16.msra.mxu0 0
    %979 = vmatprep.subr.bf16.mxu0 0
    %980 = vmatpush1.bf16.msra.mxu0 0
    %981 = vmatprep.subr.bf16.mxu0 0
    %982 = vmatpush1.bf16.msra.mxu0 0
    %983 = vmatprep.subr.bf16.mxu0 0
    %984 = vmatpush1.bf16.msra.mxu0 0
    %985 = vmatprep.subr.bf16.mxu0 0
    %986 = vmatpush1.bf16.msra.mxu0 0
    %987 = vmatprep.mubr.bf16.mxu0 0
    %988 = vmatmul.mubr.bf16.gmra.mrb[0].mxu0 %v950
    %v989 = vpop.f32.mrb[0].mxu0
    %v990 = vadd.f32 0.0, %v989
    %v991 = vpop.f32.mrb[0].mxu0
    %v992 = vpop.f32.mrb[0].mxu0
    %v993 = vpop.f32.mrb[0].mxu0
    %994 = vdwg.mxu0
    %v995 = vunpack.c.l.b16 %v340
    %v996 = vpack.c.b16 %v995, %v995
    %997 = vrot.lane.b32.xlu0 %v996, 64
    %v998 = vpop.permute.xlu0 %997
    %v1000 = vsel %vm357, %v843, 0
    %v1003 = vsel %vm853, %v998, 0
    %1005 = vmatprep.subr.bf16.mxu0 0
    %1006 = vmatpush1.bf16.msra.mxu0 %v1003
    %1007 = vmatprep.subr.bf16.mxu0 0
    %1008 = vmatpush1.bf16.msra.mxu0 0
    %1009 = vmatprep.subr.bf16.mxu0 0
    %1010 = vmatpush1.bf16.msra.mxu0 0
    %1011 = vmatprep.subr.bf16.mxu0 0
    %1012 = vmatpush1.bf16.msra.mxu0 0
    %1013 = vmatprep.subr.bf16.mxu0 0
    %1014 = vmatpush1.bf16.msra.mxu0 0
    %1015 = vmatprep.subr.bf16.mxu0 0
    %1016 = vmatpush1.bf16.msra.mxu0 0
    %1017 = vmatprep.subr.bf16.mxu0 0
    %1018 = vmatpush1.bf16.msra.mxu0 0
    %1019 = vmatprep.subr.bf16.mxu0 0
    %1020 = vmatpush1.bf16.msra.mxu0 0
    %1021 = vmatprep.subr.bf16.mxu0 0
    %1022 = vmatpush1.bf16.msra.mxu0 0
    %1023 = vmatprep.subr.bf16.mxu0 0
    %1024 = vmatpush1.bf16.msra.mxu0 0
    %1025 = vmatprep.subr.bf16.mxu0 0
    %1026 = vmatpush1.bf16.msra.mxu0 0
    %1027 = vmatprep.subr.bf16.mxu0 0
    %1028 = vmatpush1.bf16.msra.mxu0 0
    %1029 = vmatprep.subr.bf16.mxu0 0
    %1030 = vmatpush1.bf16.msra.mxu0 0
    %1031 = vmatprep.subr.bf16.mxu0 0
    %1032 = vmatpush1.bf16.msra.mxu0 0
    %1033 = vmatprep.subr.bf16.mxu0 0
    %1034 = vmatpush1.bf16.msra.mxu0 0
    %1035 = vmatprep.subr.bf16.mxu0 0
    %1036 = vmatpush1.bf16.msra.mxu0 0
    %1037 = vmatprep.mubr.bf16.mxu0 0
    %1038 = vmatmul.mubr.bf16.gmra.mrb[0].mxu0 %v1000
    %v1039 = vpop.f32.mrb[0].mxu0
    %v1040 = vadd.f32 0.0, %v1039
    %v1041 = vpop.f32.mrb[0].mxu0
    %v1042 = vpop.f32.mrb[0].mxu0
    %v1043 = vpop.f32.mrb[0].mxu0
    %1044 = vdwg.mxu0
    %v1045 = vunpack.c.l.b16 %v342
    %v1046 = vpack.c.b16 %v1045, %v1045
    %1047 = vrot.lane.b32.xlu0 %v1046, 64
    %v1048 = vpop.permute.xlu0 %1047
    %v1050 = vsel %vm357, %v844, 0
    %v1053 = vsel %vm853, %v1048, 0
    %1055 = vmatprep.subr.bf16.mxu0 0
    %1056 = vmatpush1.bf16.msra.mxu0 %v1053
    %1057 = vmatprep.subr.bf16.mxu0 0
    %1058 = vmatpush1.bf16.msra.mxu0 0
    %1059 = vmatprep.subr.bf16.mxu0 0
    %1060 = vmatpush1.bf16.msra.mxu0 0
    %1061 = vmatprep.subr.bf16.mxu0 0
    %1062 = vmatpush1.bf16.msra.mxu0 0
    %1063 = vmatprep.subr.bf16.mxu0 0
    %1064 = vmatpush1.bf16.msra.mxu0 0
    %1065 = vmatprep.subr.bf16.mxu0 0
    %1066 = vmatpush1.bf16.msra.mxu0 0
    %1067 = vmatprep.subr.bf16.mxu0 0
    %1068 = vmatpush1.bf16.msra.mxu0 0
    %1069 = vmatprep.subr.bf16.mxu0 0
    %1070 = vmatpush1.bf16.msra.mxu0 0
    %1071 = vmatprep.subr.bf16.mxu0 0
    %1072 = vmatpush1.bf16.msra.mxu0 0
    %1073 = vmatprep.subr.bf16.mxu0 0
    %1074 = vmatpush1.bf16.msra.mxu0 0
    %1075 = vmatprep.subr.bf16.mxu0 0
    %1076 = vmatpush1.bf16.msra.mxu0 0
    %1077 = vmatprep.subr.bf16.mxu0 0
    %1078 = vmatpush1.bf16.msra.mxu0 0
    %1079 = vmatprep.subr.bf16.mxu0 0
    %1080 = vmatpush1.bf16.msra.mxu0 0
    %1081 = vmatprep.subr.bf16.mxu0 0
    %1082 = vmatpush1.bf16.msra.mxu0 0
    %1083 = vmatprep.subr.bf16.mxu0 0
    %1084 = vmatpush1.bf16.msra.mxu0 0
    %1085 = vmatprep.subr.bf16.mxu0 0
    %1086 = vmatpush1.bf16.msra.mxu0 0
    %1087 = vmatprep.mubr.bf16.mxu0 0
    %1088 = vmatmul.mubr.bf16.gmra.mrb[0].mxu0 %v1050
    %v1089 = vpop.f32.mrb[0].mxu0
    %v1090 = vadd.f32 0.0, %v1089
    %v1091 = vpop.f32.mrb[0].mxu0
    %v1092 = vpop.f32.mrb[0].mxu0
    %v1093 = vpop.f32.mrb[0].mxu0
    %1094 = vdwg.mxu0
    %v1095 = vunpack.c.l.b16 %v344
    %v1096 = vpack.c.b16 %v1095, %v1095
    %1097 = vrot.lane.b32.xlu0 %v1096, 64
    %v1098 = vpop.permute.xlu0 %1097
    %v1100 = vsel %vm357, %v845, 0
    %v1103 = vsel %vm853, %v1098, 0
    %1105 = vmatprep.subr.bf16.mxu0 0
    %1106 = vmatpush1.bf16.msra.mxu0 %v1103
    %1107 = vmatprep.subr.bf16.mxu0 0
    %1108 = vmatpush1.bf16.msra.mxu0 0
    %1109 = vmatprep.subr.bf16.mxu0 0
    %1110 = vmatpush1.bf16.msra.mxu0 0
    %1111 = vmatprep.subr.bf16.mxu0 0
    %1112 = vmatpush1.bf16.msra.mxu0 0
    %1113 = vmatprep.subr.bf16.mxu0 0
    %1114 = vmatpush1.bf16.msra.mxu0 0
    %1115 = vmatprep.subr.bf16.mxu0 0
    %1116 = vmatpush1.bf16.msra.mxu0 0
    %1117 = vmatprep.subr.bf16.mxu0 0
    %1118 = vmatpush1.bf16.msra.mxu0 0
    %1119 = vmatprep.subr.bf16.mxu0 0
    %1120 = vmatpush1.bf16.msra.mxu0 0
    %1121 = vmatprep.subr.bf16.mxu0 0
    %1122 = vmatpush1.bf16.msra.mxu0 0
    %1123 = vmatprep.subr.bf16.mxu0 0
    %1124 = vmatpush1.bf16.msra.mxu0 0
    %1125 = vmatprep.subr.bf16.mxu0 0
    %1126 = vmatpush1.bf16.msra.mxu0 0
    %1127 = vmatprep.subr.bf16.mxu0 0
    %1128 = vmatpush1.bf16.msra.mxu0 0
    %1129 = vmatprep.subr.bf16.mxu0 0
    %1130 = vmatpush1.bf16.msra.mxu0 0
    %1131 = vmatprep.subr.bf16.mxu0 0
    %1132 = vmatpush1.bf16.msra.mxu0 0
    %1133 = vmatprep.subr.bf16.mxu0 0
    %1134 = vmatpush1.bf16.msra.mxu0 0
    %1135 = vmatprep.subr.bf16.mxu0 0
    %1136 = vmatpush1.bf16.msra.mxu0 0
    %1137 = vmatprep.mubr.bf16.mxu0 0
    %1138 = vmatmul.mubr.bf16.gmra.mrb[0].mxu0 %v1100
    %v1139 = vpop.f32.mrb[0].mxu0
    %v1140 = vadd.f32 0.0, %v1139
    %v1141 = vpop.f32.mrb[0].mxu0
    %v1142 = vpop.f32.mrb[0].mxu0
    %v1143 = vpop.f32.mrb[0].mxu0
    %1144 = vdwg.mxu0
    %v1145 = vunpack.c.l.b16 %v346
    %v1146 = vpack.c.b16 %v1145, %v1145
    %1147 = vrot.lane.b32.xlu0 %v1146, 64
    %v1148 = vpop.permute.xlu0 %1147
    %v1150 = vsel %vm357, %v846, 0
    %v1153 = vsel %vm853, %v1148, 0
    %1155 = vmatprep.subr.bf16.mxu0 0
    %1156 = vmatpush1.bf16.msra.mxu0 %v1153
    %1157 = vmatprep.subr.bf16.mxu0 0
    %1158 = vmatpush1.bf16.msra.mxu0 0
    %1159 = vmatprep.subr.bf16.mxu0 0
    %1160 = vmatpush1.bf16.msra.mxu0 0
    %1161 = vmatprep.subr.bf16.mxu0 0
    %1162 = vmatpush1.bf16.msra.mxu0 0
    %1163 = vmatprep.subr.bf16.mxu0 0
    %1164 = vmatpush1.bf16.msra.mxu0 0
    %1165 = vmatprep.subr.bf16.mxu0 0
    %1166 = vmatpush1.bf16.msra.mxu0 0
    %1167 = vmatprep.subr.bf16.mxu0 0
    %1168 = vmatpush1.bf16.msra.mxu0 0
    %1169 = vmatprep.subr.bf16.mxu0 0
    %1170 = vmatpush1.bf16.msra.mxu0 0
    %1171 = vmatprep.subr.bf16.mxu0 0
    %1172 = vmatpush1.bf16.msra.mxu0 0
    %1173 = vmatprep.subr.bf16.mxu0 0
    %1174 = vmatpush1.bf16.msra.mxu0 0
    %1175 = vmatprep.subr.bf16.mxu0 0
    %1176 = vmatpush1.bf16.msra.mxu0 0
    %1177 = vmatprep.subr.bf16.mxu0 0
    %1178 = vmatpush1.bf16.msra.mxu0 0
    %1179 = vmatprep.subr.bf16.mxu0 0
    %1180 = vmatpush1.bf16.msra.mxu0 0
    %1181 = vmatprep.subr.bf16.mxu0 0
    %1182 = vmatpush1.bf16.msra.mxu0 0
    %1183 = vmatprep.subr.bf16.mxu0 0
    %1184 = vmatpush1.bf16.msra.mxu0 0
    %1185 = vmatprep.subr.bf16.mxu0 0
    %1186 = vmatpush1.bf16.msra.mxu0 0
    %1187 = vmatprep.mubr.bf16.mxu0 0
    %1188 = vmatmul.mubr.bf16.gmra.mrb[0].mxu0 %v1150
    %v1189 = vpop.f32.mrb[0].mxu0
    %v1190 = vadd.f32 0.0, %v1189
    %v1191 = vpop.f32.mrb[0].mxu0
    %v1192 = vpop.f32.mrb[0].mxu0
    %v1193 = vpop.f32.mrb[0].mxu0
    %1194 = vdwg.mxu0
    %v1195 = vunpack.c.l.b16 %v348
    %v1196 = vpack.c.b16 %v1195, %v1195
    %1197 = vrot.lane.b32.xlu0 %v1196, 64
    %v1198 = vpop.permute.xlu0 %1197
    %v1200 = vsel %vm357, %v847, 0
    %v1203 = vsel %vm853, %v1198, 0
    %1205 = vmatprep.subr.bf16.mxu0 0
    %1206 = vmatpush1.bf16.msra.mxu0 %v1203
    %1207 = vmatprep.subr.bf16.mxu0 0
    %1208 = vmatpush1.bf16.msra.mxu0 0
    %1209 = vmatprep.subr.bf16.mxu0 0
    %1210 = vmatpush1.bf16.msra.mxu0 0
    %1211 = vmatprep.subr.bf16.mxu0 0
    %1212 = vmatpush1.bf16.msra.mxu0 0
    %1213 = vmatprep.subr.bf16.mxu0 0
    %1214 = vmatpush1.bf16.msra.mxu0 0
    %1215 = vmatprep.subr.bf16.mxu0 0
    %1216 = vmatpush1.bf16.msra.mxu0 0
    %1217 = vmatprep.subr.bf16.mxu0 0
    %1218 = vmatpush1.bf16.msra.mxu0 0
    %1219 = vmatprep.subr.bf16.mxu0 0
    %1220 = vmatpush1.bf16.msra.mxu0 0
    %1221 = vmatprep.subr.bf16.mxu0 0
    %1222 = vmatpush1.bf16.msra.mxu0 0
    %1223 = vmatprep.subr.bf16.mxu0 0
    %1224 = vmatpush1.bf16.msra.mxu0 0
    %1225 = vmatprep.subr.bf16.mxu0 0
    %1226 = vmatpush1.bf16.msra.mxu0 0
    %1227 = vmatprep.subr.bf16.mxu0 0
    %1228 = vmatpush1.bf16.msra.mxu0 0
    %1229 = vmatprep.subr.bf16.mxu0 0
    %1230 = vmatpush1.bf16.msra.mxu0 0
    %1231 = vmatprep.subr.bf16.mxu0 0
    %1232 = vmatpush1.bf16.msra.mxu0 0
    %1233 = vmatprep.subr.bf16.mxu0 0
    %1234 = vmatpush1.bf16.msra.mxu0 0
    %1235 = vmatprep.subr.bf16.mxu0 0
    %1236 = vmatpush1.bf16.msra.mxu0 0
    %1237 = vmatprep.mubr.bf16.mxu0 0
    %1238 = vmatmul.mubr.bf16.gmra.mrb[0].mxu0 %v1200
    %v1239 = vpop.f32.mrb[0].mxu0
    %v1240 = vadd.f32 0.0, %v1239
    %v1241 = vpop.f32.mrb[0].mxu0
    %v1242 = vpop.f32.mrb[0].mxu0
    %v1243 = vpop.f32.mrb[0].mxu0
    %1244 = vdwg.mxu0
    %v1245 = vpack.c.bf16 %v892, %v892
    %v1246 = vpack.c.bf16 %v940, %v940
    %v1247 = vpack.c.bf16 %v990, %v990
    %v1248 = vpack.c.bf16 %v1040, %v1040
    %v1249 = vpack.c.bf16 %v1090, %v1090
    %v1250 = vpack.c.bf16 %v1140, %v1140
    %v1251 = vpack.c.bf16 %v1190, %v1190
    %v1252 = vpack.c.bf16 %v1240, %v1240
    %v1255 = vunpack.c.l.b16 %v1245
    %v1256 = vunpack.c.l.b16 %v1246
    %v1257 = vpack.c.b16 %v1256, %v1255
    %v1260 = vunpack.c.l.b16 %v1247
    %v1261 = vunpack.c.l.b16 %v1248
    %v1262 = vpack.c.b16 %v1261, %v1260
    %1263 = vrot.lane.b32.xlu0 %v1262, 8
    %v1264 = vpop.permute.xlu0 %1263
    %v1267 = vunpack.c.l.b16 %v1249
    %v1268 = vunpack.c.l.b16 %v1250
    %v1269 = vpack.c.b16 %v1268, %v1267
    %1270 = vrot.lane.b32.xlu0 %v1269, 16
    %v1271 = vpop.permute.xlu0 %1270
    %v1274 = vunpack.c.l.b16 %v1251
    %v1275 = vunpack.c.l.b16 %v1252
    %v1276 = vpack.c.b16 %v1275, %v1274
    %1277 = vrot.lane.b32.xlu0 %v1276, 24
    %v1278 = vpop.permute.xlu0 %1277
    %v1281 = vsel %vm357, %v1257, %v1264
    %vm1282 = vcmask 130048
    %v1284 = vsel %vm1282, %v1281, %v1271
    %vm1285 = vcmask 195584
    %v1287 = vsel %vm1285, %v1284, %v1278
    %v1288 = vlaneseq
    %v1289 = vshrl.u32 %v1288, 7
    %v1290 = vsub.s32 3, %v1289
    %v1291 = vrot.slane %v160, %v1290
    %v1296 = vunpack.c.l.b16 %v131
    %v1297 = vunpack.c.l.b16 %v132
    %v1298 = vunpack.c.l.b16 %v133
    %v1299 = vunpack.c.l.b16 %v134
    %v1300 = vpack.c.b16 %v1297, %v1296
    %v1301 = vpack.c.b16 %v1299, %v1298
    %v1304 = vsel %vm170, %v1287, 0
    %1306 = vmatprep.subr.bf16.mxu0 0
    %1307 = vmatpush1.bf16.msra.mxu0 %v1300
    %1308 = vmatprep.subr.bf16.mxu0 0
    %1309 = vmatpush1.bf16.msra.mxu0 %v1301
    %1310 = vmatprep.subr.bf16.mxu0 0
    %1311 = vmatpush1.bf16.msra.mxu0 0
    %1312 = vmatprep.subr.bf16.mxu0 0
    %1313 = vmatpush1.bf16.msra.mxu0 0
    %1314 = vmatprep.subr.bf16.mxu0 0
    %1315 = vmatpush1.bf16.msra.mxu0 0
    %1316 = vmatprep.subr.bf16.mxu0 0
    %1317 = vmatpush1.bf16.msra.mxu0 0
    %1318 = vmatprep.subr.bf16.mxu0 0
    %1319 = vmatpush1.bf16.msra.mxu0 0
    %1320 = vmatprep.subr.bf16.mxu0 0
    %1321 = vmatpush1.bf16.msra.mxu0 0
    %1322 = vmatprep.subr.bf16.mxu0 0
    %1323 = vmatpush1.bf16.msra.mxu0 0
    %1324 = vmatprep.subr.bf16.mxu0 0
    %1325 = vmatpush1.bf16.msra.mxu0 0
    %1326 = vmatprep.subr.bf16.mxu0 0
    %1327 = vmatpush1.bf16.msra.mxu0 0
    %1328 = vmatprep.subr.bf16.mxu0 0
    %1329 = vmatpush1.bf16.msra.mxu0 0
    %1330 = vmatprep.subr.bf16.mxu0 0
    %1331 = vmatpush1.bf16.msra.mxu0 0
    %1332 = vmatprep.subr.bf16.mxu0 0
    %1333 = vmatpush1.bf16.msra.mxu0 0
    %1334 = vmatprep.subr.bf16.mxu0 0
    %1335 = vmatpush1.bf16.msra.mxu0 0
    %1336 = vmatprep.subr.bf16.mxu0 0
    %1337 = vmatpush1.bf16.msra.mxu0 0
    %1338 = vmatprep.mubr.bf16.mxu0 0
    %1339 = vmatmul.mubr.bf16.gmra.mrb[0].mxu0 %v1304
    %v1340 = vpop.f32.mrb[0].mxu0
    %v1341 = vadd.f32 %v1291, %v1340
    %v1342 = vpop.f32.mrb[0].mxu0
    %v1343 = vpop.f32.mrb[0].mxu0
    %v1344 = vadd.f32 %v1291, %v1343
    %v1345 = vpop.f32.mrb[0].mxu0
    %1346 = vdwg.mxu0
    %v1347 = vadd.f32 %v164, %v1341
    %v1348 = vadd.f32 %v165, %v1344
    %v1349 = vsel %vm170, %v1347, 0.0
    %1350 = vadd.xlane.f32.xlu0 %v1349
    %v1351 = vpop.xlane.xlu0 %1350
    %v1352 = vsel %vm170, %v1348, 0.0
    %1353 = vadd.xlane.f32.xlu0 %v1352
    %v1354 = vpop.xlane.xlu0 %1353
    %v1355 = vmul.f32 %v1351, %v177
    %v1356 = vmul.f32 %v1354, %v177
    %v1357 = vsub.f32 %v1347, %v1355
    %v1358 = vsub.f32 %v1348, %v1356
    %v1359 = vmul.f32 %v1357, %v1357
    %v1360 = vmul.f32 %v1358, %v1358
    %v1361 = vsel %vm170, %v1359, 0.0
    %1362 = vadd.xlane.f32.xlu0 %v1361
    %v1363 = vpop.xlane.xlu0 %1362
    %v1364 = vsel %vm170, %v1360, 0.0
    %1365 = vadd.xlane.f32.xlu0 %v1364
    %v1366 = vpop.xlane.xlu0 %1365
    %v1367 = vmul.f32 %v1363, %v177
    %v1368 = vmul.f32 %v1366, %v177
    %v1369 = vadd.f32 %v1367, 1e-05
    %v1370 = vadd.f32 %v1368, 1e-05
    %v1371 = vrsqrt.pop %v1369
    %v1372 = vrsqrt.pop %v1370
    %v1373 = vmul.f32 %v1357, %v1371
    %v1374 = vmul.f32 %v1358, %v1372
    %v1375 = vlaneseq
    %v1376 = vshrl.u32 %v1375, 7
    %v1377 = vsub.s32 3, %v1376
    %v1378 = vrot.slane %v161, %v1377
    %v1379 = vmul.f32 %v1373, %v1378
    %v1380 = vmul.f32 %v1374, %v1378
    %v1381 = vlaneseq
    %v1382 = vshrl.u32 %v1381, 7
    %v1383 = vsub.s32 4, %v1382
    %v1384 = vrot.slane %v161, %v1383
    %v1385 = vadd.f32 %v1379, %v1384
    %v1386 = vadd.f32 %v1380, %v1384
    %v1387 = vpack.c.bf16 %v1386, %v1385
    %v1388 = vpack.c.bf16 %v169, %v168
    %v1389 = vlaneseq
    %v1390 = vshrl.u32 %v1389, 7
    %v1391 = vsub.s32 4, %v1390
    %v1392 = vrot.slane %v160, %v1391
    %v1397 = vunpack.c.l.b16 %v135
    %v1398 = vunpack.c.l.b16 %v136
    %v1399 = vunpack.c.l.b16 %v137
    %v1400 = vunpack.c.l.b16 %v138
    %v1401 = vpack.c.b16 %v1398, %v1397
    %v1402 = vpack.c.b16 %v1400, %v1399
    %v1406 = vsel %vm170, %v1387, 0
    %1408 = vmatprep.subr.bf16.mxu0 0
    %1409 = vmatpush1.bf16.msra.mxu0 %v1401
    %1410 = vmatprep.subr.bf16.mxu0 0
    %1411 = vmatpush1.bf16.msra.mxu0 %v1402
    %1412 = vmatprep.subr.bf16.mxu0 0
    %1413 = vmatpush1.bf16.msra.mxu0 0
    %1414 = vmatprep.subr.bf16.mxu0 0
    %1415 = vmatpush1.bf16.msra.mxu0 0
    %1416 = vmatprep.subr.bf16.mxu0 0
    %1417 = vmatpush1.bf16.msra.mxu0 0
    %1418 = vmatprep.subr.bf16.mxu0 0
    %1419 = vmatpush1.bf16.msra.mxu0 0
    %1420 = vmatprep.subr.bf16.mxu0 0
    %1421 = vmatpush1.bf16.msra.mxu0 0
    %1422 = vmatprep.subr.bf16.mxu0 0
    %1423 = vmatpush1.bf16.msra.mxu0 0
    %1424 = vmatprep.subr.bf16.mxu0 0
    %1425 = vmatpush1.bf16.msra.mxu0 0
    %1426 = vmatprep.subr.bf16.mxu0 0
    %1427 = vmatpush1.bf16.msra.mxu0 0
    %1428 = vmatprep.subr.bf16.mxu0 0
    %1429 = vmatpush1.bf16.msra.mxu0 0
    %1430 = vmatprep.subr.bf16.mxu0 0
    %1431 = vmatpush1.bf16.msra.mxu0 0
    %1432 = vmatprep.subr.bf16.mxu0 0
    %1433 = vmatpush1.bf16.msra.mxu0 0
    %1434 = vmatprep.subr.bf16.mxu0 0
    %1435 = vmatpush1.bf16.msra.mxu0 0
    %1436 = vmatprep.subr.bf16.mxu0 0
    %1437 = vmatpush1.bf16.msra.mxu0 0
    %1438 = vmatprep.subr.bf16.mxu0 0
    %1439 = vmatpush1.bf16.msra.mxu0 0
    %1440 = vmatprep.mubr.bf16.mxu0 0
    %1441 = vmatmul.mubr.bf16.gmra.mrb[0].mxu0 %v1406
    %v1442 = vpop.f32.mrb[0].mxu0
    %v1443 = vadd.f32 %v1392, %v1442
    %v1444 = vpop.f32.mrb[0].mxu0
    %v1445 = vpop.f32.mrb[0].mxu0
    %v1446 = vadd.f32 %v1392, %v1445
    %v1447 = vpop.f32.mrb[0].mxu0
    %1448 = vdwg.mxu0
    %v1453 = vunpack.c.l.b16 %v139
    %v1454 = vunpack.c.l.b16 %v140
    %v1455 = vunpack.c.l.b16 %v141
    %v1456 = vunpack.c.l.b16 %v142
    %v1457 = vpack.c.b16 %v1454, %v1453
    %v1458 = vpack.c.b16 %v1456, %v1455
    %v1462 = vsel %vm170, %v1388, 0
    %1464 = vmatprep.subr.bf16.mxu0 0
    %1465 = vmatpush1.bf16.msra.mxu0 %v1457
    %1466 = vmatprep.subr.bf16.mxu0 0
    %1467 = vmatpush1.bf16.msra.mxu0 %v1458
    %1468 = vmatprep.subr.bf16.mxu0 0
    %1469 = vmatpush1.bf16.msra.mxu0 0
    %1470 = vmatprep.subr.bf16.mxu0 0
    %1471 = vmatpush1.bf16.msra.mxu0 0
    %1472 = vmatprep.subr.bf16.mxu0 0
    %1473 = vmatpush1.bf16.msra.mxu0 0
    %1474 = vmatprep.subr.bf16.mxu0 0
    %1475 = vmatpush1.bf16.msra.mxu0 0
    %1476 = vmatprep.subr.bf16.mxu0 0
    %1477 = vmatpush1.bf16.msra.mxu0 0
    %1478 = vmatprep.subr.bf16.mxu0 0
    %1479 = vmatpush1.bf16.msra.mxu0 0
    %1480 = vmatprep.subr.bf16.mxu0 0
    %1481 = vmatpush1.bf16.msra.mxu0 0
    %1482 = vmatprep.subr.bf16.mxu0 0
    %1483 = vmatpush1.bf16.msra.mxu0 0
    %1484 = vmatprep.subr.bf16.mxu0 0
    %1485 = vmatpush1.bf16.msra.mxu0 0
    %1486 = vmatprep.subr.bf16.mxu0 0
    %1487 = vmatpush1.bf16.msra.mxu0 0
    %1488 = vmatprep.subr.bf16.mxu0 0
    %1489 = vmatpush1.bf16.msra.mxu0 0
    %1490 = vmatprep.subr.bf16.mxu0 0
    %1491 = vmatpush1.bf16.msra.mxu0 0
    %1492 = vmatprep.subr.bf16.mxu0 0
    %1493 = vmatpush1.bf16.msra.mxu0 0
    %1494 = vmatprep.subr.bf16.mxu0 0
    %1495 = vmatpush1.bf16.msra.mxu0 0
    %1496 = vmatprep.mubr.bf16.mxu0 0
    %1497 = vmatmul.mubr.bf16.gmra.mrb[0].mxu0 %v1462
    %v1498 = vpop.f32.mrb[0].mxu0
    %v1499 = vadd.f32 0.0, %v1498
    %v1500 = vpop.f32.mrb[0].mxu0
    %v1501 = vpop.f32.mrb[0].mxu0
    %v1502 = vadd.f32 0.0, %v1501
    %v1503 = vpop.f32.mrb[0].mxu0
    %1504 = vdwg.mxu0
    %v1505 = vlaneseq
    %v1506 = vshrl.u32 %v1505, 7
    %v1507 = vsub.s32 5, %v1506
    %v1508 = vrot.slane %v160, %v1507
    %v1509 = vadd.f32 %v1499, %v1508
    %v1510 = vadd.f32 %v1502, %v1508
    %v1511 = vlaneseq
    %v1512 = vshrl.u32 %v1511, 7
    %v1513 = vsub.s32 6, %v1512
    %v1514 = vrot.slane %v160, %v1513
    %1516 = vrot.lane.b32.xlu0 %v1514, 32
    %v1517 = vpop.permute.xlu0 %1516
    %v1519 = vadd.f32 %v1499, %v1517
    %v1520 = vadd.f32 %v1502, %v1517
    %v1521 = vmul.f32 %v1443, 0.35355338
    %v1522 = vmul.f32 %v1446, 0.35355338
    %v1523 = vpack.c.bf16 %v1522, %v1521
    %v1525 = vunpack.c.l.b16 %v1523
    %v1526 = vunpack.c.h.b16 %v1523
    %v1527 = vpack.c.b16 %v1525, %v1525
    %v1528 = vpack.c.b16 %v1526, %v1526
    %1529 = vrot.lane.b32.xlu0 %v1527, 120
    %v1530 = vpop.permute.xlu0 %1529
    %1531 = vrot.lane.b32.xlu0 %v1528, 120
    %v1532 = vpop.permute.xlu0 %1531
    %1533 = vrot.lane.b32.xlu0 %v1527, 112
    %v1534 = vpop.permute.xlu0 %1533
    %1535 = vrot.lane.b32.xlu0 %v1528, 112
    %v1536 = vpop.permute.xlu0 %1535
    %1537 = vrot.lane.b32.xlu0 %v1527, 104
    %v1538 = vpop.permute.xlu0 %1537
    %1539 = vrot.lane.b32.xlu0 %v1528, 104
    %v1540 = vpop.permute.xlu0 %1539
    %v1541 = vpack.c.bf16 %v1510, %v1509
    %v1543 = vunpack.c.l.b16 %v1541
    %v1544 = vunpack.c.h.b16 %v1541
    %v1545 = vpack.c.b16 %v1543, %v1543
    %v1546 = vpack.c.b16 %v1544, %v1544
    %1547 = vrot.lane.b32.xlu0 %v1545, 120
    %v1548 = vpop.permute.xlu0 %1547
    %1549 = vrot.lane.b32.xlu0 %v1546, 120
    %v1550 = vpop.permute.xlu0 %1549
    %1551 = vrot.lane.b32.xlu0 %v1545, 112
    %v1552 = vpop.permute.xlu0 %1551
    %1553 = vrot.lane.b32.xlu0 %v1546, 112
    %v1554 = vpop.permute.xlu0 %1553
    %1555 = vrot.lane.b32.xlu0 %v1545, 104
    %v1556 = vpop.permute.xlu0 %1555
    %1557 = vrot.lane.b32.xlu0 %v1546, 104
    %v1558 = vpop.permute.xlu0 %1557
    %v1559 = vpack.c.bf16 %v1520, %v1519
    %v1561 = vunpack.c.l.b16 %v1559
    %v1562 = vunpack.c.h.b16 %v1559
    %v1563 = vpack.c.b16 %v1561, %v1561
    %v1564 = vpack.c.b16 %v1562, %v1562
    %1565 = vrot.lane.b32.xlu0 %v1563, 120
    %v1566 = vpop.permute.xlu0 %1565
    %1567 = vrot.lane.b32.xlu0 %v1564, 120
    %v1568 = vpop.permute.xlu0 %1567
    %1569 = vrot.lane.b32.xlu0 %v1563, 112
    %v1570 = vpop.permute.xlu0 %1569
    %1571 = vrot.lane.b32.xlu0 %v1564, 112
    %v1572 = vpop.permute.xlu0 %1571
    %1573 = vrot.lane.b32.xlu0 %v1563, 104
    %v1574 = vpop.permute.xlu0 %1573
    %1575 = vrot.lane.b32.xlu0 %v1564, 104
    %v1576 = vpop.permute.xlu0 %1575
    %v1577 = vunpack.c.l.bf16 %v125
    %v1578 = vunpack.c.l.bf16 %v126
    %v1580 = vsel %vm357, %v1527, 0
    %v1583 = vsel %vm357, %v1545, 0
    %1585 = vmatprep.subr.bf16.mxu0 0
    %1586 = vmatpush1.bf16.xpose.msra.mxu0 %v1583
    %1587 = vmatprep.subr.bf16.mxu0 0
    %1588 = vmatpush1.bf16.xpose.msra.mxu0 0
    %1589 = vmatprep.subr.bf16.mxu0 0
    %1590 = vmatpush1.bf16.xpose.msra.mxu0 0
    %1591 = vmatprep.subr.bf16.mxu0 0
    %1592 = vmatpush1.bf16.xpose.msra.mxu0 0
    %1593 = vmatprep.subr.bf16.mxu0 0
    %1594 = vmatpush1.bf16.xpose.msra.mxu0 0
    %1595 = vmatprep.subr.bf16.mxu0 0
    %1596 = vmatpush1.bf16.xpose.msra.mxu0 0
    %1597 = vmatprep.subr.bf16.mxu0 0
    %1598 = vmatpush1.bf16.xpose.msra.mxu0 0
    %1599 = vmatprep.subr.bf16.mxu0 0
    %1600 = vmatpush1.bf16.xpose.msra.mxu0 0
    %1601 = vmatprep.subr.bf16.mxu0 0
    %1602 = vmatpush1.bf16.xpose.msra.mxu0 0
    %1603 = vmatprep.subr.bf16.mxu0 0
    %1604 = vmatpush1.bf16.xpose.msra.mxu0 0
    %1605 = vmatprep.subr.bf16.mxu0 0
    %1606 = vmatpush1.bf16.xpose.msra.mxu0 0
    %1607 = vmatprep.subr.bf16.mxu0 0
    %1608 = vmatpush1.bf16.xpose.msra.mxu0 0
    %1609 = vmatprep.subr.bf16.mxu0 0
    %1610 = vmatpush1.bf16.xpose.msra.mxu0 0
    %1611 = vmatprep.subr.bf16.mxu0 0
    %1612 = vmatpush1.bf16.xpose.msra.mxu0 0
    %1613 = vmatprep.subr.bf16.mxu0 0
    %1614 = vmatpush1.bf16.xpose.msra.mxu0 0
    %1615 = vmatprep.subr.bf16.mxu0 0
    %1616 = vmatpush1.bf16.xpose.msra.mxu0 0
    %1617 = vmatprep.mubr.bf16.mxu0 0
    %1618 = vmatmul.mubr.bf16.gmra.mrb[0].mxu0 %v1580
    %v1619 = vpop.f32.mrb[0].mxu0
    %v1620 = vadd.f32 %v1577, %v1619
    %v1621 = vpop.f32.mrb[0].mxu0
    %v1622 = vpop.f32.mrb[0].mxu0
    %v1623 = vpop.f32.mrb[0].mxu0
    %1624 = vdwg.mxu0
    %v1626 = vsel %vm357, %v1528, 0
    %v1629 = vsel %vm357, %v1546, 0
    %1631 = vmatprep.subr.bf16.mxu0 0
    %1632 = vmatpush1.bf16.xpose.msra.mxu0 %v1629
    %1633 = vmatprep.subr.bf16.mxu0 0
    %1634 = vmatpush1.bf16.xpose.msra.mxu0 0
    %1635 = vmatprep.subr.bf16.mxu0 0
    %1636 = vmatpush1.bf16.xpose.msra.mxu0 0
    %1637 = vmatprep.subr.bf16.mxu0 0
    %1638 = vmatpush1.bf16.xpose.msra.mxu0 0
    %1639 = vmatprep.subr.bf16.mxu0 0
    %1640 = vmatpush1.bf16.xpose.msra.mxu0 0
    %1641 = vmatprep.subr.bf16.mxu0 0
    %1642 = vmatpush1.bf16.xpose.msra.mxu0 0
    %1643 = vmatprep.subr.bf16.mxu0 0
    %1644 = vmatpush1.bf16.xpose.msra.mxu0 0
    %1645 = vmatprep.subr.bf16.mxu0 0
    %1646 = vmatpush1.bf16.xpose.msra.mxu0 0
    %1647 = vmatprep.subr.bf16.mxu0 0
    %1648 = vmatpush1.bf16.xpose.msra.mxu0 0
    %1649 = vmatprep.subr.bf16.mxu0 0
    %1650 = vmatpush1.bf16.xpose.msra.mxu0 0
    %1651 = vmatprep.subr.bf16.mxu0 0
    %1652 = vmatpush1.bf16.xpose.msra.mxu0 0
    %1653 = vmatprep.subr.bf16.mxu0 0
    %1654 = vmatpush1.bf16.xpose.msra.mxu0 0
    %1655 = vmatprep.subr.bf16.mxu0 0
    %1656 = vmatpush1.bf16.xpose.msra.mxu0 0
    %1657 = vmatprep.subr.bf16.mxu0 0
    %1658 = vmatpush1.bf16.xpose.msra.mxu0 0
    %1659 = vmatprep.subr.bf16.mxu0 0
    %1660 = vmatpush1.bf16.xpose.msra.mxu0 0
    %1661 = vmatprep.subr.bf16.mxu0 0
    %1662 = vmatpush1.bf16.xpose.msra.mxu0 0
    %1663 = vmatprep.mubr.bf16.mxu0 0
    %1664 = vmatmul.mubr.bf16.gmra.mrb[0].mxu0 %v1626
    %v1665 = vpop.f32.mrb[0].mxu0
    %v1666 = vadd.f32 %v1578, %v1665
    %v1667 = vpop.f32.mrb[0].mxu0
    %v1668 = vpop.f32.mrb[0].mxu0
    %v1669 = vpop.f32.mrb[0].mxu0
    %1670 = vdwg.mxu0
    %v1672 = vsel %vm357, %v1530, 0
    %v1675 = vsel %vm357, %v1548, 0
    %1677 = vmatprep.subr.bf16.mxu0 0
    %1678 = vmatpush1.bf16.xpose.msra.mxu0 %v1675
    %1679 = vmatprep.subr.bf16.mxu0 0
    %1680 = vmatpush1.bf16.xpose.msra.mxu0 0
    %1681 = vmatprep.subr.bf16.mxu0 0
    %1682 = vmatpush1.bf16.xpose.msra.mxu0 0
    %1683 = vmatprep.subr.bf16.mxu0 0
    %1684 = vmatpush1.bf16.xpose.msra.mxu0 0
    %1685 = vmatprep.subr.bf16.mxu0 0
    %1686 = vmatpush1.bf16.xpose.msra.mxu0 0
    %1687 = vmatprep.subr.bf16.mxu0 0
    %1688 = vmatpush1.bf16.xpose.msra.mxu0 0
    %1689 = vmatprep.subr.bf16.mxu0 0
    %1690 = vmatpush1.bf16.xpose.msra.mxu0 0
    %1691 = vmatprep.subr.bf16.mxu0 0
    %1692 = vmatpush1.bf16.xpose.msra.mxu0 0
    %1693 = vmatprep.subr.bf16.mxu0 0
    %1694 = vmatpush1.bf16.xpose.msra.mxu0 0
    %1695 = vmatprep.subr.bf16.mxu0 0
    %1696 = vmatpush1.bf16.xpose.msra.mxu0 0
    %1697 = vmatprep.subr.bf16.mxu0 0
    %1698 = vmatpush1.bf16.xpose.msra.mxu0 0
    %1699 = vmatprep.subr.bf16.mxu0 0
    %1700 = vmatpush1.bf16.xpose.msra.mxu0 0
    %1701 = vmatprep.subr.bf16.mxu0 0
    %1702 = vmatpush1.bf16.xpose.msra.mxu0 0
    %1703 = vmatprep.subr.bf16.mxu0 0
    %1704 = vmatpush1.bf16.xpose.msra.mxu0 0
    %1705 = vmatprep.subr.bf16.mxu0 0
    %1706 = vmatpush1.bf16.xpose.msra.mxu0 0
    %1707 = vmatprep.subr.bf16.mxu0 0
    %1708 = vmatpush1.bf16.xpose.msra.mxu0 0
    %1709 = vmatprep.mubr.bf16.mxu0 0
    %1710 = vmatmul.mubr.bf16.gmra.mrb[0].mxu0 %v1672
    %v1711 = vpop.f32.mrb[0].mxu0
    %v1712 = vadd.f32 %v1577, %v1711
    %v1713 = vpop.f32.mrb[0].mxu0
    %v1714 = vpop.f32.mrb[0].mxu0
    %v1715 = vpop.f32.mrb[0].mxu0
    %1716 = vdwg.mxu0
    %v1718 = vsel %vm357, %v1532, 0
    %v1721 = vsel %vm357, %v1550, 0
    %1723 = vmatprep.subr.bf16.mxu0 0
    %1724 = vmatpush1.bf16.xpose.msra.mxu0 %v1721
    %1725 = vmatprep.subr.bf16.mxu0 0
    %1726 = vmatpush1.bf16.xpose.msra.mxu0 0
    %1727 = vmatprep.subr.bf16.mxu0 0
    %1728 = vmatpush1.bf16.xpose.msra.mxu0 0
    %1729 = vmatprep.subr.bf16.mxu0 0
    %1730 = vmatpush1.bf16.xpose.msra.mxu0 0
    %1731 = vmatprep.subr.bf16.mxu0 0
    %1732 = vmatpush1.bf16.xpose.msra.mxu0 0
    %1733 = vmatprep.subr.bf16.mxu0 0
    %1734 = vmatpush1.bf16.xpose.msra.mxu0 0
    %1735 = vmatprep.subr.bf16.mxu0 0
    %1736 = vmatpush1.bf16.xpose.msra.mxu0 0
    %1737 = vmatprep.subr.bf16.mxu0 0
    %1738 = vmatpush1.bf16.xpose.msra.mxu0 0
    %1739 = vmatprep.subr.bf16.mxu0 0
    %1740 = vmatpush1.bf16.xpose.msra.mxu0 0
    %1741 = vmatprep.subr.bf16.mxu0 0
    %1742 = vmatpush1.bf16.xpose.msra.mxu0 0
    %1743 = vmatprep.subr.bf16.mxu0 0
    %1744 = vmatpush1.bf16.xpose.msra.mxu0 0
    %1745 = vmatprep.subr.bf16.mxu0 0
    %1746 = vmatpush1.bf16.xpose.msra.mxu0 0
    %1747 = vmatprep.subr.bf16.mxu0 0
    %1748 = vmatpush1.bf16.xpose.msra.mxu0 0
    %1749 = vmatprep.subr.bf16.mxu0 0
    %1750 = vmatpush1.bf16.xpose.msra.mxu0 0
    %1751 = vmatprep.subr.bf16.mxu0 0
    %1752 = vmatpush1.bf16.xpose.msra.mxu0 0
    %1753 = vmatprep.subr.bf16.mxu0 0
    %1754 = vmatpush1.bf16.xpose.msra.mxu0 0
    %1755 = vmatprep.mubr.bf16.mxu0 0
    %1756 = vmatmul.mubr.bf16.gmra.mrb[0].mxu0 %v1718
    %v1757 = vpop.f32.mrb[0].mxu0
    %v1758 = vadd.f32 %v1578, %v1757
    %v1759 = vpop.f32.mrb[0].mxu0
    %v1760 = vpop.f32.mrb[0].mxu0
    %v1761 = vpop.f32.mrb[0].mxu0
    %1762 = vdwg.mxu0
    %v1764 = vsel %vm357, %v1534, 0
    %v1767 = vsel %vm357, %v1552, 0
    %1769 = vmatprep.subr.bf16.mxu0 0
    %1770 = vmatpush1.bf16.xpose.msra.mxu0 %v1767
    %1771 = vmatprep.subr.bf16.mxu0 0
    %1772 = vmatpush1.bf16.xpose.msra.mxu0 0
    %1773 = vmatprep.subr.bf16.mxu0 0
    %1774 = vmatpush1.bf16.xpose.msra.mxu0 0
    %1775 = vmatprep.subr.bf16.mxu0 0
    %1776 = vmatpush1.bf16.xpose.msra.mxu0 0
    %1777 = vmatprep.subr.bf16.mxu0 0
    %1778 = vmatpush1.bf16.xpose.msra.mxu0 0
    %1779 = vmatprep.subr.bf16.mxu0 0
    %1780 = vmatpush1.bf16.xpose.msra.mxu0 0
    %1781 = vmatprep.subr.bf16.mxu0 0
    %1782 = vmatpush1.bf16.xpose.msra.mxu0 0
    %1783 = vmatprep.subr.bf16.mxu0 0
    %1784 = vmatpush1.bf16.xpose.msra.mxu0 0
    %1785 = vmatprep.subr.bf16.mxu0 0
    %1786 = vmatpush1.bf16.xpose.msra.mxu0 0
    %1787 = vmatprep.subr.bf16.mxu0 0
    %1788 = vmatpush1.bf16.xpose.msra.mxu0 0
    %1789 = vmatprep.subr.bf16.mxu0 0
    %1790 = vmatpush1.bf16.xpose.msra.mxu0 0
    %1791 = vmatprep.subr.bf16.mxu0 0
    %1792 = vmatpush1.bf16.xpose.msra.mxu0 0
    %1793 = vmatprep.subr.bf16.mxu0 0
    %1794 = vmatpush1.bf16.xpose.msra.mxu0 0
    %1795 = vmatprep.subr.bf16.mxu0 0
    %1796 = vmatpush1.bf16.xpose.msra.mxu0 0
    %1797 = vmatprep.subr.bf16.mxu0 0
    %1798 = vmatpush1.bf16.xpose.msra.mxu0 0
    %1799 = vmatprep.subr.bf16.mxu0 0
    %1800 = vmatpush1.bf16.xpose.msra.mxu0 0
    %1801 = vmatprep.mubr.bf16.mxu0 0
    %1802 = vmatmul.mubr.bf16.gmra.mrb[0].mxu0 %v1764
    %v1803 = vpop.f32.mrb[0].mxu0
    %v1804 = vadd.f32 %v1577, %v1803
    %v1805 = vpop.f32.mrb[0].mxu0
    %v1806 = vpop.f32.mrb[0].mxu0
    %v1807 = vpop.f32.mrb[0].mxu0
    %1808 = vdwg.mxu0
    %v1810 = vsel %vm357, %v1536, 0
    %v1813 = vsel %vm357, %v1554, 0
    %1815 = vmatprep.subr.bf16.mxu0 0
    %1816 = vmatpush1.bf16.xpose.msra.mxu0 %v1813
    %1817 = vmatprep.subr.bf16.mxu0 0
    %1818 = vmatpush1.bf16.xpose.msra.mxu0 0
    %1819 = vmatprep.subr.bf16.mxu0 0
    %1820 = vmatpush1.bf16.xpose.msra.mxu0 0
    %1821 = vmatprep.subr.bf16.mxu0 0
    %1822 = vmatpush1.bf16.xpose.msra.mxu0 0
    %1823 = vmatprep.subr.bf16.mxu0 0
    %1824 = vmatpush1.bf16.xpose.msra.mxu0 0
    %1825 = vmatprep.subr.bf16.mxu0 0
    %1826 = vmatpush1.bf16.xpose.msra.mxu0 0
    %1827 = vmatprep.subr.bf16.mxu0 0
    %1828 = vmatpush1.bf16.xpose.msra.mxu0 0
    %1829 = vmatprep.subr.bf16.mxu0 0
    %1830 = vmatpush1.bf16.xpose.msra.mxu0 0
    %1831 = vmatprep.subr.bf16.mxu0 0
    %1832 = vmatpush1.bf16.xpose.msra.mxu0 0
    %1833 = vmatprep.subr.bf16.mxu0 0
    %1834 = vmatpush1.bf16.xpose.msra.mxu0 0
    %1835 = vmatprep.subr.bf16.mxu0 0
    %1836 = vmatpush1.bf16.xpose.msra.mxu0 0
    %1837 = vmatprep.subr.bf16.mxu0 0
    %1838 = vmatpush1.bf16.xpose.msra.mxu0 0
    %1839 = vmatprep.subr.bf16.mxu0 0
    %1840 = vmatpush1.bf16.xpose.msra.mxu0 0
    %1841 = vmatprep.subr.bf16.mxu0 0
    %1842 = vmatpush1.bf16.xpose.msra.mxu0 0
    %1843 = vmatprep.subr.bf16.mxu0 0
    %1844 = vmatpush1.bf16.xpose.msra.mxu0 0
    %1845 = vmatprep.subr.bf16.mxu0 0
    %1846 = vmatpush1.bf16.xpose.msra.mxu0 0
    %1847 = vmatprep.mubr.bf16.mxu0 0
    %1848 = vmatmul.mubr.bf16.gmra.mrb[0].mxu0 %v1810
    %v1849 = vpop.f32.mrb[0].mxu0
    %v1850 = vadd.f32 %v1578, %v1849
    %v1851 = vpop.f32.mrb[0].mxu0
    %v1852 = vpop.f32.mrb[0].mxu0
    %v1853 = vpop.f32.mrb[0].mxu0
    %1854 = vdwg.mxu0
    %v1856 = vsel %vm357, %v1538, 0
    %v1859 = vsel %vm357, %v1556, 0
    %1861 = vmatprep.subr.bf16.mxu0 0
    %1862 = vmatpush1.bf16.xpose.msra.mxu0 %v1859
    %1863 = vmatprep.subr.bf16.mxu0 0
    %1864 = vmatpush1.bf16.xpose.msra.mxu0 0
    %1865 = vmatprep.subr.bf16.mxu0 0
    %1866 = vmatpush1.bf16.xpose.msra.mxu0 0
    %1867 = vmatprep.subr.bf16.mxu0 0
    %1868 = vmatpush1.bf16.xpose.msra.mxu0 0
    %1869 = vmatprep.subr.bf16.mxu0 0
    %1870 = vmatpush1.bf16.xpose.msra.mxu0 0
    %1871 = vmatprep.subr.bf16.mxu0 0
    %1872 = vmatpush1.bf16.xpose.msra.mxu0 0
    %1873 = vmatprep.subr.bf16.mxu0 0
    %1874 = vmatpush1.bf16.xpose.msra.mxu0 0
    %1875 = vmatprep.subr.bf16.mxu0 0
    %1876 = vmatpush1.bf16.xpose.msra.mxu0 0
    %1877 = vmatprep.subr.bf16.mxu0 0
    %1878 = vmatpush1.bf16.xpose.msra.mxu0 0
    %1879 = vmatprep.subr.bf16.mxu0 0
    %1880 = vmatpush1.bf16.xpose.msra.mxu0 0
    %1881 = vmatprep.subr.bf16.mxu0 0
    %1882 = vmatpush1.bf16.xpose.msra.mxu0 0
    %1883 = vmatprep.subr.bf16.mxu0 0
    %1884 = vmatpush1.bf16.xpose.msra.mxu0 0
    %1885 = vmatprep.subr.bf16.mxu0 0
    %1886 = vmatpush1.bf16.xpose.msra.mxu0 0
    %1887 = vmatprep.subr.bf16.mxu0 0
    %1888 = vmatpush1.bf16.xpose.msra.mxu0 0
    %1889 = vmatprep.subr.bf16.mxu0 0
    %1890 = vmatpush1.bf16.xpose.msra.mxu0 0
    %1891 = vmatprep.subr.bf16.mxu0 0
    %1892 = vmatpush1.bf16.xpose.msra.mxu0 0
    %1893 = vmatprep.mubr.bf16.mxu0 0
    %1894 = vmatmul.mubr.bf16.gmra.mrb[0].mxu0 %v1856
    %v1895 = vpop.f32.mrb[0].mxu0
    %v1896 = vadd.f32 %v1577, %v1895
    %v1897 = vpop.f32.mrb[0].mxu0
    %v1898 = vpop.f32.mrb[0].mxu0
    %v1899 = vpop.f32.mrb[0].mxu0
    %1900 = vdwg.mxu0
    %v1902 = vsel %vm357, %v1540, 0
    %v1905 = vsel %vm357, %v1558, 0
    %1907 = vmatprep.subr.bf16.mxu0 0
    %1908 = vmatpush1.bf16.xpose.msra.mxu0 %v1905
    %1909 = vmatprep.subr.bf16.mxu0 0
    %1910 = vmatpush1.bf16.xpose.msra.mxu0 0
    %1911 = vmatprep.subr.bf16.mxu0 0
    %1912 = vmatpush1.bf16.xpose.msra.mxu0 0
    %1913 = vmatprep.subr.bf16.mxu0 0
    %1914 = vmatpush1.bf16.xpose.msra.mxu0 0
    %1915 = vmatprep.subr.bf16.mxu0 0
    %1916 = vmatpush1.bf16.xpose.msra.mxu0 0
    %1917 = vmatprep.subr.bf16.mxu0 0
    %1918 = vmatpush1.bf16.xpose.msra.mxu0 0
    %1919 = vmatprep.subr.bf16.mxu0 0
    %1920 = vmatpush1.bf16.xpose.msra.mxu0 0
    %1921 = vmatprep.subr.bf16.mxu0 0
    %1922 = vmatpush1.bf16.xpose.msra.mxu0 0
    %1923 = vmatprep.subr.bf16.mxu0 0
    %1924 = vmatpush1.bf16.xpose.msra.mxu0 0
    %1925 = vmatprep.subr.bf16.mxu0 0
    %1926 = vmatpush1.bf16.xpose.msra.mxu0 0
    %1927 = vmatprep.subr.bf16.mxu0 0
    %1928 = vmatpush1.bf16.xpose.msra.mxu0 0
    %1929 = vmatprep.subr.bf16.mxu0 0
    %1930 = vmatpush1.bf16.xpose.msra.mxu0 0
    %1931 = vmatprep.subr.bf16.mxu0 0
    %1932 = vmatpush1.bf16.xpose.msra.mxu0 0
    %1933 = vmatprep.subr.bf16.mxu0 0
    %1934 = vmatpush1.bf16.xpose.msra.mxu0 0
    %1935 = vmatprep.subr.bf16.mxu0 0
    %1936 = vmatpush1.bf16.xpose.msra.mxu0 0
    %1937 = vmatprep.subr.bf16.mxu0 0
    %1938 = vmatpush1.bf16.xpose.msra.mxu0 0
    %1939 = vmatprep.mubr.bf16.mxu0 0
    %1940 = vmatmul.mubr.bf16.gmra.mrb[0].mxu0 %v1902
    %v1941 = vpop.f32.mrb[0].mxu0
    %v1942 = vadd.f32 %v1578, %v1941
    %v1943 = vpop.f32.mrb[0].mxu0
    %v1944 = vpop.f32.mrb[0].mxu0
    %v1945 = vpop.f32.mrb[0].mxu0
    %1946 = vdwg.mxu0
    %v1947 = vsel %vm357, %v1620, -inf
    %1948 = vmax.xlane.f32.xlu0 %v1947
    %v1949 = vpop.xlane.xlu0 %1948
    %v1950 = vsel %vm357, %v1666, -inf
    %1951 = vmax.xlane.f32.xlu0 %v1950
    %v1952 = vpop.xlane.xlu0 %1951
    %v1953 = vsel %vm357, %v1712, -inf
    %1954 = vmax.xlane.f32.xlu0 %v1953
    %v1955 = vpop.xlane.xlu0 %1954
    %v1956 = vsel %vm357, %v1758, -inf
    %1957 = vmax.xlane.f32.xlu0 %v1956
    %v1958 = vpop.xlane.xlu0 %1957
    %v1959 = vsel %vm357, %v1804, -inf
    %1960 = vmax.xlane.f32.xlu0 %v1959
    %v1961 = vpop.xlane.xlu0 %1960
    %v1962 = vsel %vm357, %v1850, -inf
    %1963 = vmax.xlane.f32.xlu0 %v1962
    %v1964 = vpop.xlane.xlu0 %1963
    %v1965 = vsel %vm357, %v1896, -inf
    %1966 = vmax.xlane.f32.xlu0 %v1965
    %v1967 = vpop.xlane.xlu0 %1966
    %v1968 = vsel %vm357, %v1942, -inf
    %1969 = vmax.xlane.f32.xlu0 %v1968
    %v1970 = vpop.xlane.xlu0 %1969
    %v1971 = vsub.f32 %v1620, %v1949
    %v1972 = vsub.f32 %v1666, %v1952
    %v1973 = vsub.f32 %v1712, %v1955
    %v1974 = vsub.f32 %v1758, %v1958
    %v1975 = vsub.f32 %v1804, %v1961
    %v1976 = vsub.f32 %v1850, %v1964
    %v1977 = vsub.f32 %v1896, %v1967
    %v1978 = vsub.f32 %v1942, %v1970
    %v1979 = vmul.f32 %v1971, 1.442695
    %v1980 = vpow.pop %v1979
    %v1981 = vmul.f32 %v1972, 1.442695
    %v1982 = vpow.pop %v1981
    %v1983 = vmul.f32 %v1973, 1.442695
    %v1984 = vpow.pop %v1983
    %v1985 = vmul.f32 %v1974, 1.442695
    %v1986 = vpow.pop %v1985
    %v1987 = vmul.f32 %v1975, 1.442695
    %v1988 = vpow.pop %v1987
    %v1989 = vmul.f32 %v1976, 1.442695
    %v1990 = vpow.pop %v1989
    %v1991 = vmul.f32 %v1977, 1.442695
    %v1992 = vpow.pop %v1991
    %v1993 = vmul.f32 %v1978, 1.442695
    %v1994 = vpow.pop %v1993
    %v1995 = vsel %vm357, %v1980, 0.0
    %1996 = vadd.xlane.f32.xlu0 %v1995
    %v1997 = vpop.xlane.xlu0 %1996
    %v1998 = vsel %vm357, %v1982, 0.0
    %1999 = vadd.xlane.f32.xlu0 %v1998
    %v2000 = vpop.xlane.xlu0 %1999
    %v2001 = vsel %vm357, %v1984, 0.0
    %2002 = vadd.xlane.f32.xlu0 %v2001
    %v2003 = vpop.xlane.xlu0 %2002
    %v2004 = vsel %vm357, %v1986, 0.0
    %2005 = vadd.xlane.f32.xlu0 %v2004
    %v2006 = vpop.xlane.xlu0 %2005
    %v2007 = vsel %vm357, %v1988, 0.0
    %2008 = vadd.xlane.f32.xlu0 %v2007
    %v2009 = vpop.xlane.xlu0 %2008
    %v2010 = vsel %vm357, %v1990, 0.0
    %2011 = vadd.xlane.f32.xlu0 %v2010
    %v2012 = vpop.xlane.xlu0 %2011
    %v2013 = vsel %vm357, %v1992, 0.0
    %2014 = vadd.xlane.f32.xlu0 %v2013
    %v2015 = vpop.xlane.xlu0 %2014
    %v2016 = vsel %vm357, %v1994, 0.0
    %2017 = vadd.xlane.f32.xlu0 %v2016
    %v2018 = vpop.xlane.xlu0 %2017
    %v2019 = vrcp.pop %v1997
    %v2020 = vrcp.pop %v2000
    %v2021 = vrcp.pop %v2003
    %v2022 = vrcp.pop %v2006
    %v2023 = vrcp.pop %v2009
    %v2024 = vrcp.pop %v2012
    %v2025 = vrcp.pop %v2015
    %v2026 = vrcp.pop %v2018
    %v2027 = vmul.f32 %v1980, %v2019
    %v2028 = vmul.f32 %v1982, %v2020
    %v2029 = vmul.f32 %v1984, %v2021
    %v2030 = vmul.f32 %v1986, %v2022
    %v2031 = vmul.f32 %v1988, %v2023
    %v2032 = vmul.f32 %v1990, %v2024
    %v2033 = vmul.f32 %v1992, %v2025
    %v2034 = vmul.f32 %v1994, %v2026
    %v2035 = vpack.c.bf16 %v2027, %v2027
    %v2036 = vpack.c.bf16 %v2028, %v2028
    %v2037 = vpack.c.bf16 %v2029, %v2029
    %v2038 = vpack.c.bf16 %v2030, %v2030
    %v2039 = vpack.c.bf16 %v2031, %v2031
    %v2040 = vpack.c.bf16 %v2032, %v2032
    %v2041 = vpack.c.bf16 %v2033, %v2033
    %v2042 = vpack.c.bf16 %v2034, %v2034
    %2043 = vrot.lane.b32.xlu0 %v1563, 96
    %v2044 = vpop.permute.xlu0 %2043
    %v2046 = vsel %vm357, %v2035, 0
    %v2049 = vsel %vm853, %v2044, 0
    %2051 = vmatprep.subr.bf16.mxu0 0
    %2052 = vmatpush1.bf16.msra.mxu0 %v2049
    %2053 = vmatprep.subr.bf16.mxu0 0
    %2054 = vmatpush1.bf16.msra.mxu0 0
    %2055 = vmatprep.subr.bf16.mxu0 0
    %2056 = vmatpush1.bf16.msra.mxu0 0
    %2057 = vmatprep.subr.bf16.mxu0 0
    %2058 = vmatpush1.bf16.msra.mxu0 0
    %2059 = vmatprep.subr.bf16.mxu0 0
    %2060 = vmatpush1.bf16.msra.mxu0 0
    %2061 = vmatprep.subr.bf16.mxu0 0
    %2062 = vmatpush1.bf16.msra.mxu0 0
    %2063 = vmatprep.subr.bf16.mxu0 0
    %2064 = vmatpush1.bf16.msra.mxu0 0
    %2065 = vmatprep.subr.bf16.mxu0 0
    %2066 = vmatpush1.bf16.msra.mxu0 0
    %2067 = vmatprep.subr.bf16.mxu0 0
    %2068 = vmatpush1.bf16.msra.mxu0 0
    %2069 = vmatprep.subr.bf16.mxu0 0
    %2070 = vmatpush1.bf16.msra.mxu0 0
    %2071 = vmatprep.subr.bf16.mxu0 0
    %2072 = vmatpush1.bf16.msra.mxu0 0
    %2073 = vmatprep.subr.bf16.mxu0 0
    %2074 = vmatpush1.bf16.msra.mxu0 0
    %2075 = vmatprep.subr.bf16.mxu0 0
    %2076 = vmatpush1.bf16.msra.mxu0 0
    %2077 = vmatprep.subr.bf16.mxu0 0
    %2078 = vmatpush1.bf16.msra.mxu0 0
    %2079 = vmatprep.subr.bf16.mxu0 0
    %2080 = vmatpush1.bf16.msra.mxu0 0
    %2081 = vmatprep.subr.bf16.mxu0 0
    %2082 = vmatpush1.bf16.msra.mxu0 0
    %2083 = vmatprep.mubr.bf16.mxu0 0
    %2084 = vmatmul.mubr.bf16.gmra.mrb[0].mxu0 %v2046
    %v2085 = vpop.f32.mrb[0].mxu0
    %v2086 = vadd.f32 0.0, %v2085
    %v2087 = vpop.f32.mrb[0].mxu0
    %v2088 = vpop.f32.mrb[0].mxu0
    %v2089 = vpop.f32.mrb[0].mxu0
    %2090 = vdwg.mxu0
    %2091 = vrot.lane.b32.xlu0 %v1564, 96
    %v2092 = vpop.permute.xlu0 %2091
    %v2094 = vsel %vm357, %v2036, 0
    %v2097 = vsel %vm853, %v2092, 0
    %2099 = vmatprep.subr.bf16.mxu0 0
    %2100 = vmatpush1.bf16.msra.mxu0 %v2097
    %2101 = vmatprep.subr.bf16.mxu0 0
    %2102 = vmatpush1.bf16.msra.mxu0 0
    %2103 = vmatprep.subr.bf16.mxu0 0
    %2104 = vmatpush1.bf16.msra.mxu0 0
    %2105 = vmatprep.subr.bf16.mxu0 0
    %2106 = vmatpush1.bf16.msra.mxu0 0
    %2107 = vmatprep.subr.bf16.mxu0 0
    %2108 = vmatpush1.bf16.msra.mxu0 0
    %2109 = vmatprep.subr.bf16.mxu0 0
    %2110 = vmatpush1.bf16.msra.mxu0 0
    %2111 = vmatprep.subr.bf16.mxu0 0
    %2112 = vmatpush1.bf16.msra.mxu0 0
    %2113 = vmatprep.subr.bf16.mxu0 0
    %2114 = vmatpush1.bf16.msra.mxu0 0
    %2115 = vmatprep.subr.bf16.mxu0 0
    %2116 = vmatpush1.bf16.msra.mxu0 0
    %2117 = vmatprep.subr.bf16.mxu0 0
    %2118 = vmatpush1.bf16.msra.mxu0 0
    %2119 = vmatprep.subr.bf16.mxu0 0
    %2120 = vmatpush1.bf16.msra.mxu0 0
    %2121 = vmatprep.subr.bf16.mxu0 0
    %2122 = vmatpush1.bf16.msra.mxu0 0
    %2123 = vmatprep.subr.bf16.mxu0 0
    %2124 = vmatpush1.bf16.msra.mxu0 0
    %2125 = vmatprep.subr.bf16.mxu0 0
    %2126 = vmatpush1.bf16.msra.mxu0 0
    %2127 = vmatprep.subr.bf16.mxu0 0
    %2128 = vmatpush1.bf16.msra.mxu0 0
    %2129 = vmatprep.subr.bf16.mxu0 0
    %2130 = vmatpush1.bf16.msra.mxu0 0
    %2131 = vmatprep.mubr.bf16.mxu0 0
    %2132 = vmatmul.mubr.bf16.gmra.mrb[0].mxu0 %v2094
    %v2133 = vpop.f32.mrb[0].mxu0
    %v2134 = vadd.f32 0.0, %v2133
    %v2135 = vpop.f32.mrb[0].mxu0
    %v2136 = vpop.f32.mrb[0].mxu0
    %v2137 = vpop.f32.mrb[0].mxu0
    %2138 = vdwg.mxu0
    %v2139 = vunpack.c.l.b16 %v1566
    %v2140 = vpack.c.b16 %v2139, %v2139
    %2141 = vrot.lane.b32.xlu0 %v2140, 96
    %v2142 = vpop.permute.xlu0 %2141
    %v2144 = vsel %vm357, %v2037, 0
    %v2147 = vsel %vm853, %v2142, 0
    %2149 = vmatprep.subr.bf16.mxu0 0
    %2150 = vmatpush1.bf16.msra.mxu0 %v2147
    %2151 = vmatprep.subr.bf16.mxu0 0
    %2152 = vmatpush1.bf16.msra.mxu0 0
    %2153 = vmatprep.subr.bf16.mxu0 0
    %2154 = vmatpush1.bf16.msra.mxu0 0
    %2155 = vmatprep.subr.bf16.mxu0 0
    %2156 = vmatpush1.bf16.msra.mxu0 0
    %2157 = vmatprep.subr.bf16.mxu0 0
    %2158 = vmatpush1.bf16.msra.mxu0 0
    %2159 = vmatprep.subr.bf16.mxu0 0
    %2160 = vmatpush1.bf16.msra.mxu0 0
    %2161 = vmatprep.subr.bf16.mxu0 0
    %2162 = vmatpush1.bf16.msra.mxu0 0
    %2163 = vmatprep.subr.bf16.mxu0 0
    %2164 = vmatpush1.bf16.msra.mxu0 0
    %2165 = vmatprep.subr.bf16.mxu0 0
    %2166 = vmatpush1.bf16.msra.mxu0 0
    %2167 = vmatprep.subr.bf16.mxu0 0
    %2168 = vmatpush1.bf16.msra.mxu0 0
    %2169 = vmatprep.subr.bf16.mxu0 0
    %2170 = vmatpush1.bf16.msra.mxu0 0
    %2171 = vmatprep.subr.bf16.mxu0 0
    %2172 = vmatpush1.bf16.msra.mxu0 0
    %2173 = vmatprep.subr.bf16.mxu0 0
    %2174 = vmatpush1.bf16.msra.mxu0 0
    %2175 = vmatprep.subr.bf16.mxu0 0
    %2176 = vmatpush1.bf16.msra.mxu0 0
    %2177 = vmatprep.subr.bf16.mxu0 0
    %2178 = vmatpush1.bf16.msra.mxu0 0
    %2179 = vmatprep.subr.bf16.mxu0 0
    %2180 = vmatpush1.bf16.msra.mxu0 0
    %2181 = vmatprep.mubr.bf16.mxu0 0
    %2182 = vmatmul.mubr.bf16.gmra.mrb[0].mxu0 %v2144
    %v2183 = vpop.f32.mrb[0].mxu0
    %v2184 = vadd.f32 0.0, %v2183
    %v2185 = vpop.f32.mrb[0].mxu0
    %v2186 = vpop.f32.mrb[0].mxu0
    %v2187 = vpop.f32.mrb[0].mxu0
    %2188 = vdwg.mxu0
    %v2189 = vunpack.c.l.b16 %v1568
    %v2190 = vpack.c.b16 %v2189, %v2189
    %2191 = vrot.lane.b32.xlu0 %v2190, 96
    %v2192 = vpop.permute.xlu0 %2191
    %v2194 = vsel %vm357, %v2038, 0
    %v2197 = vsel %vm853, %v2192, 0
    %2199 = vmatprep.subr.bf16.mxu0 0
    %2200 = vmatpush1.bf16.msra.mxu0 %v2197
    %2201 = vmatprep.subr.bf16.mxu0 0
    %2202 = vmatpush1.bf16.msra.mxu0 0
    %2203 = vmatprep.subr.bf16.mxu0 0
    %2204 = vmatpush1.bf16.msra.mxu0 0
    %2205 = vmatprep.subr.bf16.mxu0 0
    %2206 = vmatpush1.bf16.msra.mxu0 0
    %2207 = vmatprep.subr.bf16.mxu0 0
    %2208 = vmatpush1.bf16.msra.mxu0 0
    %2209 = vmatprep.subr.bf16.mxu0 0
    %2210 = vmatpush1.bf16.msra.mxu0 0
    %2211 = vmatprep.subr.bf16.mxu0 0
    %2212 = vmatpush1.bf16.msra.mxu0 0
    %2213 = vmatprep.subr.bf16.mxu0 0
    %2214 = vmatpush1.bf16.msra.mxu0 0
    %2215 = vmatprep.subr.bf16.mxu0 0
    %2216 = vmatpush1.bf16.msra.mxu0 0
    %2217 = vmatprep.subr.bf16.mxu0 0
    %2218 = vmatpush1.bf16.msra.mxu0 0
    %2219 = vmatprep.subr.bf16.mxu0 0
    %2220 = vmatpush1.bf16.msra.mxu0 0
    %2221 = vmatprep.subr.bf16.mxu0 0
    %2222 = vmatpush1.bf16.msra.mxu0 0
    %2223 = vmatprep.subr.bf16.mxu0 0
    %2224 = vmatpush1.bf16.msra.mxu0 0
    %2225 = vmatprep.subr.bf16.mxu0 0
    %2226 = vmatpush1.bf16.msra.mxu0 0
    %2227 = vmatprep.subr.bf16.mxu0 0
    %2228 = vmatpush1.bf16.msra.mxu0 0
    %2229 = vmatprep.subr.bf16.mxu0 0
    %2230 = vmatpush1.bf16.msra.mxu0 0
    %2231 = vmatprep.mubr.bf16.mxu0 0
    %2232 = vmatmul.mubr.bf16.gmra.mrb[0].mxu0 %v2194
    %v2233 = vpop.f32.mrb[0].mxu0
    %v2234 = vadd.f32 0.0, %v2233
    %v2235 = vpop.f32.mrb[0].mxu0
    %v2236 = vpop.f32.mrb[0].mxu0
    %v2237 = vpop.f32.mrb[0].mxu0
    %2238 = vdwg.mxu0
    %v2239 = vunpack.c.l.b16 %v1570
    %v2240 = vpack.c.b16 %v2239, %v2239
    %2241 = vrot.lane.b32.xlu0 %v2240, 96
    %v2242 = vpop.permute.xlu0 %2241
    %v2244 = vsel %vm357, %v2039, 0
    %v2247 = vsel %vm853, %v2242, 0
    %2249 = vmatprep.subr.bf16.mxu0 0
    %2250 = vmatpush1.bf16.msra.mxu0 %v2247
    %2251 = vmatprep.subr.bf16.mxu0 0
    %2252 = vmatpush1.bf16.msra.mxu0 0
    %2253 = vmatprep.subr.bf16.mxu0 0
    %2254 = vmatpush1.bf16.msra.mxu0 0
    %2255 = vmatprep.subr.bf16.mxu0 0
    %2256 = vmatpush1.bf16.msra.mxu0 0
    %2257 = vmatprep.subr.bf16.mxu0 0
    %2258 = vmatpush1.bf16.msra.mxu0 0
    %2259 = vmatprep.subr.bf16.mxu0 0
    %2260 = vmatpush1.bf16.msra.mxu0 0
    %2261 = vmatprep.subr.bf16.mxu0 0
    %2262 = vmatpush1.bf16.msra.mxu0 0
    %2263 = vmatprep.subr.bf16.mxu0 0
    %2264 = vmatpush1.bf16.msra.mxu0 0
    %2265 = vmatprep.subr.bf16.mxu0 0
    %2266 = vmatpush1.bf16.msra.mxu0 0
    %2267 = vmatprep.subr.bf16.mxu0 0
    %2268 = vmatpush1.bf16.msra.mxu0 0
    %2269 = vmatprep.subr.bf16.mxu0 0
    %2270 = vmatpush1.bf16.msra.mxu0 0
    %2271 = vmatprep.subr.bf16.mxu0 0
    %2272 = vmatpush1.bf16.msra.mxu0 0
    %2273 = vmatprep.subr.bf16.mxu0 0
    %2274 = vmatpush1.bf16.msra.mxu0 0
    %2275 = vmatprep.subr.bf16.mxu0 0
    %2276 = vmatpush1.bf16.msra.mxu0 0
    %2277 = vmatprep.subr.bf16.mxu0 0
    %2278 = vmatpush1.bf16.msra.mxu0 0
    %2279 = vmatprep.subr.bf16.mxu0 0
    %2280 = vmatpush1.bf16.msra.mxu0 0
    %2281 = vmatprep.mubr.bf16.mxu0 0
    %2282 = vmatmul.mubr.bf16.gmra.mrb[0].mxu0 %v2244
    %v2283 = vpop.f32.mrb[0].mxu0
    %v2284 = vadd.f32 0.0, %v2283
    %v2285 = vpop.f32.mrb[0].mxu0
    %v2286 = vpop.f32.mrb[0].mxu0
    %v2287 = vpop.f32.mrb[0].mxu0
    %2288 = vdwg.mxu0
    %v2289 = vunpack.c.l.b16 %v1572
    %v2290 = vpack.c.b16 %v2289, %v2289
    %2291 = vrot.lane.b32.xlu0 %v2290, 96
    %v2292 = vpop.permute.xlu0 %2291
    %v2294 = vsel %vm357, %v2040, 0
    %v2297 = vsel %vm853, %v2292, 0
    %2299 = vmatprep.subr.bf16.mxu0 0
    %2300 = vmatpush1.bf16.msra.mxu0 %v2297
    %2301 = vmatprep.subr.bf16.mxu0 0
    %2302 = vmatpush1.bf16.msra.mxu0 0
    %2303 = vmatprep.subr.bf16.mxu0 0
    %2304 = vmatpush1.bf16.msra.mxu0 0
    %2305 = vmatprep.subr.bf16.mxu0 0
    %2306 = vmatpush1.bf16.msra.mxu0 0
    %2307 = vmatprep.subr.bf16.mxu0 0
    %2308 = vmatpush1.bf16.msra.mxu0 0
    %2309 = vmatprep.subr.bf16.mxu0 0
    %2310 = vmatpush1.bf16.msra.mxu0 0
    %2311 = vmatprep.subr.bf16.mxu0 0
    %2312 = vmatpush1.bf16.msra.mxu0 0
    %2313 = vmatprep.subr.bf16.mxu0 0
    %2314 = vmatpush1.bf16.msra.mxu0 0
    %2315 = vmatprep.subr.bf16.mxu0 0
    %2316 = vmatpush1.bf16.msra.mxu0 0
    %2317 = vmatprep.subr.bf16.mxu0 0
    %2318 = vmatpush1.bf16.msra.mxu0 0
    %2319 = vmatprep.subr.bf16.mxu0 0
    %2320 = vmatpush1.bf16.msra.mxu0 0
    %2321 = vmatprep.subr.bf16.mxu0 0
    %2322 = vmatpush1.bf16.msra.mxu0 0
    %2323 = vmatprep.subr.bf16.mxu0 0
    %2324 = vmatpush1.bf16.msra.mxu0 0
    %2325 = vmatprep.subr.bf16.mxu0 0
    %2326 = vmatpush1.bf16.msra.mxu0 0
    %2327 = vmatprep.subr.bf16.mxu0 0
    %2328 = vmatpush1.bf16.msra.mxu0 0
    %2329 = vmatprep.subr.bf16.mxu0 0
    %2330 = vmatpush1.bf16.msra.mxu0 0
    %2331 = vmatprep.mubr.bf16.mxu0 0
    %2332 = vmatmul.mubr.bf16.gmra.mrb[0].mxu0 %v2294
    %v2333 = vpop.f32.mrb[0].mxu0
    %v2334 = vadd.f32 0.0, %v2333
    %v2335 = vpop.f32.mrb[0].mxu0
    %v2336 = vpop.f32.mrb[0].mxu0
    %v2337 = vpop.f32.mrb[0].mxu0
    %2338 = vdwg.mxu0
    %v2339 = vunpack.c.l.b16 %v1574
    %v2340 = vpack.c.b16 %v2339, %v2339
    %2341 = vrot.lane.b32.xlu0 %v2340, 96
    %v2342 = vpop.permute.xlu0 %2341
    %v2344 = vsel %vm357, %v2041, 0
    %v2347 = vsel %vm853, %v2342, 0
    %2349 = vmatprep.subr.bf16.mxu0 0
    %2350 = vmatpush1.bf16.msra.mxu0 %v2347
    %2351 = vmatprep.subr.bf16.mxu0 0
    %2352 = vmatpush1.bf16.msra.mxu0 0
    %2353 = vmatprep.subr.bf16.mxu0 0
    %2354 = vmatpush1.bf16.msra.mxu0 0
    %2355 = vmatprep.subr.bf16.mxu0 0
    %2356 = vmatpush1.bf16.msra.mxu0 0
    %2357 = vmatprep.subr.bf16.mxu0 0
    %2358 = vmatpush1.bf16.msra.mxu0 0
    %2359 = vmatprep.subr.bf16.mxu0 0
    %2360 = vmatpush1.bf16.msra.mxu0 0
    %2361 = vmatprep.subr.bf16.mxu0 0
    %2362 = vmatpush1.bf16.msra.mxu0 0
    %2363 = vmatprep.subr.bf16.mxu0 0
    %2364 = vmatpush1.bf16.msra.mxu0 0
    %2365 = vmatprep.subr.bf16.mxu0 0
    %2366 = vmatpush1.bf16.msra.mxu0 0
    %2367 = vmatprep.subr.bf16.mxu0 0
    %2368 = vmatpush1.bf16.msra.mxu0 0
    %2369 = vmatprep.subr.bf16.mxu0 0
    %2370 = vmatpush1.bf16.msra.mxu0 0
    %2371 = vmatprep.subr.bf16.mxu0 0
    %2372 = vmatpush1.bf16.msra.mxu0 0
    %2373 = vmatprep.subr.bf16.mxu0 0
    %2374 = vmatpush1.bf16.msra.mxu0 0
    %2375 = vmatprep.subr.bf16.mxu0 0
    %2376 = vmatpush1.bf16.msra.mxu0 0
    %2377 = vmatprep.subr.bf16.mxu0 0
    %2378 = vmatpush1.bf16.msra.mxu0 0
    %2379 = vmatprep.subr.bf16.mxu0 0
    %2380 = vmatpush1.bf16.msra.mxu0 0
    %2381 = vmatprep.mubr.bf16.mxu0 0
    %2382 = vmatmul.mubr.bf16.gmra.mrb[0].mxu0 %v2344
    %v2383 = vpop.f32.mrb[0].mxu0
    %v2384 = vadd.f32 0.0, %v2383
    %v2385 = vpop.f32.mrb[0].mxu0
    %v2386 = vpop.f32.mrb[0].mxu0
    %v2387 = vpop.f32.mrb[0].mxu0
    %2388 = vdwg.mxu0
    %v2389 = vunpack.c.l.b16 %v1576
    %v2390 = vpack.c.b16 %v2389, %v2389
    %2391 = vrot.lane.b32.xlu0 %v2390, 96
    %v2392 = vpop.permute.xlu0 %2391
    %v2394 = vsel %vm357, %v2042, 0
    %v2397 = vsel %vm853, %v2392, 0
    %2399 = vmatprep.subr.bf16.mxu0 0
    %2400 = vmatpush1.bf16.msra.mxu0 %v2397
    %2401 = vmatprep.subr.bf16.mxu0 0
    %2402 = vmatpush1.bf16.msra.mxu0 0
    %2403 = vmatprep.subr.bf16.mxu0 0
    %2404 = vmatpush1.bf16.msra.mxu0 0
    %2405 = vmatprep.subr.bf16.mxu0 0
    %2406 = vmatpush1.bf16.msra.mxu0 0
    %2407 = vmatprep.subr.bf16.mxu0 0
    %2408 = vmatpush1.bf16.msra.mxu0 0
    %2409 = vmatprep.subr.bf16.mxu0 0
    %2410 = vmatpush1.bf16.msra.mxu0 0
    %2411 = vmatprep.subr.bf16.mxu0 0
    %2412 = vmatpush1.bf16.msra.mxu0 0
    %2413 = vmatprep.subr.bf16.mxu0 0
    %2414 = vmatpush1.bf16.msra.mxu0 0
    %2415 = vmatprep.subr.bf16.mxu0 0
    %2416 = vmatpush1.bf16.msra.mxu0 0
    %2417 = vmatprep.subr.bf16.mxu0 0
    %2418 = vmatpush1.bf16.msra.mxu0 0
    %2419 = vmatprep.subr.bf16.mxu0 0
    %2420 = vmatpush1.bf16.msra.mxu0 0
    %2421 = vmatprep.subr.bf16.mxu0 0
    %2422 = vmatpush1.bf16.msra.mxu0 0
    %2423 = vmatprep.subr.bf16.mxu0 0
    %2424 = vmatpush1.bf16.msra.mxu0 0
    %2425 = vmatprep.subr.bf16.mxu0 0
    %2426 = vmatpush1.bf16.msra.mxu0 0
    %2427 = vmatprep.subr.bf16.mxu0 0
    %2428 = vmatpush1.bf16.msra.mxu0 0
    %2429 = vmatprep.subr.bf16.mxu0 0
    %2430 = vmatpush1.bf16.msra.mxu0 0
    %2431 = vmatprep.mubr.bf16.mxu0 0
    %2432 = vmatmul.mubr.bf16.gmra.mrb[0].mxu0 %v2394
    %v2433 = vpop.f32.mrb[0].mxu0
    %v2434 = vadd.f32 0.0, %v2433
    %v2435 = vpop.f32.mrb[0].mxu0
    %v2436 = vpop.f32.mrb[0].mxu0
    %v2437 = vpop.f32.mrb[0].mxu0
    %2438 = vdwg.mxu0
    %v2439 = vpack.c.bf16 %v2086, %v2086
    %v2440 = vpack.c.bf16 %v2134, %v2134
    %v2441 = vpack.c.bf16 %v2184, %v2184
    %v2442 = vpack.c.bf16 %v2234, %v2234
    %v2443 = vpack.c.bf16 %v2284, %v2284
    %v2444 = vpack.c.bf16 %v2334, %v2334
    %v2445 = vpack.c.bf16 %v2384, %v2384
    %v2446 = vpack.c.bf16 %v2434, %v2434
    %v2449 = vunpack.c.l.b16 %v2439
    %v2450 = vunpack.c.l.b16 %v2440
    %v2451 = vpack.c.b16 %v2450, %v2449
    %v2454 = vunpack.c.l.b16 %v2441
    %v2455 = vunpack.c.l.b16 %v2442
    %v2456 = vpack.c.b16 %v2455, %v2454
    %2457 = vrot.lane.b32.xlu0 %v2456, 8
    %v2458 = vpop.permute.xlu0 %2457
    %v2461 = vunpack.c.l.b16 %v2443
    %v2462 = vunpack.c.l.b16 %v2444
    %v2463 = vpack.c.b16 %v2462, %v2461
    %2464 = vrot.lane.b32.xlu0 %v2463, 16
    %v2465 = vpop.permute.xlu0 %2464
    %v2468 = vunpack.c.l.b16 %v2445
    %v2469 = vunpack.c.l.b16 %v2446
    %v2470 = vpack.c.b16 %v2469, %v2468
    %2471 = vrot.lane.b32.xlu0 %v2470, 24
    %v2472 = vpop.permute.xlu0 %2471
    %v2475 = vsel %vm357, %v2451, %v2458
    %v2477 = vsel %vm1282, %v2475, %v2465
    %v2479 = vsel %vm1285, %v2477, %v2472
    %v2480 = vlaneseq
    %v2481 = vshrl.u32 %v2480, 7
    %v2482 = vsub.s32 7, %v2481
    %v2483 = vrot.slane %v160, %v2482
    %v2488 = vunpack.c.l.b16 %v143
    %v2489 = vunpack.c.l.b16 %v144
    %v2490 = vunpack.c.l.b16 %v145
    %v2491 = vunpack.c.l.b16 %v146
    %v2492 = vpack.c.b16 %v2489, %v2488
    %v2493 = vpack.c.b16 %v2491, %v2490
    %v2496 = vsel %vm170, %v2479, 0
    %2498 = vmatprep.subr.bf16.mxu0 0
    %2499 = vmatpush1.bf16.msra.mxu0 %v2492
    %2500 = vmatprep.subr.bf16.mxu0 0
    %2501 = vmatpush1.bf16.msra.mxu0 %v2493
    %2502 = vmatprep.subr.bf16.mxu0 0
    %2503 = vmatpush1.bf16.msra.mxu0 0
    %2504 = vmatprep.subr.bf16.mxu0 0
    %2505 = vmatpush1.bf16.msra.mxu0 0
    %2506 = vmatprep.subr.bf16.mxu0 0
    %2507 = vmatpush1.bf16.msra.mxu0 0
    %2508 = vmatprep.subr.bf16.mxu0 0
    %2509 = vmatpush1.bf16.msra.mxu0 0
    %2510 = vmatprep.subr.bf16.mxu0 0
    %2511 = vmatpush1.bf16.msra.mxu0 0
    %2512 = vmatprep.subr.bf16.mxu0 0
    %2513 = vmatpush1.bf16.msra.mxu0 0
    %2514 = vmatprep.subr.bf16.mxu0 0
    %2515 = vmatpush1.bf16.msra.mxu0 0
    %2516 = vmatprep.subr.bf16.mxu0 0
    %2517 = vmatpush1.bf16.msra.mxu0 0
    %2518 = vmatprep.subr.bf16.mxu0 0
    %2519 = vmatpush1.bf16.msra.mxu0 0
    %2520 = vmatprep.subr.bf16.mxu0 0
    %2521 = vmatpush1.bf16.msra.mxu0 0
    %2522 = vmatprep.subr.bf16.mxu0 0
    %2523 = vmatpush1.bf16.msra.mxu0 0
    %2524 = vmatprep.subr.bf16.mxu0 0
    %2525 = vmatpush1.bf16.msra.mxu0 0
    %2526 = vmatprep.subr.bf16.mxu0 0
    %2527 = vmatpush1.bf16.msra.mxu0 0
    %2528 = vmatprep.subr.bf16.mxu0 0
    %2529 = vmatpush1.bf16.msra.mxu0 0
    %2530 = vmatprep.mubr.bf16.mxu0 0
    %2531 = vmatmul.mubr.bf16.gmra.mrb[0].mxu0 %v2496
    %v2532 = vpop.f32.mrb[0].mxu0
    %v2533 = vadd.f32 %v2483, %v2532
    %v2534 = vpop.f32.mrb[0].mxu0
    %v2535 = vpop.f32.mrb[0].mxu0
    %v2536 = vadd.f32 %v2483, %v2535
    %v2537 = vpop.f32.mrb[0].mxu0
    %2538 = vdwg.mxu0
    %v2539 = vadd.f32 %v1347, %v2533
    %v2540 = vadd.f32 %v1348, %v2536
    %v2541 = vsel %vm170, %v2539, 0.0
    %2542 = vadd.xlane.f32.xlu0 %v2541
    %v2543 = vpop.xlane.xlu0 %2542
    %v2544 = vsel %vm170, %v2540, 0.0
    %2545 = vadd.xlane.f32.xlu0 %v2544
    %v2546 = vpop.xlane.xlu0 %2545
    %v2547 = vmul.f32 %v2543, %v177
    %v2548 = vmul.f32 %v2546, %v177
    %v2549 = vsub.f32 %v2539, %v2547
    %v2550 = vsub.f32 %v2540, %v2548
    %v2551 = vmul.f32 %v2549, %v2549
    %v2552 = vmul.f32 %v2550, %v2550
    %v2553 = vsel %vm170, %v2551, 0.0
    %2554 = vadd.xlane.f32.xlu0 %v2553
    %v2555 = vpop.xlane.xlu0 %2554
    %v2556 = vsel %vm170, %v2552, 0.0
    %2557 = vadd.xlane.f32.xlu0 %v2556
    %v2558 = vpop.xlane.xlu0 %2557
    %v2559 = vmul.f32 %v2555, %v177
    %v2560 = vmul.f32 %v2558, %v177
    %v2561 = vadd.f32 %v2559, 1e-05
    %v2562 = vadd.f32 %v2560, 1e-05
    %v2563 = vrsqrt.pop %v2561
    %v2564 = vrsqrt.pop %v2562
    %v2565 = vmul.f32 %v2549, %v2563
    %v2566 = vmul.f32 %v2550, %v2564
    %v2567 = vlaneseq
    %v2568 = vshrl.u32 %v2567, 7
    %v2569 = vsub.s32 5, %v2568
    %v2570 = vrot.slane %v161, %v2569
    %v2571 = vmul.f32 %v2565, %v2570
    %v2572 = vmul.f32 %v2566, %v2570
    %v2573 = vlaneseq
    %v2574 = vshrl.u32 %v2573, 7
    %v2575 = vsub.s32 6, %v2574
    %v2576 = vrot.slane %v161, %v2575
    %v2577 = vadd.f32 %v2571, %v2576
    %v2578 = vadd.f32 %v2572, %v2576
    %v2579 = vpack.c.bf16 %v2578, %v2577
    %v2581 = vlaneseq
    %v2582 = vshrl.u32 %v2581, 7
    %v2583 = vsub.s32 0, %v2582
    %v2584 = vrot.slane %v159, %v2583
    %v2590 = vunpack.c.l.b16 %v147
    %v2591 = vunpack.c.l.b16 %v148
    %v2592 = vunpack.c.l.b16 %v149
    %v2593 = vunpack.c.l.b16 %v150
    %v2594 = vpack.c.b16 %v2591, %v2590
    %v2595 = vpack.c.b16 %v2593, %v2592
    %v2599 = vsel %vm170, %v2579, 0
    %2601 = vmatprep.subr.bf16.mxu0 0
    %2602 = vmatpush1.bf16.msra.mxu0 %v2594
    %2603 = vmatprep.subr.bf16.mxu0 0
    %2604 = vmatpush1.bf16.msra.mxu0 %v2595
    %2605 = vmatprep.subr.bf16.mxu0 0
    %2606 = vmatpush1.bf16.msra.mxu0 0
    %2607 = vmatprep.subr.bf16.mxu0 0
    %2608 = vmatpush1.bf16.msra.mxu0 0
    %2609 = vmatprep.subr.bf16.mxu0 0
    %2610 = vmatpush1.bf16.msra.mxu0 0
    %2611 = vmatprep.subr.bf16.mxu0 0
    %2612 = vmatpush1.bf16.msra.mxu0 0
    %2613 = vmatprep.subr.bf16.mxu0 0
    %2614 = vmatpush1.bf16.msra.mxu0 0
    %2615 = vmatprep.subr.bf16.mxu0 0
    %2616 = vmatpush1.bf16.msra.mxu0 0
    %2617 = vmatprep.subr.bf16.mxu0 0
    %2618 = vmatpush1.bf16.msra.mxu0 0
    %2619 = vmatprep.subr.bf16.mxu0 0
    %2620 = vmatpush1.bf16.msra.mxu0 0
    %2621 = vmatprep.subr.bf16.mxu0 0
    %2622 = vmatpush1.bf16.msra.mxu0 0
    %2623 = vmatprep.subr.bf16.mxu0 0
    %2624 = vmatpush1.bf16.msra.mxu0 0
    %2625 = vmatprep.subr.bf16.mxu0 0
    %2626 = vmatpush1.bf16.msra.mxu0 0
    %2627 = vmatprep.subr.bf16.mxu0 0
    %2628 = vmatpush1.bf16.msra.mxu0 0
    %2629 = vmatprep.subr.bf16.mxu0 0
    %2630 = vmatpush1.bf16.msra.mxu0 0
    %2631 = vmatprep.subr.bf16.mxu0 0
    %2632 = vmatpush1.bf16.msra.mxu0 0
    %2633 = vmatprep.mubr.bf16.mxu0 0
    %2634 = vmatmul.mubr.bf16.gmra.mrb[0].mxu0 %v2599
    %v2635 = vpop.f32.mrb[0].mxu0
    %v2636 = vadd.f32 %v2584, %v2635
    %v2637 = vpop.f32.mrb[0].mxu0
    %v2638 = vpop.f32.mrb[0].mxu0
    %v2639 = vadd.f32 %v2584, %v2638
    %v2640 = vpop.f32.mrb[0].mxu0
    %2641 = vdwg.mxu0
    %v2642 = vmax.f32 %v2636, 0.0
    %v2643 = vmax.f32 %v2639, 0.0
    %v2644 = vpack.c.bf16 %v2643, %v2642
    %v2653 = vunpack.c.l.b16 %v151
    %v2654 = vunpack.c.l.b16 %v152
    %v2655 = vunpack.c.l.b16 %v153
    %v2656 = vunpack.c.l.b16 %v154
    %v2657 = vunpack.c.l.b16 %v155
    %v2658 = vunpack.c.l.b16 %v156
    %v2659 = vunpack.c.l.b16 %v157
    %v2660 = vunpack.c.l.b16 %v158
    %v2661 = vpack.c.b16 %v2654, %v2653
    %v2662 = vpack.c.b16 %v2656, %v2655
    %v2663 = vpack.c.b16 %v2658, %v2657
    %v2664 = vpack.c.b16 %v2660, %v2659
    %vm2669 = vcmask 523264
    %v2671 = vsel %vm2669, %v2644, 0
    %2673 = vmatprep.subr.bf16.mxu0 0
    %2674 = vmatpush1.bf16.msra.mxu0 %v2661
    %2675 = vmatprep.subr.bf16.mxu0 0
    %2676 = vmatpush1.bf16.msra.mxu0 %v2662
    %2677 = vmatprep.subr.bf16.mxu0 0
    %2678 = vmatpush1.bf16.msra.mxu0 %v2663
    %2679 = vmatprep.subr.bf16.mxu0 0
    %2680 = vmatpush1.bf16.msra.mxu0 %v2664
    %2681 = vmatprep.subr.bf16.mxu0 0
    %2682 = vmatpush1.bf16.msra.mxu0 0
    %2683 = vmatprep.subr.bf16.mxu0 0
    %2684 = vmatpush1.bf16.msra.mxu0 0
    %2685 = vmatprep.subr.bf16.mxu0 0
    %2686 = vmatpush1.bf16.msra.mxu0 0
    %2687 = vmatprep.subr.bf16.mxu0 0
    %2688 = vmatpush1.bf16.msra.mxu0 0
    %2689 = vmatprep.subr.bf16.mxu0 0
    %2690 = vmatpush1.bf16.msra.mxu0 0
    %2691 = vmatprep.subr.bf16.mxu0 0
    %2692 = vmatpush1.bf16.msra.mxu0 0
    %2693 = vmatprep.subr.bf16.mxu0 0
    %2694 = vmatpush1.bf16.msra.mxu0 0
    %2695 = vmatprep.subr.bf16.mxu0 0
    %2696 = vmatpush1.bf16.msra.mxu0 0
    %2697 = vmatprep.subr.bf16.mxu0 0
    %2698 = vmatpush1.bf16.msra.mxu0 0
    %2699 = vmatprep.subr.bf16.mxu0 0
    %2700 = vmatpush1.bf16.msra.mxu0 0
    %2701 = vmatprep.subr.bf16.mxu0 0
    %2702 = vmatpush1.bf16.msra.mxu0 0
    %2703 = vmatprep.subr.bf16.mxu0 0
    %2704 = vmatpush1.bf16.msra.mxu0 0
    %2705 = vmatprep.mubr.bf16.mxu0 0
    %2706 = vmatmul.mubr.bf16.gmra.mrb[0].mxu0 %v2671
    %v2707 = vpop.f32.mrb[0].mxu0
    %v2708 = vadd.f32 0.0, %v2707
    %v2709 = vpop.f32.mrb[0].mxu0
    %v2710 = vpop.f32.mrb[0].mxu0
    %v2711 = vadd.f32 0.0, %v2710
    %v2712 = vpop.f32.mrb[0].mxu0
    %2713 = vdwg.mxu0
    %v2714 = vadd.f32 %v2539, %v2708
    %v2715 = vadd.f32 %v2540, %v2711
    %v2716 = vlaneseq
    %v2717 = vshrl.u32 %v2716, 7
    %v2718 = vsub.s32 0, %v2717
    %v2719 = vrot.slane %v161, %v2718
    %v2720 = vadd.f32 %v2714, %v2719
    %v2721 = vadd.f32 %v2715, %v2719
    %v2722 = vpack.c.bf16 %v2720, %v2720
    %v2723 = vpack.c.bf16 %v2721, %v2721
    %vm2724 = vcmask 257024
    %2725 = vst.msk [vmem:[#allocation13] sm:$0xf] %vm2724, %v2722
    %2726 = vst.msk [vmem:[#allocation13 + $0x4] sm:$0xf] %vm2724, %v2723
    // Predicated region
    $region74: #{tpu_custom_call.1} parent=1 // pred_check
      _
    $region75: #{tpu_custom_call.1} parent=1 // pred_check_branch
      %2728 = sbr.rel (0) target = $region77
    $region76: #{tpu_custom_call.1} parent=1 // pred_region
      %s2730 = ssub.s32 128, 128
      %2731 = vsyncadd [#allocation4], %s2730
      %s2732 = sshll.u32 [#allocation13], 4
      %s2733 = int_to_ptr.vmem [resolvable:$true] %s2732
      %2738 = dma.vmem_to_hbm [thread:$0]  %s2733, 128, %s12, [#allocation4], 64, 64, 4
    $region77: #{tpu_custom_call.1} parent=1 // pred_fallthru
      _
    // Predicated region
    $region78: #{tpu_custom_call.1} parent=1 // pred_check
      _
    $region79: #{tpu_custom_call.1} parent=1 // pred_check_branch
      %2740 = sbr.rel (0) target = $region81
    $region80: #{tpu_custom_call.1} parent=1 // pred_region
      %2741 = dma.done [#allocation4], 128
    $region81: #{tpu_custom_call.1} parent=1 // pred_fallthru
      _
    %2742 = vsyncpa [#allocation3], 1
    %2743 = vsyncpa [#allocation6], 1
    %2744 = vsyncpa [#allocation9], 1
    %2745 = vsyncpa [#allocation12], 1
    %2746 = vsyncpa [#allocation4], 1

</llo_original>
